<compile_context>
chip_gen: v5e
topology: v5e:2x2
jax: 0.10.0
libtpu: 0.0.40
codegen_flags: <defaults>
</compile_context>

<pallas_src>
import functools

import jax
import jax.numpy as jnp
from jax import lax
from jax.experimental import pallas as pl
from jax.experimental.pallas import tpu as pltpu


def convlstm_kernel(x_ref, h_ref, c_ref, w_ref, aff_ref,
                    h_next_ref, c_next_ref, comb_ref, *, kh, kw):
    # x_ref:    (H, W, Cx)           input for this batch element (f32)
    # h_ref:    (H, W, C)            current hidden state (f32)
    # c_ref:    (H, W, C)            current cell state (f32)
    # w_ref:    (kh*kw*Cin, 4C)      im2col weight, channel order [h, x], bf16,
    #                                i/f/o columns pre-scaled by 0.5
    # aff_ref:  (3, 4C) f32          rows: [bias (pre-scaled), post_scale, offset]
    # comb_ref: (H+2ph, W+2pw, Cin)  VMEM scratch, zero-padded [h, x] image (f32)
    H, W, Cx = x_ref.shape
    C = h_ref.shape[-1]
    Hp, Wp, Cin = comb_ref.shape
    ph, pw = kh // 2, kw // 2
    M = H * W
    Kdy = kw * Cin                       # per-dy contraction depth (3*36 = 108)

    # ---- build zero-padded [h, x] image in VMEM (no HBM round trip) --------
    # Zero only the halo ring; the interior is overwritten right below.
    # (Unconditional each step: with a "parallel" grid each core owns its own
    # scratch, so gating on program_id would be unsafe; the ring is tiny.)
    if ph > 0:
        comb_ref[:ph, :, :] = jnp.zeros((ph, Wp, Cin), comb_ref.dtype)
        comb_ref[ph + H:, :, :] = jnp.zeros((Hp - ph - H, Wp, Cin),
                                            comb_ref.dtype)
    if pw > 0:
        comb_ref[ph:ph + H, :pw, :] = jnp.zeros((H, pw, Cin), comb_ref.dtype)
        comb_ref[ph:ph + H, pw + W:, :] = jnp.zeros((H, Wp - pw - W, Cin),
                                                    comb_ref.dtype)
    # [h, x]: wide h block lane-aligned at offset 0, only the 4-lane x tail
    # is shifted. Two direct stores, no concatenate temporary.
    comb_ref[ph:ph + H, pw:pw + W, :C] = h_ref[...]
    comb_ref[ph:ph + H, pw:pw + W, C:] = x_ref[...]

    # ---- convolution as kh accumulated matmuls (K = kw*Cin per push) -------
    # Each per-dy slab stays inside one 128-lane group; accumulate in f32
    # (on v7x the MRB chains the pushes; on v5e/v6e the extra VALU adds over
    # the small (M, 4C) accumulator are negligible).
    acc = None
    for dy in range(kh):
        slabs = [comb_ref[dy:dy + H, dx:dx + W, :] for dx in range(kw)]
        slab = jnp.concatenate(slabs, axis=-1).reshape(M, Kdy)
        part = jnp.dot(slab.astype(w_ref.dtype),          # bf16 MXU operands
                       w_ref[dy * Kdy:(dy + 1) * Kdy, :],
                       preferred_element_type=jnp.float32)
        acc = part if acc is None else acc + part
    acc = acc + aff_ref[0:1, :]          # bias (i/f/o columns pre-scaled by 0.5)

    # ---- gates: one lane-dense tanh + per-lane affine -----------------------
    # sigmoid(z) = 0.5*tanh(z/2) + 0.5; the 1/2 pre-scale is already folded
    # into the i/f/o weight/bias columns, so a single tanh covers all 4 gates.
    gates = jnp.tanh(acc) * aff_ref[1:2, :] + aff_ref[2:3, :]

    # Gate order matches torch.split: [input, forget, output, cell].
    i_g = gates[:, 0 * C:1 * C]
    f_g = gates[:, 1 * C:2 * C]
    o_g = gates[:, 2 * C:3 * C]
    g_g = gates[:, 3 * C:4 * C]

    c_cur = c_ref[...].reshape(M, C)
    c_next = f_g * c_cur + i_g * g_g
    h_next = o_g * jnp.tanh(c_next)

    h_next_ref[...] = h_next.reshape(H, W, C)
    c_next_ref[...] = c_next.reshape(H, W, C)


def _prep_weights(w_oihw, bias, hidden_dim):
    """OIHW conv weight/bias -> (kh*kw*Cin, 4C) bf16 matrix + (3,4C) f32 affine.

    * Input-channel axis permuted [x, h] -> [h, x] (kernel stores h first).
    * i/f/o output columns of weight and bias pre-scaled by 0.5 (exact) so the
      kernel's single tanh implements sigmoid via 0.5*tanh(z/2)+0.5.
    * affine rows: [bias, post_scale, offset].
    """
    O, I, kh, kw = w_oihw.shape
    C = hidden_dim
    Cx = I - C
    w_hx = jnp.concatenate([w_oihw[:, Cx:, :, :], w_oihw[:, :Cx, :, :]], axis=1)
    w_r = jnp.transpose(w_hx, (2, 3, 1, 0)).reshape(kh * kw * I, O)

    prescale = jnp.concatenate([jnp.full((3 * C,), 0.5, jnp.float32),
                                jnp.ones((C,), jnp.float32)])
    post = prescale                                             # 0.5 | 1.0
    offset = jnp.concatenate([jnp.full((3 * C,), 0.5, jnp.float32),
                              jnp.zeros((C,), jnp.float32)])    # 0.5 | 0.0

    w_r = (w_r * prescale[None, :]).astype(jnp.bfloat16)
    affine = jnp.stack([bias.astype(jnp.float32) * prescale, post, offset],
                       axis=0)                                  # (3, 4C) f32
    return w_r, affine


def conv_lstm_cell_nhwc(x, h, c, w_r, affine, kernel_size):
    """NHWC-native ConvLSTM cell step (preferred entry point for seq loops)."""
    kh, kw = kernel_size
    B, H, W, Cx = x.shape
    C = h.shape[-1]
    Cin = Cx + C
    C4 = 4 * C
    K = kh * kw * Cin
    ph, pw = kh // 2, kw // 2
    Hp, Wp = H + 2 * ph, W + 2 * pw

    kernel = functools.partial(convlstm_kernel, kh=kh, kw=kw)

    return pl.pallas_call(
        kernel,
        grid=(B,),
        in_specs=[
            pl.BlockSpec((None, H, W, Cx), lambda b: (b, 0, 0, 0)),  # x
            pl.BlockSpec((None, H, W, C), lambda b: (b, 0, 0, 0)),   # h_cur
            pl.BlockSpec((None, H, W, C), lambda b: (b, 0, 0, 0)),   # c_cur
            pl.BlockSpec((K, C4), lambda b: (0, 0)),                 # weight
            pl.BlockSpec((3, C4), lambda b: (0, 0)),                 # affine
        ],
        out_specs=(
            pl.BlockSpec((None, H, W, C), lambda b: (b, 0, 0, 0)),
            pl.BlockSpec((None, H, W, C), lambda b: (b, 0, 0, 0)),
        ),
        out_shape=(
            jax.ShapeDtypeStruct((B, H, W, C), jnp.float32),
            jax.ShapeDtypeStruct((B, H, W, C), jnp.float32),
        ),
        scratch_shapes=[pltpu.VMEM((Hp, Wp, Cin), jnp.float32)],
        # h -> h_next, c -> c_next: in a time-step loop the state buffers are
        # reused in place instead of allocating fresh HBM every step. Safe:
        # each grid step reads its h/c block before the pipelined writeback.
        input_output_aliases={1: 0, 2: 1},
        compiler_params=pltpu.CompilerParams(
            dimension_semantics=("parallel",),
            # TODO(synk): tighten once the row-block grid axis exists.
            vmem_limit_bytes=32 * 1024 * 1024,
        ),
    )(x, h, c, w_r, affine)


@functools.partial(jax.jit, static_argnames=("kernel_size",))
def conv_lstm_cell_forward(x_nchw, h_nchw, c_nchw, w_oihw, bias, kernel_size):
    """PyTorch-layout (NCHW / OIHW) wrapper around the NHWC Pallas kernel.

    A sequence loop should instead keep h/c in NHWC and call
    `conv_lstm_cell_nhwc` directly with `_prep_weights` output to avoid the
    per-step NCHW<->NHWC transposes.
    """
    kh, kw = kernel_size
    assert kh % 2 == 1 and kw % 2 == 1, "same-padding ConvLSTM needs odd kernel"
    C = h_nchw.shape[1]

    x = jnp.transpose(x_nchw, (0, 2, 3, 1))
    h = jnp.transpose(h_nchw, (0, 2, 3, 1))
    c = jnp.transpose(c_nchw, (0, 2, 3, 1))
    w_r, affine = _prep_weights(w_oihw, bias, C)

    h_next, c_next = conv_lstm_cell_nhwc(x, h, c, w_r, affine, kernel_size)
    return (jnp.transpose(h_next, (0, 3, 1, 2)),
            jnp.transpose(c_next, (0, 3, 1, 2)))


def reference_forward(x, h, c, w_oihw, bias, kernel_size):
    """Pure-JAX f32 reference mirroring the PyTorch module (NCHW conv)."""
    kh, kw = kernel_size
    ph, pw = kh // 2, kw // 2
    comb = jnp.concatenate([x, h], axis=1)
    conv = lax.conv_general_dilated(
        comb, w_oihw, window_strides=(1, 1),
        padding=((ph, ph), (pw, pw)),
        dimension_numbers=("NCHW", "OIHW", "NCHW"))
    conv = conv + bias.reshape(1, -1, 1, 1)
    cc_i, cc_f, cc_o, cc_g = jnp.split(conv, 4, axis=1)
    i_g = jax.nn.sigmoid(cc_i)
    f_g = jax.nn.sigmoid(cc_f)
    o_g = jax.nn.sigmoid(cc_o)
    g_g = jnp.tanh(cc_g)
    c_next = f_g * c + i_g * g_g
    h_next = o_g * jnp.tanh(c_next)
    return h_next, c_next


if __name__ == "__main__":
    # Small shapes consistent with the module's forward.
    B, Cin_x, Chid, H, W = 2, 4, 32, 16, 16
    kernel_size = (3, 3)
    kh, kw = kernel_size

    key = jax.random.PRNGKey(0)
    kx, kh_, kc, kw_, kb = jax.random.split(key, 5)

    x = jax.random.normal(kx, (B, Cin_x, H, W), jnp.float32)
    h_cur = jax.random.normal(kh_, (B, Chid, H, W), jnp.float32)
    c_cur = jax.random.normal(kc, (B, Chid, H, W), jnp.float32)

    # Deterministic parameter init (PyTorch-style uniform +/- 1/sqrt(fan_in)).
    fan_in = (Cin_x + Chid) * kh * kw
    bound = 1.0 / (fan_in ** 0.5)
    w_oihw = jax.random.uniform(kw_, (4 * Chid, Cin_x + Chid, kh, kw),
                                jnp.float32, -bound, bound)
    bias = jax.random.uniform(kb, (4 * Chid,), jnp.float32, -bound, bound)

    h_next, c_next = conv_lstm_cell_forward(x, h_cur, c_cur, w_oihw, bias,
                                            kernel_size)
    jax.block_until_ready((h_next, c_next))

    # Cross-check against the f32 PyTorch-semantics reference.  Tolerance is
    # loosened vs the all-f32 version because the MXU operands are bf16
    # (f32 accumulation); gate math itself stays f32.
    h_ref, c_ref = reference_forward(x, h_cur, c_cur, w_oihw, bias, kernel_size)
    assert jnp.allclose(h_next, h_ref, atol=3e-2, rtol=3e-2)
    assert jnp.allclose(c_next, c_ref, atol=3e-2, rtol=3e-2)

    print("KERNEL_OK")
</pallas_src>

<mosaic_0001>
module attributes {stable_mosaic.version = 11 : i64} {
  func.func @convlstm_kernel(%arg0: i32, %arg1: memref<1x16x16x4xf32, #tpu.memory_space<vmem>>, %arg2: memref<1x16x16x32xf32, #tpu.memory_space<vmem>>, %arg3: memref<1x16x16x32xf32, #tpu.memory_space<vmem>>, %arg4: memref<324x128xbf16, #tpu.memory_space<vmem>>, %arg5: memref<3x128xf32, #tpu.memory_space<vmem>>, %arg6: memref<1x16x16x32xf32, #tpu.memory_space<vmem>>, %arg7: memref<1x16x16x32xf32, #tpu.memory_space<vmem>>, %arg8: memref<18x18x36xf32, #tpu.memory_space<vmem>>) attributes {dimension_semantics = [#tpu.dimension_semantics<parallel>], iteration_bounds = array<i64: 2>, scalar_prefetch = 0 : i64, scratch_operands = 1 : i64, tpu.core_type = #tpu.core_type<tc>, window_params = [{transform_indices = @transform_0, window_bounds = array<i64: 1, 16, 16, 4>}, {transform_indices = @transform_1, window_bounds = array<i64: 1, 16, 16, 32>}, {transform_indices = @transform_2, window_bounds = array<i64: 1, 16, 16, 32>}, {pipeline_mode = #tpu.pipeline_mode<synchronous>, transform_indices = @transform_3, window_bounds = array<i64: 324, 128>}, {pipeline_mode = #tpu.pipeline_mode<synchronous>, transform_indices = @transform_4, window_bounds = array<i64: 3, 128>}, {transform_indices = @transform_5, window_bounds = array<i64: 1, 16, 16, 32>}, {transform_indices = @transform_6, window_bounds = array<i64: 1, 16, 16, 32>}]} {
    %cst = arith.constant 0.000000e+00 : f32
    %0 = vector.broadcast %cst : f32 to vector<1x18x36xf32>
    %c0 = arith.constant 0 : index
    %c0_0 = arith.constant 0 : index
    %c0_1 = arith.constant 0 : index
    %1 = vector.load %arg8[%c0, %c0_0, %c0_1] : memref<18x18x36xf32, #tpu.memory_space<vmem>>, vector<1x18x36xf32>
    tpu.vector_store %arg8[%c0, %c0_0, %c0_1], %0 {strides = array<i32>} : memref<18x18x36xf32, #tpu.memory_space<vmem>>, vector<1x18x36xf32>,
    %cst_2 = arith.constant 0.000000e+00 : f32
    %2 = vector.broadcast %cst_2 : f32 to vector<1x18x36xf32>
    %c17 = arith.constant 17 : index
    %c0_3 = arith.constant 0 : index
    %c0_4 = arith.constant 0 : index
    %3 = vector.load %arg8[%c17, %c0_3, %c0_4] : memref<18x18x36xf32, #tpu.memory_space<vmem>>, vector<1x18x36xf32>
    tpu.vector_store %arg8[%c17, %c0_3, %c0_4], %2 {strides = array<i32>} : memref<18x18x36xf32, #tpu.memory_space<vmem>>, vector<1x18x36xf32>,
    %cst_5 = arith.constant 0.000000e+00 : f32
    %4 = vector.broadcast %cst_5 : f32 to vector<16x1x36xf32>
    %c1 = arith.constant 1 : index
    %c0_6 = arith.constant 0 : index
    %c0_7 = arith.constant 0 : index
    %5 = vector.load %arg8[%c1, %c0_6, %c0_7] : memref<18x18x36xf32, #tpu.memory_space<vmem>>, vector<16x1x36xf32>
    tpu.vector_store %arg8[%c1, %c0_6, %c0_7], %4 {strides = array<i32>} : memref<18x18x36xf32, #tpu.memory_space<vmem>>, vector<16x1x36xf32>,
    %cst_8 = arith.constant 0.000000e+00 : f32
    %6 = vector.broadcast %cst_8 : f32 to vector<16x1x36xf32>
    %c1_9 = arith.constant 1 : index
    %c17_10 = arith.constant 17 : index
    %c0_11 = arith.constant 0 : index
    %7 = vector.load %arg8[%c1_9, %c17_10, %c0_11] : memref<18x18x36xf32, #tpu.memory_space<vmem>>, vector<16x1x36xf32>
    tpu.vector_store %arg8[%c1_9, %c17_10, %c0_11], %6 {strides = array<i32>} : memref<18x18x36xf32, #tpu.memory_space<vmem>>, vector<16x1x36xf32>,
    %c0_12 = arith.constant 0 : index
    %c0_13 = arith.constant 0 : index
    %c0_14 = arith.constant 0 : index
    %c0_15 = arith.constant 0 : index
    %8 = vector.load %arg2[%c0_12, %c0_13, %c0_14, %c0_15] : memref<1x16x16x32xf32, #tpu.memory_space<vmem>>, vector<1x16x16x32xf32>
    %9 = vector.shape_cast %8 : vector<1x16x16x32xf32> to vector<16x16x32xf32>
    %c1_16 = arith.constant 1 : index
    %c1_17 = arith.constant 1 : index
    %c0_18 = arith.constant 0 : index
    %10 = vector.load %arg8[%c1_16, %c1_17, %c0_18] : memref<18x18x36xf32, #tpu.memory_space<vmem>>, vector<16x16x32xf32>
    tpu.vector_store %arg8[%c1_16, %c1_17, %c0_18], %9 {strides = array<i32>} : memref<18x18x36xf32, #tpu.memory_space<vmem>>, vector<16x16x32xf32>,
    %c0_19 = arith.constant 0 : index
    %c0_20 = arith.constant 0 : index
    %c0_21 = arith.constant 0 : index
    %c0_22 = arith.constant 0 : index
    %11 = vector.load %arg1[%c0_19, %c0_20, %c0_21, %c0_22] : memref<1x16x16x4xf32, #tpu.memory_space<vmem>>, vector<1x16x16x4xf32>
    %12 = vector.shape_cast %11 : vector<1x16x16x4xf32> to vector<16x16x4xf32>
    %c1_23 = arith.constant 1 : index
    %c1_24 = arith.constant 1 : index
    %c32 = arith.constant 32 : index
    %13 = vector.load %arg8[%c1_23, %c1_24, %c32] : memref<18x18x36xf32, #tpu.memory_space<vmem>>, vector<16x16x4xf32>
    tpu.vector_store %arg8[%c1_23, %c1_24, %c32], %12 {strides = array<i32>} : memref<18x18x36xf32, #tpu.memory_space<vmem>>, vector<16x16x4xf32>,
    %c0_25 = arith.constant 0 : index
    %c0_26 = arith.constant 0 : index
    %c0_27 = arith.constant 0 : index
    %14 = vector.load %arg8[%c0_25, %c0_26, %c0_27] : memref<18x18x36xf32, #tpu.memory_space<vmem>>, vector<16x16x36xf32>
    %c0_28 = arith.constant 0 : index
    %c1_29 = arith.constant 1 : index
    %c0_30 = arith.constant 0 : index
    %15 = vector.load %arg8[%c0_28, %c1_29, %c0_30] : memref<18x18x36xf32, #tpu.memory_space<vmem>>, vector<16x16x36xf32>
    %c0_31 = arith.constant 0 : index
    %c2 = arith.constant 2 : index
    %c0_32 = arith.constant 0 : index
    %16 = vector.load %arg8[%c0_31, %c2, %c0_32] : memref<18x18x36xf32, #tpu.memory_space<vmem>>, vector<16x16x36xf32>
    %17 = tpu.concatenate %14, %15, %16 in 2 : vector<16x16x36xf32>, vector<16x16x36xf32>, vector<16x16x36xf32> -> vector<16x16x108xf32>
    %18 = vector.shape_cast %17 : vector<16x16x108xf32> to vector<256x108xf32>
    %19 = arith.truncf %18 : vector<256x108xf32> to vector<256x108xbf16>
    %c0_33 = arith.constant 0 : index
    %c0_34 = arith.constant 0 : index
    %20 = vector.load %arg4[%c0_33, %c0_34] : memref<324x128xbf16, #tpu.memory_space<vmem>>, vector<108x128xbf16>
    %cst_35 = arith.constant dense<0.000000e+00> : vector<256x128xf32>
    %21 = tpu.matmul %19, %20, %cst_35 {dimension_numbers = #tpu.dot_dimension_numbers<[1], [0], [0], [1], [0, 0, 1, 1], [], []>} : vector<256x108xbf16>, vector<108x128xbf16>, vector<256x128xf32> -> vector<256x128xf32>
    %c1_36 = arith.constant 1 : index
    %c0_37 = arith.constant 0 : index
    %c0_38 = arith.constant 0 : index
    %22 = vector.load %arg8[%c1_36, %c0_37, %c0_38] : memref<18x18x36xf32, #tpu.memory_space<vmem>>, vector<16x16x36xf32>
    %c1_39 = arith.constant 1 : index
    %c1_40 = arith.constant 1 : index
    %c0_41 = arith.constant 0 : index
    %23 = vector.load %arg8[%c1_39, %c1_40, %c0_41] : memref<18x18x36xf32, #tpu.memory_space<vmem>>, vector<16x16x36xf32>
    %c1_42 = arith.constant 1 : index
    %c2_43 = arith.constant 2 : index
    %c0_44 = arith.constant 0 : index
    %24 = vector.load %arg8[%c1_42, %c2_43, %c0_44] : memref<18x18x36xf32, #tpu.memory_space<vmem>>, vector<16x16x36xf32>
    %25 = tpu.concatenate %22, %23, %24 in 2 : vector<16x16x36xf32>, vector<16x16x36xf32>, vector<16x16x36xf32> -> vector<16x16x108xf32>
    %26 = vector.shape_cast %25 : vector<16x16x108xf32> to vector<256x108xf32>
    %27 = arith.truncf %26 : vector<256x108xf32> to vector<256x108xbf16>
    %c108 = arith.constant 108 : index
    %c0_45 = arith.constant 0 : index
    %28 = vector.load %arg4[%c108, %c0_45] : memref<324x128xbf16, #tpu.memory_space<vmem>>, vector<108x128xbf16>
    %cst_46 = arith.constant dense<0.000000e+00> : vector<256x128xf32>
    %29 = tpu.matmul %27, %28, %cst_46 {dimension_numbers = #tpu.dot_dimension_numbers<[1], [0], [0], [1], [0, 0, 1, 1], [], []>} : vector<256x108xbf16>, vector<108x128xbf16>, vector<256x128xf32> -> vector<256x128xf32>
    %30 = arith.addf %21, %29 : vector<256x128xf32>
    %c2_47 = arith.constant 2 : index
    %c0_48 = arith.constant 0 : index
    %c0_49 = arith.constant 0 : index
    %31 = vector.load %arg8[%c2_47, %c0_48, %c0_49] : memref<18x18x36xf32, #tpu.memory_space<vmem>>, vector<16x16x36xf32>
    %c2_50 = arith.constant 2 : index
    %c1_51 = arith.constant 1 : index
    %c0_52 = arith.constant 0 : index
    %32 = vector.load %arg8[%c2_50, %c1_51, %c0_52] : memref<18x18x36xf32, #tpu.memory_space<vmem>>, vector<16x16x36xf32>
    %c2_53 = arith.constant 2 : index
    %c2_54 = arith.constant 2 : index
    %c0_55 = arith.constant 0 : index
    %33 = vector.load %arg8[%c2_53, %c2_54, %c0_55] : memref<18x18x36xf32, #tpu.memory_space<vmem>>, vector<16x16x36xf32>
    %34 = tpu.concatenate %31, %32, %33 in 2 : vector<16x16x36xf32>, vector<16x16x36xf32>, vector<16x16x36xf32> -> vector<16x16x108xf32>
    %35 = vector.shape_cast %34 : vector<16x16x108xf32> to vector<256x108xf32>
    %36 = arith.truncf %35 : vector<256x108xf32> to vector<256x108xbf16>
    %c216 = arith.constant 216 : index
    %c0_56 = arith.constant 0 : index
    %37 = vector.load %arg4[%c216, %c0_56] : memref<324x128xbf16, #tpu.memory_space<vmem>>, vector<108x128xbf16>
    %cst_57 = arith.constant dense<0.000000e+00> : vector<256x128xf32>
    %38 = tpu.matmul %36, %37, %cst_57 {dimension_numbers = #tpu.dot_dimension_numbers<[1], [0], [0], [1], [0, 0, 1, 1], [], []>} : vector<256x108xbf16>, vector<108x128xbf16>, vector<256x128xf32> -> vector<256x128xf32>
    %39 = arith.addf %30, %38 : vector<256x128xf32>
    %c0_58 = arith.constant 0 : index
    %c0_59 = arith.constant 0 : index
    %40 = vector.load %arg5[%c0_58, %c0_59] : memref<3x128xf32, #tpu.memory_space<vmem>>, vector<1x128xf32>
    %41 = vector.broadcast %40 : vector<1x128xf32> to vector<256x128xf32>
    %42 = arith.addf %39, %41 : vector<256x128xf32>
    %43 = math.tanh %42 : vector<256x128xf32>
    %c1_60 = arith.constant 1 : index
    %c0_61 = arith.constant 0 : index
    %44 = vector.load %arg5[%c1_60, %c0_61] : memref<3x128xf32, #tpu.memory_space<vmem>>, vector<1x128xf32>
    %45 = vector.broadcast %44 : vector<1x128xf32> to vector<256x128xf32>
    %46 = arith.mulf %43, %45 : vector<256x128xf32>
    %c2_62 = arith.constant 2 : index
    %c0_63 = arith.constant 0 : index
    %47 = vector.load %arg5[%c2_62, %c0_63] : memref<3x128xf32, #tpu.memory_space<vmem>>, vector<1x128xf32>
    %48 = vector.broadcast %47 : vector<1x128xf32> to vector<256x128xf32>
    %49 = arith.addf %46, %48 : vector<256x128xf32>
    %50 = vector.extract_strided_slice %49 {offsets = [0, 0], sizes = [256, 32], strides = [1, 1]} : vector<256x128xf32> to vector<256x32xf32>
    %51 = vector.extract_strided_slice %49 {offsets = [0, 32], sizes = [256, 32], strides = [1, 1]} : vector<256x128xf32> to vector<256x32xf32>
    %52 = vector.extract_strided_slice %49 {offsets = [0, 64], sizes = [256, 32], strides = [1, 1]} : vector<256x128xf32> to vector<256x32xf32>
    %53 = vector.extract_strided_slice %49 {offsets = [0, 96], sizes = [256, 32], strides = [1, 1]} : vector<256x128xf32> to vector<256x32xf32>
    %c0_64 = arith.constant 0 : index
    %c0_65 = arith.constant 0 : index
    %c0_66 = arith.constant 0 : index
    %c0_67 = arith.constant 0 : index
    %54 = vector.load %arg3[%c0_64, %c0_65, %c0_66, %c0_67] : memref<1x16x16x32xf32, #tpu.memory_space<vmem>>, vector<1x16x16x32xf32>
    %55 = vector.shape_cast %54 : vector<1x16x16x32xf32> to vector<16x16x32xf32>
    %56 = vector.shape_cast %55 : vector<16x16x32xf32> to vector<256x32xf32>
    %57 = arith.mulf %51, %56 : vector<256x32xf32>
    %58 = arith.mulf %50, %53 : vector<256x32xf32>
    %59 = arith.addf %57, %58 : vector<256x32xf32>
    %60 = math.tanh %59 : vector<256x32xf32>
    %61 = arith.mulf %52, %60 : vector<256x32xf32>
    %62 = vector.shape_cast %61 : vector<256x32xf32> to vector<16x16x32xf32>
    %c0_68 = arith.constant 0 : index
    %c0_69 = arith.constant 0 : index
    %c0_70 = arith.constant 0 : index
    %c0_71 = arith.constant 0 : index
    %63 = vector.load %arg6[%c0_68, %c0_69, %c0_70, %c0_71] : memref<1x16x16x32xf32, #tpu.memory_space<vmem>>, vector<1x16x16x32xf32>
    %64 = vector.shape_cast %63 : vector<1x16x16x32xf32> to vector<16x16x32xf32>
    %65 = vector.shape_cast %62 : vector<16x16x32xf32> to vector<1x16x16x32xf32>
    tpu.vector_store %arg6[%c0_68, %c0_69, %c0_70, %c0_71], %65 {strides = array<i32>} : memref<1x16x16x32xf32, #tpu.memory_space<vmem>>, vector<1x16x16x32xf32>,
    %66 = vector.shape_cast %59 : vector<256x32xf32> to vector<16x16x32xf32>
    %c0_72 = arith.constant 0 : index
    %c0_73 = arith.constant 0 : index
    %c0_74 = arith.constant 0 : index
    %c0_75 = arith.constant 0 : index
    %67 = vector.load %arg7[%c0_72, %c0_73, %c0_74, %c0_75] : memref<1x16x16x32xf32, #tpu.memory_space<vmem>>, vector<1x16x16x32xf32>
    %68 = vector.shape_cast %67 : vector<1x16x16x32xf32> to vector<16x16x32xf32>
    %69 = vector.shape_cast %66 : vector<16x16x32xf32> to vector<1x16x16x32xf32>
    tpu.vector_store %arg7[%c0_72, %c0_73, %c0_74, %c0_75], %69 {strides = array<i32>} : memref<1x16x16x32xf32, #tpu.memory_space<vmem>>, vector<1x16x16x32xf32>,
    return
  }
  func.func @transform_0(%arg0: i32) -> (i32, i32, i32, i32) {
    %c0_i32 = arith.constant 0 : i32
    %c0_i32_0 = arith.constant 0 : i32
    %c0_i32_1 = arith.constant 0 : i32
    %c0_i32_2 = arith.constant 0 : i32
    return %arg0, %c0_i32, %c0_i32_0, %c0_i32_1 : i32, i32, i32, i32
  }
  func.func @transform_1(%arg0: i32) -> (i32, i32, i32, i32) {
    %c0_i32 = arith.constant 0 : i32
    %c0_i32_0 = arith.constant 0 : i32
    %c0_i32_1 = arith.constant 0 : i32
    %c0_i32_2 = arith.constant 0 : i32
    return %arg0, %c0_i32, %c0_i32_0, %c0_i32_1 : i32, i32, i32, i32
  }
  func.func @transform_2(%arg0: i32) -> (i32, i32, i32, i32) {
    %c0_i32 = arith.constant 0 : i32
    %c0_i32_0 = arith.constant 0 : i32
    %c0_i32_1 = arith.constant 0 : i32
    %c0_i32_2 = arith.constant 0 : i32
    return %arg0, %c0_i32, %c0_i32_0, %c0_i32_1 : i32, i32, i32, i32
  }
  func.func @transform_3(%arg0: i32) -> (i32, i32) {
    %c0_i32 = arith.constant 0 : i32
    %c0_i32_0 = arith.constant 0 : i32
    %c0_i32_1 = arith.constant 0 : i32
    return %c0_i32, %c0_i32_0 : i32, i32
  }
  func.func @transform_4(%arg0: i32) -> (i32, i32) {
    %c0_i32 = arith.constant 0 : i32
    %c0_i32_0 = arith.constant 0 : i32
    %c0_i32_1 = arith.constant 0 : i32
    return %c0_i32, %c0_i32_0 : i32, i32
  }
  func.func @transform_5(%arg0: i32) -> (i32, i32, i32, i32) {
    %c0_i32 = arith.constant 0 : i32
    %c0_i32_0 = arith.constant 0 : i32
    %c0_i32_1 = arith.constant 0 : i32
    %c0_i32_2 = arith.constant 0 : i32
    return %arg0, %c0_i32, %c0_i32_0, %c0_i32_1 : i32, i32, i32, i32
  }
  func.func @transform_6(%arg0: i32) -> (i32, i32, i32, i32) {
    %c0_i32 = arith.constant 0 : i32
    %c0_i32_0 = arith.constant 0 : i32
    %c0_i32_1 = arith.constant 0 : i32
    %c0_i32_2 = arith.constant 0 : i32
    return %arg0, %c0_i32, %c0_i32_0, %c0_i32_1 : i32, i32, i32, i32
  }
}

</mosaic_0001>

<llo_original>
// kernel: conv_lstm_cell_forward.1
$region0: #{conv_lstm_cell_forward.1}
  #allocation0 [shape = 'u32[]', space=smem, size = 0x4, offset = 0x4, fixed_abs, tag = 'smem constant byte address 0x4 - core index']
  #allocation1 [shape = 'u32[72,128]{1,0:T(1,128)}', space=vmem, size = 0x9000, scoped, tag = 'internal scratch']
  #allocation2 [shape = 'f32[18,18,36]{2,1,0:T(8,128)}', space=vmem, size = 0x36000, scoped, tag = 'scratch operand']
  %s0 = inlined_call_operand.vmem [shape: f32[2,16,16,4], index: 0, kind: input, shape index: {}]
  %s1 = inlined_call_operand.vmem [shape: f32[2,16,16,32], index: 1, kind: input, shape index: {}, may-alias: {1,5}]
  %s2 = inlined_call_operand.vmem [shape: f32[2,16,16,32], index: 2, kind: input, shape index: {}, may-alias: {2,6}]
  %s3 = inlined_call_operand.vmem [shape: bf16[324,128], index: 3, kind: input, shape index: {}]
  %s4 = inlined_call_operand.vmem [shape: f32[3,128], index: 4, kind: input, shape index: {}]
  %s5 = inlined_call_operand.vmem [shape: f32[2,16,16,32], index: 5, kind: output, shape index: {0}, may-alias: {1,5}]
  %s6 = inlined_call_operand.vmem [shape: f32[2,16,16,32], index: 6, kind: output, shape index: {1}, may-alias: {2,6}]
  %7 = xla_tuple %s5, %s6
  %s8 = sld [smem:[#allocation0]]
  $region61: #{conv_lstm_cell_forward.1} parent=0
    _
  %s10 = ssub.s32 1, %s8
  %s11 = scalar_select 0, %s10, %s8
  loop: start=0, step=1, limit=4
  $region2: #{conv_lstm_cell_forward.1} parent=0 // loop_pre_header
    _
  $region3: #{conv_lstm_cell_forward.1} parent=0 // loop_header
    %s13 = sphi 0, %s17
    %p14 = scmp.ge.s32.totalorder %s13, 4
    %s23 = sphi 0, %s25
    %s26 = sphi 0, %s23
    %s27 = sphi 0, %s26
    %s43 = sphi 0, %s27
    %s49 = sphi 0, %s51
    %s52 = sphi 0, %s49
    %s53 = sphi 0, %s52
    %s69 = sphi 0, %s53
    %s75 = sphi 0, %s77
    %s78 = sphi 0, %s75
    %s79 = sphi 0, %s78
    %s95 = sphi 0, %s79
    %s99 = sphi 0, %s99
    %s101 = sphi 0, %s99
    %s102 = sphi 0, %s101
    %s116 = sphi 0, %s102
    %s120 = sphi 0, %s120
    %s122 = sphi 0, %s120
    %s123 = sphi 0, %s122
    %s137 = sphi 0, %s123
    %s143 = sphi 0, %s145
    %s146 = sphi 0, %s143
    %s147 = sphi 0, %s146
    %s163 = sphi 0, %s147
    %s169 = sphi 0, %s171
    %s172 = sphi 0, %s169
    %s173 = sphi 0, %s172
    %s189 = sphi 0, %s173
  $region4: #{conv_lstm_cell_forward.1} parent=0 // loop_header_branch
    %16 = sbr.rel (%p14) target = $region8
  $region5: #{conv_lstm_cell_forward.1} parent=0 // loop_body
    %s18 = ssub.s32 %s13, 1
    %s19 = ssub.s32 %s13, 2
    %s20 = sadd.s32 %s13, 1
    %s21 = ssub.s32 %s13, %s20
    %p22 = scmp.eq.s32.totalorder %s21, 0
    %s24 = sadd.s32 %s23, 1
    %s25 = scalar_select %p22, %s23, %s24
    %p28 = pneg %p22
    %p29 = scmp.eq.s32.totalorder %s13, 1
    %p30 = por %p28, %p29
    %p31 = scmp.ne.s32.totalorder %s23, %s26
    %p32 = scmp.eq.s32.totalorder %s13, 0
    %p33 = por %p31, %p32
    %p34 = scmp.ne.s32.totalorder %s23, %s26
    %p35 = scmp.eq.s32.totalorder %s18, 1
    %p36 = por %p34, %p35
    %p37 = scmp.ne.s32.totalorder %s26, %s27
    %p38 = scmp.eq.s32.totalorder %s18, 0
    %p39 = por %p37, %p38
    %p40 = scmp.ne.s32.totalorder %s26, %s27
    %p41 = scmp.eq.s32.totalorder %s19, 1
    %p42 = por %p40, %p41
    %p44 = scmp.ne.s32.totalorder %s27, %s43
    %p45 = scmp.eq.s32.totalorder %s19, 0
    %p46 = por %p44, %p45
    %s47 = ssub.s32 %s13, %s20
    %p48 = scmp.eq.s32.totalorder %s47, 0
    %s50 = sadd.s32 %s49, 1
    %s51 = scalar_select %p48, %s49, %s50
    %p54 = pneg %p48
    %p55 = scmp.eq.s32.totalorder %s13, 1
    %p56 = por %p54, %p55
    %p57 = scmp.ne.s32.totalorder %s49, %s52
    %p58 = scmp.eq.s32.totalorder %s13, 0
    %p59 = por %p57, %p58
    %p60 = scmp.ne.s32.totalorder %s49, %s52
    %p61 = scmp.eq.s32.totalorder %s18, 1
    %p62 = por %p60, %p61
    %p63 = scmp.ne.s32.totalorder %s52, %s53
    %p64 = scmp.eq.s32.totalorder %s18, 0
    %p65 = por %p63, %p64
    %p66 = scmp.ne.s32.totalorder %s52, %s53
    %p67 = scmp.eq.s32.totalorder %s19, 1
    %p68 = por %p66, %p67
    %p70 = scmp.ne.s32.totalorder %s53, %s69
    %p71 = scmp.eq.s32.totalorder %s19, 0
    %p72 = por %p70, %p71
    %s73 = ssub.s32 %s13, %s20
    %p74 = scmp.eq.s32.totalorder %s73, 0
    %s76 = sadd.s32 %s75, 1
    %s77 = scalar_select %p74, %s75, %s76
    %p80 = pneg %p74
    %p81 = scmp.eq.s32.totalorder %s13, 1
    %p82 = por %p80, %p81
    %p83 = scmp.ne.s32.totalorder %s75, %s78
    %p84 = scmp.eq.s32.totalorder %s13, 0
    %p85 = por %p83, %p84
    %p86 = scmp.ne.s32.totalorder %s75, %s78
    %p87 = scmp.eq.s32.totalorder %s18, 1
    %p88 = por %p86, %p87
    %p89 = scmp.ne.s32.totalorder %s78, %s79
    %p90 = scmp.eq.s32.totalorder %s18, 0
    %p91 = por %p89, %p90
    %p92 = scmp.ne.s32.totalorder %s78, %s79
    %p93 = scmp.eq.s32.totalorder %s19, 1
    %p94 = por %p92, %p93
    %p96 = scmp.ne.s32.totalorder %s79, %s95
    %p97 = scmp.eq.s32.totalorder %s19, 0
    %p98 = por %p96, %p97
    %s100 = sadd.s32 %s99, 1
    %p103 = scmp.eq.s32.totalorder %s13, 1
    %p104 = scmp.ne.s32.totalorder %s99, %s101
    %p105 = scmp.eq.s32.totalorder %s13, 0
    %p106 = por %p104, %p105
    %p107 = scmp.ne.s32.totalorder %s99, %s101
    %p108 = scmp.eq.s32.totalorder %s18, 1
    %p109 = por %p107, %p108
    %p110 = scmp.ne.s32.totalorder %s101, %s102
    %p111 = scmp.eq.s32.totalorder %s18, 0
    %p112 = por %p110, %p111
    %p113 = scmp.ne.s32.totalorder %s101, %s102
    %p114 = scmp.eq.s32.totalorder %s19, 1
    %p115 = por %p113, %p114
    %p117 = scmp.ne.s32.totalorder %s102, %s116
    %p118 = scmp.eq.s32.totalorder %s19, 0
    %p119 = por %p117, %p118
    %s121 = sadd.s32 %s120, 1
    %p124 = scmp.eq.s32.totalorder %s13, 1
    %p125 = scmp.ne.s32.totalorder %s120, %s122
    %p126 = scmp.eq.s32.totalorder %s13, 0
    %p127 = por %p125, %p126
    %p128 = scmp.ne.s32.totalorder %s120, %s122
    %p129 = scmp.eq.s32.totalorder %s18, 1
    %p130 = por %p128, %p129
    %p131 = scmp.ne.s32.totalorder %s122, %s123
    %p132 = scmp.eq.s32.totalorder %s18, 0
    %p133 = por %p131, %p132
    %p134 = scmp.ne.s32.totalorder %s122, %s123
    %p135 = scmp.eq.s32.totalorder %s19, 1
    %p136 = por %p134, %p135
    %p138 = scmp.ne.s32.totalorder %s123, %s137
    %p139 = scmp.eq.s32.totalorder %s19, 0
    %p140 = por %p138, %p139
    %s141 = ssub.s32 %s13, %s20
    %p142 = scmp.eq.s32.totalorder %s141, 0
    %s144 = sadd.s32 %s143, 1
    %s145 = scalar_select %p142, %s143, %s144
    %p148 = pneg %p142
    %p149 = scmp.eq.s32.totalorder %s13, 1
    %p150 = por %p148, %p149
    %p151 = scmp.ne.s32.totalorder %s143, %s146
    %p152 = scmp.eq.s32.totalorder %s13, 0
    %p153 = por %p151, %p152
    %p154 = scmp.ne.s32.totalorder %s143, %s146
    %p155 = scmp.eq.s32.totalorder %s18, 1
    %p156 = por %p154, %p155
    %p157 = scmp.ne.s32.totalorder %s146, %s147
    %p158 = scmp.eq.s32.totalorder %s18, 0
    %p159 = por %p157, %p158
    %p160 = scmp.ne.s32.totalorder %s146, %s147
    %p161 = scmp.eq.s32.totalorder %s19, 1
    %p162 = por %p160, %p161
    %p164 = scmp.ne.s32.totalorder %s147, %s163
    %p165 = scmp.eq.s32.totalorder %s19, 0
    %p166 = por %p164, %p165
    %s167 = ssub.s32 %s13, %s20
    %p168 = scmp.eq.s32.totalorder %s167, 0
    %s170 = sadd.s32 %s169, 1
    %s171 = scalar_select %p168, %s169, %s170
    %p174 = pneg %p168
    %p175 = scmp.eq.s32.totalorder %s13, 1
    %p176 = por %p174, %p175
    %p177 = scmp.ne.s32.totalorder %s169, %s172
    %p178 = scmp.eq.s32.totalorder %s13, 0
    %p179 = por %p177, %p178
    %p180 = scmp.ne.s32.totalorder %s169, %s172
    %p181 = scmp.eq.s32.totalorder %s18, 1
    %p182 = por %p180, %p181
    %p183 = scmp.ne.s32.totalorder %s172, %s173
    %p184 = scmp.eq.s32.totalorder %s18, 0
    %p185 = por %p183, %p184
    %p186 = scmp.ne.s32.totalorder %s172, %s173
    %p187 = scmp.eq.s32.totalorder %s19, 1
    %p188 = por %p186, %p187
    %p190 = scmp.ne.s32.totalorder %s173, %s189
    %p191 = scmp.eq.s32.totalorder %s19, 0
    %p192 = por %p190, %p191
    %p193 = scmp.le.s32.totalorder 1, %s13
    %p194 = scmp.lt.s32.totalorder %s13, 3
    %p195 = pnand %p193, %p194
    %p196 = pneg %p195
    // Predicated region
    $region9: #{conv_lstm_cell_forward.1} parent=5 // pred_check
      _
    $region10: #{conv_lstm_cell_forward.1} parent=5 // pred_check_branch
      %198 = sbr.rel (%p195) target = $region12
    $region11: #{conv_lstm_cell_forward.1} parent=5 // pred_region
      %s199 = ssub.s32 %s13, 1
      // Predicated region
      $region13: #{conv_lstm_cell_forward.1} parent=11 // pred_check
        %p200 = pneg %p112
      $region14: #{conv_lstm_cell_forward.1} parent=11 // pred_check_branch
        %202 = sbr.rel (%p200) target = $region16
      $region15: #{conv_lstm_cell_forward.1} parent=11 // pred_region
        _
      $region16: #{conv_lstm_cell_forward.1} parent=11 // pred_fallthru
        _
      // Predicated region
      $region17: #{conv_lstm_cell_forward.1} parent=11 // pred_check
        %p203 = pneg %p133
      $region18: #{conv_lstm_cell_forward.1} parent=11 // pred_check_branch
        %205 = sbr.rel (%p203) target = $region20
      $region19: #{conv_lstm_cell_forward.1} parent=11 // pred_region
        _
      $region20: #{conv_lstm_cell_forward.1} parent=11 // pred_fallthru
        _
    $region12: #{conv_lstm_cell_forward.1} parent=5 // pred_fallthru
      _
    %p206 = scmp.lt.s32.totalorder %s13, 2
    // Predicated region
    $region21: #{conv_lstm_cell_forward.1} parent=5 // pred_check
      %p207 = pneg %p206
    $region22: #{conv_lstm_cell_forward.1} parent=5 // pred_check_branch
      %209 = sbr.rel (%p207) target = $region24
    $region23: #{conv_lstm_cell_forward.1} parent=5 // pred_region
      // Predicated region
      $region25: #{conv_lstm_cell_forward.1} parent=23 // pred_check
        %p210 = pneg %p33
      $region26: #{conv_lstm_cell_forward.1} parent=23 // pred_check_branch
        %212 = sbr.rel (%p210) target = $region28
      $region27: #{conv_lstm_cell_forward.1} parent=23 // pred_region
        %p213 = scmp.lt.s32.totalorder %s13, 1
        %s214 = scalar_select %p213, %s13, 1
        %s215 = smul.addr %s214, 32
        %s216 = smul.addr %s215, 8
        %s217 = scalar_lea.vmem %s0, %s216
      $region28: #{conv_lstm_cell_forward.1} parent=23 // pred_fallthru
        _
      // Predicated region
      $region29: #{conv_lstm_cell_forward.1} parent=23 // pred_check
        %p218 = pneg %p59
      $region30: #{conv_lstm_cell_forward.1} parent=23 // pred_check_branch
        %220 = sbr.rel (%p218) target = $region32
      $region31: #{conv_lstm_cell_forward.1} parent=23 // pred_region
        %p221 = scmp.lt.s32.totalorder %s13, 1
        %s222 = scalar_select %p221, %s13, 1
        %s223 = smul.addr %s222, 32
        %s224 = smul.addr %s223, 8
        %s225 = scalar_lea.vmem %s1, %s224
      $region32: #{conv_lstm_cell_forward.1} parent=23 // pred_fallthru
        _
      // Predicated region
      $region33: #{conv_lstm_cell_forward.1} parent=23 // pred_check
        %p226 = pneg %p85
      $region34: #{conv_lstm_cell_forward.1} parent=23 // pred_check_branch
        %228 = sbr.rel (%p226) target = $region36
      $region35: #{conv_lstm_cell_forward.1} parent=23 // pred_region
        %p229 = scmp.lt.s32.totalorder %s13, 1
        %s230 = scalar_select %p229, %s13, 1
        %s231 = smul.addr %s230, 32
        %s232 = smul.addr %s231, 8
        %s233 = scalar_lea.vmem %s2, %s232
      $region36: #{conv_lstm_cell_forward.1} parent=23 // pred_fallthru
        _
    $region24: #{conv_lstm_cell_forward.1} parent=5 // pred_fallthru
      _
    %p234 = scmp.le.s32.totalorder 1, %s13
    %p235 = scmp.lt.s32.totalorder %s13, 3
    %p236 = pnand %p234, %p235
    %p237 = pneg %p236
    // Predicated region
    $region37: #{conv_lstm_cell_forward.1} parent=5 // pred_check
      _
    $region38: #{conv_lstm_cell_forward.1} parent=5 // pred_check_branch
      %239 = sbr.rel (%p236) target = $region40
    $region39: #{conv_lstm_cell_forward.1} parent=5 // pred_region
      %s240 = ssub.s32 %s13, 1
      %p241 = scmp.lt.s32.totalorder %s18, 1
      %s242 = scalar_select %p241, %s18, 1
      %s243 = smul.addr %s242, 32
      %s244 = smul.addr %s243, 8
      %s245 = scalar_lea.vmem %s0, %s244
      %p246 = pneg %p39
      %p247 = pneg %p36
      %p248 = scmp.lt.s32.totalorder %s18, 1
      %s249 = scalar_select %p248, %s18, 1
      %s250 = smul.addr %s249, 32
      %s251 = smul.addr %s250, 8
      %s252 = scalar_lea.vmem %s1, %s251
      %p253 = pneg %p65
      %p254 = pneg %p62
      %p255 = scmp.lt.s32.totalorder %s18, 1
      %s256 = scalar_select %p255, %s18, 1
      %s257 = smul.addr %s256, 32
      %s258 = smul.addr %s257, 8
      %s259 = scalar_lea.vmem %s2, %s258
      %p260 = pneg %p91
      %p261 = pneg %p88
      %p262 = pneg %p112
      %p263 = pneg %p109
      %p264 = pneg %p133
      %p265 = pneg %p130
      %p266 = pneg %p159
      %p267 = pneg %p156
      %p268 = scmp.lt.s32.totalorder %s18, 1
      %s269 = scalar_select %p268, %s18, 1
      %s270 = smul.addr %s269, 32
      %s271 = smul.addr %s270, 8
      %s272 = scalar_lea.vmem %s5, %s271
      %p273 = pneg %p185
      %p274 = pneg %p182
      %p275 = scmp.lt.s32.totalorder %s18, 1
      %s276 = scalar_select %p275, %s18, 1
      %s277 = smul.addr %s276, 32
      %s278 = smul.addr %s277, 8
      %s279 = scalar_lea.vmem %s6, %s278
      %p280 = scmp.lt.s32.totalorder %s18, 1
      %s281 = scalar_select %p280, %s18, 1
      %s282 = smul.addr %s281, 32
      %s283 = smul.addr %s282, 8
      %s284 = scalar_lea.vmem %s0, %s283
      %p285 = scmp.lt.s32.totalorder %s18, 1
      %s286 = scalar_select %p285, %s18, 1
      %s287 = smul.addr %s286, 32
      %s288 = smul.addr %s287, 8
      %s289 = scalar_lea.vmem %s1, %s288
      %p290 = scmp.lt.s32.totalorder %s18, 1
      %s291 = scalar_select %p290, %s18, 1
      %s292 = smul.addr %s291, 32
      %s293 = smul.addr %s292, 8
      %s294 = scalar_lea.vmem %s2, %s293
      %p295 = scmp.lt.s32.totalorder %s18, 1
      %s296 = scalar_select %p295, %s18, 1
      %s297 = smul.addr %s296, 32
      %s298 = smul.addr %s297, 8
      %s299 = scalar_lea.vmem %s5, %s298
      %p300 = scmp.lt.s32.totalorder %s18, 1
      %s301 = scalar_select %p300, %s18, 1
      %s302 = smul.addr %s301, 32
      %s303 = smul.addr %s302, 8
      %s304 = scalar_lea.vmem %s6, %s303
      %vm306 = vcmask 293888
      %307 = vst.msk [vmem:[#allocation2] sm:$0xff] %vm306, 0.0
      %308 = vst.msk [vmem:[#allocation2 + $0x8] sm:$0xff] %vm306, 0.0
      %vm309 = vcmask 287744
      %310 = vst.msk [vmem:[#allocation2 + $0x10] sm:$0x3] %vm309, 0.0
      %s311 = scalar_lea.vmem [#allocation2], 408
      %312 = vst.msk [vmem:[%s311] sm:$0xff] %vm306, 0.0
      %313 = vst.msk [vmem:[%s311 + $0x8] sm:$0xff] %vm306, 0.0
      %314 = vst.msk [vmem:[%s311 + $0x10] sm:$0x3] %vm309, 0.0
      %s315 = scalar_lea.vmem [#allocation2], 24
      %vm316 = vcmask 286720
      %317 = vst.msk [vmem:[%s315] sm:$0x1] %vm316, 0.0
      %318 = vst.msk [vmem:[%s315 + $0x18] sm:$0x1] %vm316, 0.0
      %319 = vst.msk [vmem:[%s315 + $0x30] sm:$0x1] %vm316, 0.0
      %320 = vst.msk [vmem:[%s315 + $0x48] sm:$0x1] %vm316, 0.0
      %321 = vst.msk [vmem:[%s315 + $0x60] sm:$0x1] %vm316, 0.0
      %322 = vst.msk [vmem:[%s315 + $0x78] sm:$0x1] %vm316, 0.0
      %323 = vst.msk [vmem:[%s315 + $0x90] sm:$0x1] %vm316, 0.0
      %324 = vst.msk [vmem:[%s315 + $0xa8] sm:$0x1] %vm316, 0.0
      %325 = vst.msk [vmem:[%s315 + $0xc0] sm:$0x1] %vm316, 0.0
      %326 = vst.msk [vmem:[%s315 + $0xd8] sm:$0x1] %vm316, 0.0
      %327 = vst.msk [vmem:[%s315 + $0xf0] sm:$0x1] %vm316, 0.0
      %328 = vst.msk [vmem:[%s315 + $0x108] sm:$0x1] %vm316, 0.0
      %329 = vst.msk [vmem:[%s315 + $0x120] sm:$0x1] %vm316, 0.0
      %330 = vst.msk [vmem:[%s315 + $0x138] sm:$0x1] %vm316, 0.0
      %331 = vst.msk [vmem:[%s315 + $0x150] sm:$0x1] %vm316, 0.0
      %332 = vst.msk [vmem:[%s315 + $0x168] sm:$0x1] %vm316, 0.0
      %333 = vst.msk [vmem:[%s315 + $0x11] sm:$0x1] %vm316, 0.0
      %334 = vst.msk [vmem:[%s315 + $0x29] sm:$0x1] %vm316, 0.0
      %335 = vst.msk [vmem:[%s315 + $0x41] sm:$0x1] %vm316, 0.0
      %336 = vst.msk [vmem:[%s315 + $0x59] sm:$0x1] %vm316, 0.0
      %337 = vst.msk [vmem:[%s315 + $0x71] sm:$0x1] %vm316, 0.0
      %338 = vst.msk [vmem:[%s315 + $0x89] sm:$0x1] %vm316, 0.0
      %339 = vst.msk [vmem:[%s315 + $0xa1] sm:$0x1] %vm316, 0.0
      %340 = vst.msk [vmem:[%s315 + $0xb9] sm:$0x1] %vm316, 0.0
      %341 = vst.msk [vmem:[%s315 + $0xd1] sm:$0x1] %vm316, 0.0
      %342 = vst.msk [vmem:[%s315 + $0xe9] sm:$0x1] %vm316, 0.0
      %343 = vst.msk [vmem:[%s315 + $0x101] sm:$0x1] %vm316, 0.0
      %344 = vst.msk [vmem:[%s315 + $0x119] sm:$0x1] %vm316, 0.0
      %345 = vst.msk [vmem:[%s315 + $0x131] sm:$0x1] %vm316, 0.0
      %346 = vst.msk [vmem:[%s315 + $0x149] sm:$0x1] %vm316, 0.0
      %347 = vst.msk [vmem:[%s315 + $0x161] sm:$0x1] %vm316, 0.0
      %348 = vst.msk [vmem:[%s315 + $0x179] sm:$0x1] %vm316, 0.0
      %v349 = vld [vmem:[%s289] sm:$0xff]
      %v350 = vld [vmem:[%s289 + $0x8] sm:$0xff]
      %v351 = vld [vmem:[%s289 + $0x10] sm:$0xff]
      %v352 = vld [vmem:[%s289 + $0x18] sm:$0xff]
      %v353 = vld [vmem:[%s289 + $0x20] sm:$0xff]
      %v354 = vld [vmem:[%s289 + $0x28] sm:$0xff]
      %v355 = vld [vmem:[%s289 + $0x30] sm:$0xff]
      %v356 = vld [vmem:[%s289 + $0x38] sm:$0xff]
      %v357 = vld [vmem:[%s289 + $0x40] sm:$0xff]
      %v358 = vld [vmem:[%s289 + $0x48] sm:$0xff]
      %v359 = vld [vmem:[%s289 + $0x50] sm:$0xff]
      %v360 = vld [vmem:[%s289 + $0x58] sm:$0xff]
      %v361 = vld [vmem:[%s289 + $0x60] sm:$0xff]
      %v362 = vld [vmem:[%s289 + $0x68] sm:$0xff]
      %v363 = vld [vmem:[%s289 + $0x70] sm:$0xff]
      %v364 = vld [vmem:[%s289 + $0x78] sm:$0xff]
      %v365 = vld [vmem:[%s289 + $0x80] sm:$0xff]
      %v366 = vld [vmem:[%s289 + $0x88] sm:$0xff]
      %v367 = vld [vmem:[%s289 + $0x90] sm:$0xff]
      %v368 = vld [vmem:[%s289 + $0x98] sm:$0xff]
      %v369 = vld [vmem:[%s289 + $0xa0] sm:$0xff]
      %v370 = vld [vmem:[%s289 + $0xa8] sm:$0xff]
      %v371 = vld [vmem:[%s289 + $0xb0] sm:$0xff]
      %v372 = vld [vmem:[%s289 + $0xb8] sm:$0xff]
      %v373 = vld [vmem:[%s289 + $0xc0] sm:$0xff]
      %v374 = vld [vmem:[%s289 + $0xc8] sm:$0xff]
      %v375 = vld [vmem:[%s289 + $0xd0] sm:$0xff]
      %v376 = vld [vmem:[%s289 + $0xd8] sm:$0xff]
      %v377 = vld [vmem:[%s289 + $0xe0] sm:$0xff]
      %v378 = vld [vmem:[%s289 + $0xe8] sm:$0xff]
      %v379 = vld [vmem:[%s289 + $0xf0] sm:$0xff]
      %v380 = vld [vmem:[%s289 + $0xf8] sm:$0xff]
      %vm381 = vcmask 261120
      %382 = vst.msk [vmem:[%s315 + $0x1] sm:$0xff] %vm381, %v349
      %383 = vst.msk [vmem:[%s315 + $0x9] sm:$0xff] %vm381, %v350
      %384 = vst.msk [vmem:[%s315 + $0x19] sm:$0xff] %vm381, %v351
      %385 = vst.msk [vmem:[%s315 + $0x21] sm:$0xff] %vm381, %v352
      %386 = vst.msk [vmem:[%s315 + $0x31] sm:$0xff] %vm381, %v353
      %387 = vst.msk [vmem:[%s315 + $0x39] sm:$0xff] %vm381, %v354
      %388 = vst.msk [vmem:[%s315 + $0x49] sm:$0xff] %vm381, %v355
      %389 = vst.msk [vmem:[%s315 + $0x51] sm:$0xff] %vm381, %v356
      %390 = vst.msk [vmem:[%s315 + $0x61] sm:$0xff] %vm381, %v357
      %391 = vst.msk [vmem:[%s315 + $0x69] sm:$0xff] %vm381, %v358
      %392 = vst.msk [vmem:[%s315 + $0x79] sm:$0xff] %vm381, %v359
      %393 = vst.msk [vmem:[%s315 + $0x81] sm:$0xff] %vm381, %v360
      %394 = vst.msk [vmem:[%s315 + $0x91] sm:$0xff] %vm381, %v361
      %395 = vst.msk [vmem:[%s315 + $0x99] sm:$0xff] %vm381, %v362
      %396 = vst.msk [vmem:[%s315 + $0xa9] sm:$0xff] %vm381, %v363
      %397 = vst.msk [vmem:[%s315 + $0xb1] sm:$0xff] %vm381, %v364
      %398 = vst.msk [vmem:[%s315 + $0xc1] sm:$0xff] %vm381, %v365
      %399 = vst.msk [vmem:[%s315 + $0xc9] sm:$0xff] %vm381, %v366
      %400 = vst.msk [vmem:[%s315 + $0xd9] sm:$0xff] %vm381, %v367
      %401 = vst.msk [vmem:[%s315 + $0xe1] sm:$0xff] %vm381, %v368
      %402 = vst.msk [vmem:[%s315 + $0xf1] sm:$0xff] %vm381, %v369
      %403 = vst.msk [vmem:[%s315 + $0xf9] sm:$0xff] %vm381, %v370
      %404 = vst.msk [vmem:[%s315 + $0x109] sm:$0xff] %vm381, %v371
      %405 = vst.msk [vmem:[%s315 + $0x111] sm:$0xff] %vm381, %v372
      %406 = vst.msk [vmem:[%s315 + $0x121] sm:$0xff] %vm381, %v373
      %407 = vst.msk [vmem:[%s315 + $0x129] sm:$0xff] %vm381, %v374
      %408 = vst.msk [vmem:[%s315 + $0x139] sm:$0xff] %vm381, %v375
      %409 = vst.msk [vmem:[%s315 + $0x141] sm:$0xff] %vm381, %v376
      %410 = vst.msk [vmem:[%s315 + $0x151] sm:$0xff] %vm381, %v377
      %411 = vst.msk [vmem:[%s315 + $0x159] sm:$0xff] %vm381, %v378
      %412 = vst.msk [vmem:[%s315 + $0x169] sm:$0xff] %vm381, %v379
      %413 = vst.msk [vmem:[%s315 + $0x171] sm:$0xff] %vm381, %v380
      %v414 = vld [vmem:[%s284] sm:$0xff]
      %v415 = vld [vmem:[%s284 + $0x8] sm:$0xff]
      %v416 = vld [vmem:[%s284 + $0x10] sm:$0xff]
      %v417 = vld [vmem:[%s284 + $0x18] sm:$0xff]
      %v418 = vld [vmem:[%s284 + $0x20] sm:$0xff]
      %v419 = vld [vmem:[%s284 + $0x28] sm:$0xff]
      %v420 = vld [vmem:[%s284 + $0x30] sm:$0xff]
      %v421 = vld [vmem:[%s284 + $0x38] sm:$0xff]
      %v422 = vld [vmem:[%s284 + $0x40] sm:$0xff]
      %v423 = vld [vmem:[%s284 + $0x48] sm:$0xff]
      %v424 = vld [vmem:[%s284 + $0x50] sm:$0xff]
      %v425 = vld [vmem:[%s284 + $0x58] sm:$0xff]
      %v426 = vld [vmem:[%s284 + $0x60] sm:$0xff]
      %v427 = vld [vmem:[%s284 + $0x68] sm:$0xff]
      %v428 = vld [vmem:[%s284 + $0x70] sm:$0xff]
      %v429 = vld [vmem:[%s284 + $0x78] sm:$0xff]
      %v430 = vld [vmem:[%s284 + $0x80] sm:$0xff]
      %v431 = vld [vmem:[%s284 + $0x88] sm:$0xff]
      %v432 = vld [vmem:[%s284 + $0x90] sm:$0xff]
      %v433 = vld [vmem:[%s284 + $0x98] sm:$0xff]
      %v434 = vld [vmem:[%s284 + $0xa0] sm:$0xff]
      %v435 = vld [vmem:[%s284 + $0xa8] sm:$0xff]
      %v436 = vld [vmem:[%s284 + $0xb0] sm:$0xff]
      %v437 = vld [vmem:[%s284 + $0xb8] sm:$0xff]
      %v438 = vld [vmem:[%s284 + $0xc0] sm:$0xff]
      %v439 = vld [vmem:[%s284 + $0xc8] sm:$0xff]
      %v440 = vld [vmem:[%s284 + $0xd0] sm:$0xff]
      %v441 = vld [vmem:[%s284 + $0xd8] sm:$0xff]
      %v442 = vld [vmem:[%s284 + $0xe0] sm:$0xff]
      %v443 = vld [vmem:[%s284 + $0xe8] sm:$0xff]
      %v444 = vld [vmem:[%s284 + $0xf0] sm:$0xff]
      %v445 = vld [vmem:[%s284 + $0xf8] sm:$0xff]
      %478 = vrot.lane.b32.xlu0 %v414, 32
      %v479 = vpop.permute.xlu0 %478
      %480 = vrot.lane.b32.xlu0 %v415, 32
      %v481 = vpop.permute.xlu0 %480
      %482 = vrot.lane.b32.xlu0 %v416, 32
      %v483 = vpop.permute.xlu0 %482
      %484 = vrot.lane.b32.xlu0 %v417, 32
      %v485 = vpop.permute.xlu0 %484
      %486 = vrot.lane.b32.xlu0 %v418, 32
      %v487 = vpop.permute.xlu0 %486
      %488 = vrot.lane.b32.xlu0 %v419, 32
      %v489 = vpop.permute.xlu0 %488
      %490 = vrot.lane.b32.xlu0 %v420, 32
      %v491 = vpop.permute.xlu0 %490
      %492 = vrot.lane.b32.xlu0 %v421, 32
      %v493 = vpop.permute.xlu0 %492
      %494 = vrot.lane.b32.xlu0 %v422, 32
      %v495 = vpop.permute.xlu0 %494
      %496 = vrot.lane.b32.xlu0 %v423, 32
      %v497 = vpop.permute.xlu0 %496
      %498 = vrot.lane.b32.xlu0 %v424, 32
      %v499 = vpop.permute.xlu0 %498
      %500 = vrot.lane.b32.xlu0 %v425, 32
      %v501 = vpop.permute.xlu0 %500
      %502 = vrot.lane.b32.xlu0 %v426, 32
      %v503 = vpop.permute.xlu0 %502
      %504 = vrot.lane.b32.xlu0 %v427, 32
      %v505 = vpop.permute.xlu0 %504
      %506 = vrot.lane.b32.xlu0 %v428, 32
      %v507 = vpop.permute.xlu0 %506
      %508 = vrot.lane.b32.xlu0 %v429, 32
      %v509 = vpop.permute.xlu0 %508
      %510 = vrot.lane.b32.xlu0 %v430, 32
      %v511 = vpop.permute.xlu0 %510
      %512 = vrot.lane.b32.xlu0 %v431, 32
      %v513 = vpop.permute.xlu0 %512
      %514 = vrot.lane.b32.xlu0 %v432, 32
      %v515 = vpop.permute.xlu0 %514
      %516 = vrot.lane.b32.xlu0 %v433, 32
      %v517 = vpop.permute.xlu0 %516
      %518 = vrot.lane.b32.xlu0 %v434, 32
      %v519 = vpop.permute.xlu0 %518
      %520 = vrot.lane.b32.xlu0 %v435, 32
      %v521 = vpop.permute.xlu0 %520
      %522 = vrot.lane.b32.xlu0 %v436, 32
      %v523 = vpop.permute.xlu0 %522
      %524 = vrot.lane.b32.xlu0 %v437, 32
      %v525 = vpop.permute.xlu0 %524
      %526 = vrot.lane.b32.xlu0 %v438, 32
      %v527 = vpop.permute.xlu0 %526
      %528 = vrot.lane.b32.xlu0 %v439, 32
      %v529 = vpop.permute.xlu0 %528
      %530 = vrot.lane.b32.xlu0 %v440, 32
      %v531 = vpop.permute.xlu0 %530
      %532 = vrot.lane.b32.xlu0 %v441, 32
      %v533 = vpop.permute.xlu0 %532
      %534 = vrot.lane.b32.xlu0 %v442, 32
      %v535 = vpop.permute.xlu0 %534
      %536 = vrot.lane.b32.xlu0 %v443, 32
      %v537 = vpop.permute.xlu0 %536
      %538 = vrot.lane.b32.xlu0 %v444, 32
      %v539 = vpop.permute.xlu0 %538
      %540 = vrot.lane.b32.xlu0 %v445, 32
      %v541 = vpop.permute.xlu0 %540
      %vm574 = vcmask 294144
      %575 = vst.msk [vmem:[%s315 + $0x1] sm:$0xff] %vm574, %v479
      %576 = vst.msk [vmem:[%s315 + $0x9] sm:$0xff] %vm574, %v481
      %577 = vst.msk [vmem:[%s315 + $0x19] sm:$0xff] %vm574, %v483
      %578 = vst.msk [vmem:[%s315 + $0x21] sm:$0xff] %vm574, %v485
      %579 = vst.msk [vmem:[%s315 + $0x31] sm:$0xff] %vm574, %v487
      %580 = vst.msk [vmem:[%s315 + $0x39] sm:$0xff] %vm574, %v489
      %581 = vst.msk [vmem:[%s315 + $0x49] sm:$0xff] %vm574, %v491
      %582 = vst.msk [vmem:[%s315 + $0x51] sm:$0xff] %vm574, %v493
      %583 = vst.msk [vmem:[%s315 + $0x61] sm:$0xff] %vm574, %v495
      %584 = vst.msk [vmem:[%s315 + $0x69] sm:$0xff] %vm574, %v497
      %585 = vst.msk [vmem:[%s315 + $0x79] sm:$0xff] %vm574, %v499
      %586 = vst.msk [vmem:[%s315 + $0x81] sm:$0xff] %vm574, %v501
      %587 = vst.msk [vmem:[%s315 + $0x91] sm:$0xff] %vm574, %v503
      %588 = vst.msk [vmem:[%s315 + $0x99] sm:$0xff] %vm574, %v505
      %589 = vst.msk [vmem:[%s315 + $0xa9] sm:$0xff] %vm574, %v507
      %590 = vst.msk [vmem:[%s315 + $0xb1] sm:$0xff] %vm574, %v509
      %591 = vst.msk [vmem:[%s315 + $0xc1] sm:$0xff] %vm574, %v511
      %592 = vst.msk [vmem:[%s315 + $0xc9] sm:$0xff] %vm574, %v513
      %593 = vst.msk [vmem:[%s315 + $0xd9] sm:$0xff] %vm574, %v515
      %594 = vst.msk [vmem:[%s315 + $0xe1] sm:$0xff] %vm574, %v517
      %595 = vst.msk [vmem:[%s315 + $0xf1] sm:$0xff] %vm574, %v519
      %596 = vst.msk [vmem:[%s315 + $0xf9] sm:$0xff] %vm574, %v521
      %597 = vst.msk [vmem:[%s315 + $0x109] sm:$0xff] %vm574, %v523
      %598 = vst.msk [vmem:[%s315 + $0x111] sm:$0xff] %vm574, %v525
      %599 = vst.msk [vmem:[%s315 + $0x121] sm:$0xff] %vm574, %v527
      %600 = vst.msk [vmem:[%s315 + $0x129] sm:$0xff] %vm574, %v529
      %601 = vst.msk [vmem:[%s315 + $0x139] sm:$0xff] %vm574, %v531
      %602 = vst.msk [vmem:[%s315 + $0x141] sm:$0xff] %vm574, %v533
      %603 = vst.msk [vmem:[%s315 + $0x151] sm:$0xff] %vm574, %v535
      %604 = vst.msk [vmem:[%s315 + $0x159] sm:$0xff] %vm574, %v537
      %605 = vst.msk [vmem:[%s315 + $0x169] sm:$0xff] %vm574, %v539
      %606 = vst.msk [vmem:[%s315 + $0x171] sm:$0xff] %vm574, %v541
      %v607 = vld [vmem:[#allocation2] sm:$0xff]
      %v608 = vld [vmem:[#allocation2 + $0x8] sm:$0xff]
      %v609 = vld [vmem:[#allocation2 + $0x18] sm:$0xff]
      %v610 = vld [vmem:[#allocation2 + $0x20] sm:$0xff]
      %v611 = vld [vmem:[#allocation2 + $0x30] sm:$0xff]
      %v612 = vld [vmem:[#allocation2 + $0x38] sm:$0xff]
      %v613 = vld [vmem:[#allocation2 + $0x48] sm:$0xff]
      %v614 = vld [vmem:[#allocation2 + $0x50] sm:$0xff]
      %v615 = vld [vmem:[#allocation2 + $0x60] sm:$0xff]
      %v616 = vld [vmem:[#allocation2 + $0x68] sm:$0xff]
      %v617 = vld [vmem:[#allocation2 + $0x78] sm:$0xff]
      %v618 = vld [vmem:[#allocation2 + $0x80] sm:$0xff]
      %v619 = vld [vmem:[#allocation2 + $0x90] sm:$0xff]
      %v620 = vld [vmem:[#allocation2 + $0x98] sm:$0xff]
      %v621 = vld [vmem:[#allocation2 + $0xa8] sm:$0xff]
      %v622 = vld [vmem:[#allocation2 + $0xb0] sm:$0xff]
      %v623 = vld [vmem:[#allocation2 + $0xc0] sm:$0xff]
      %v624 = vld [vmem:[#allocation2 + $0xc8] sm:$0xff]
      %v625 = vld [vmem:[#allocation2 + $0xd8] sm:$0xff]
      %v626 = vld [vmem:[#allocation2 + $0xe0] sm:$0xff]
      %v627 = vld [vmem:[#allocation2 + $0xf0] sm:$0xff]
      %v628 = vld [vmem:[#allocation2 + $0xf8] sm:$0xff]
      %v629 = vld [vmem:[#allocation2 + $0x108] sm:$0xff]
      %v630 = vld [vmem:[#allocation2 + $0x110] sm:$0xff]
      %v631 = vld [vmem:[#allocation2 + $0x120] sm:$0xff]
      %v632 = vld [vmem:[#allocation2 + $0x128] sm:$0xff]
      %v633 = vld [vmem:[#allocation2 + $0x138] sm:$0xff]
      %v634 = vld [vmem:[#allocation2 + $0x140] sm:$0xff]
      %v635 = vld [vmem:[#allocation2 + $0x150] sm:$0xff]
      %v636 = vld [vmem:[#allocation2 + $0x158] sm:$0xff]
      %v637 = vld [vmem:[#allocation2 + $0x168] sm:$0xff]
      %v638 = vld [vmem:[#allocation2 + $0x170] sm:$0xff]
      %v639 = vld [vmem:[#allocation2 + $0x1] sm:$0xff]
      %v640 = vld [vmem:[#allocation2 + $0x9] sm:$0xff]
      %v641 = vld [vmem:[#allocation2 + $0x19] sm:$0xff]
      %v642 = vld [vmem:[#allocation2 + $0x21] sm:$0xff]
      %v643 = vld [vmem:[#allocation2 + $0x31] sm:$0xff]
      %v644 = vld [vmem:[#allocation2 + $0x39] sm:$0xff]
      %v645 = vld [vmem:[#allocation2 + $0x49] sm:$0xff]
      %v646 = vld [vmem:[#allocation2 + $0x51] sm:$0xff]
      %v647 = vld [vmem:[#allocation2 + $0x61] sm:$0xff]
      %v648 = vld [vmem:[#allocation2 + $0x69] sm:$0xff]
      %v649 = vld [vmem:[#allocation2 + $0x79] sm:$0xff]
      %v650 = vld [vmem:[#allocation2 + $0x81] sm:$0xff]
      %v651 = vld [vmem:[#allocation2 + $0x91] sm:$0xff]
      %v652 = vld [vmem:[#allocation2 + $0x99] sm:$0xff]
      %v653 = vld [vmem:[#allocation2 + $0xa9] sm:$0xff]
      %v654 = vld [vmem:[#allocation2 + $0xb1] sm:$0xff]
      %v655 = vld [vmem:[#allocation2 + $0xc1] sm:$0xff]
      %v656 = vld [vmem:[#allocation2 + $0xc9] sm:$0xff]
      %v657 = vld [vmem:[#allocation2 + $0xd9] sm:$0xff]
      %v658 = vld [vmem:[#allocation2 + $0xe1] sm:$0xff]
      %v659 = vld [vmem:[#allocation2 + $0xf1] sm:$0xff]
      %v660 = vld [vmem:[#allocation2 + $0xf9] sm:$0xff]
      %v661 = vld [vmem:[#allocation2 + $0x109] sm:$0xff]
      %v662 = vld [vmem:[#allocation2 + $0x111] sm:$0xff]
      %v663 = vld [vmem:[#allocation2 + $0x121] sm:$0xff]
      %v664 = vld [vmem:[#allocation2 + $0x129] sm:$0xff]
      %v665 = vld [vmem:[#allocation2 + $0x139] sm:$0xff]
      %v666 = vld [vmem:[#allocation2 + $0x141] sm:$0xff]
      %v667 = vld [vmem:[#allocation2 + $0x151] sm:$0xff]
      %v668 = vld [vmem:[#allocation2 + $0x159] sm:$0xff]
      %v669 = vld [vmem:[#allocation2 + $0x169] sm:$0xff]
      %v670 = vld [vmem:[#allocation2 + $0x171] sm:$0xff]
      %v671 = vld [vmem:[#allocation2 + $0x2] sm:$0xff]
      %v672 = vld [vmem:[#allocation2 + $0xa] sm:$0xff]
      %v673 = vld [vmem:[#allocation2 + $0x1a] sm:$0xff]
      %v674 = vld [vmem:[#allocation2 + $0x22] sm:$0xff]
      %v675 = vld [vmem:[#allocation2 + $0x32] sm:$0xff]
      %v676 = vld [vmem:[#allocation2 + $0x3a] sm:$0xff]
      %v677 = vld [vmem:[#allocation2 + $0x4a] sm:$0xff]
      %v678 = vld [vmem:[#allocation2 + $0x52] sm:$0xff]
      %v679 = vld [vmem:[#allocation2 + $0x62] sm:$0xff]
      %v680 = vld [vmem:[#allocation2 + $0x6a] sm:$0xff]
      %v681 = vld [vmem:[#allocation2 + $0x7a] sm:$0xff]
      %v682 = vld [vmem:[#allocation2 + $0x82] sm:$0xff]
      %v683 = vld [vmem:[#allocation2 + $0x92] sm:$0xff]
      %v684 = vld [vmem:[#allocation2 + $0x9a] sm:$0xff]
      %v685 = vld [vmem:[#allocation2 + $0xaa] sm:$0xff]
      %v686 = vld [vmem:[#allocation2 + $0xb2] sm:$0xff]
      %v687 = vld [vmem:[#allocation2 + $0xc2] sm:$0xff]
      %v688 = vld [vmem:[#allocation2 + $0xca] sm:$0xff]
      %v689 = vld [vmem:[#allocation2 + $0xda] sm:$0xff]
      %v690 = vld [vmem:[#allocation2 + $0xe2] sm:$0xff]
      %v691 = vld [vmem:[#allocation2 + $0xf2] sm:$0xff]
      %v692 = vld [vmem:[#allocation2 + $0xfa] sm:$0xff]
      %v693 = vld [vmem:[#allocation2 + $0x10a] sm:$0xff]
      %v694 = vld [vmem:[#allocation2 + $0x112] sm:$0xff]
      %v695 = vld [vmem:[#allocation2 + $0x122] sm:$0xff]
      %v696 = vld [vmem:[#allocation2 + $0x12a] sm:$0xff]
      %v697 = vld [vmem:[#allocation2 + $0x13a] sm:$0xff]
      %v698 = vld [vmem:[#allocation2 + $0x142] sm:$0xff]
      %v699 = vld [vmem:[#allocation2 + $0x152] sm:$0xff]
      %v700 = vld [vmem:[#allocation2 + $0x15a] sm:$0xff]
      %v701 = vld [vmem:[#allocation2 + $0x16a] sm:$0xff]
      %v702 = vld [vmem:[#allocation2 + $0x172] sm:$0xff]
      %735 = vrot.lane.b32.xlu0 %v639, 36
      %v736 = vpop.permute.xlu0 %735
      %737 = vrot.lane.b32.xlu0 %v640, 36
      %v738 = vpop.permute.xlu0 %737
      %739 = vrot.lane.b32.xlu0 %v641, 36
      %v740 = vpop.permute.xlu0 %739
      %741 = vrot.lane.b32.xlu0 %v642, 36
      %v742 = vpop.permute.xlu0 %741
      %743 = vrot.lane.b32.xlu0 %v643, 36
      %v744 = vpop.permute.xlu0 %743
      %745 = vrot.lane.b32.xlu0 %v644, 36
      %v746 = vpop.permute.xlu0 %745
      %747 = vrot.lane.b32.xlu0 %v645, 36
      %v748 = vpop.permute.xlu0 %747
      %749 = vrot.lane.b32.xlu0 %v646, 36
      %v750 = vpop.permute.xlu0 %749
      %751 = vrot.lane.b32.xlu0 %v647, 36
      %v752 = vpop.permute.xlu0 %751
      %753 = vrot.lane.b32.xlu0 %v648, 36
      %v754 = vpop.permute.xlu0 %753
      %755 = vrot.lane.b32.xlu0 %v649, 36
      %v756 = vpop.permute.xlu0 %755
      %757 = vrot.lane.b32.xlu0 %v650, 36
      %v758 = vpop.permute.xlu0 %757
      %759 = vrot.lane.b32.xlu0 %v651, 36
      %v760 = vpop.permute.xlu0 %759
      %761 = vrot.lane.b32.xlu0 %v652, 36
      %v762 = vpop.permute.xlu0 %761
      %763 = vrot.lane.b32.xlu0 %v653, 36
      %v764 = vpop.permute.xlu0 %763
      %765 = vrot.lane.b32.xlu0 %v654, 36
      %v766 = vpop.permute.xlu0 %765
      %767 = vrot.lane.b32.xlu0 %v655, 36
      %v768 = vpop.permute.xlu0 %767
      %769 = vrot.lane.b32.xlu0 %v656, 36
      %v770 = vpop.permute.xlu0 %769
      %771 = vrot.lane.b32.xlu0 %v657, 36
      %v772 = vpop.permute.xlu0 %771
      %773 = vrot.lane.b32.xlu0 %v658, 36
      %v774 = vpop.permute.xlu0 %773
      %775 = vrot.lane.b32.xlu0 %v659, 36
      %v776 = vpop.permute.xlu0 %775
      %777 = vrot.lane.b32.xlu0 %v660, 36
      %v778 = vpop.permute.xlu0 %777
      %779 = vrot.lane.b32.xlu0 %v661, 36
      %v780 = vpop.permute.xlu0 %779
      %781 = vrot.lane.b32.xlu0 %v662, 36
      %v782 = vpop.permute.xlu0 %781
      %783 = vrot.lane.b32.xlu0 %v663, 36
      %v784 = vpop.permute.xlu0 %783
      %785 = vrot.lane.b32.xlu0 %v664, 36
      %v786 = vpop.permute.xlu0 %785
      %787 = vrot.lane.b32.xlu0 %v665, 36
      %v788 = vpop.permute.xlu0 %787
      %789 = vrot.lane.b32.xlu0 %v666, 36
      %v790 = vpop.permute.xlu0 %789
      %791 = vrot.lane.b32.xlu0 %v667, 36
      %v792 = vpop.permute.xlu0 %791
      %793 = vrot.lane.b32.xlu0 %v668, 36
      %v794 = vpop.permute.xlu0 %793
      %795 = vrot.lane.b32.xlu0 %v669, 36
      %v796 = vpop.permute.xlu0 %795
      %797 = vrot.lane.b32.xlu0 %v670, 36
      %v798 = vpop.permute.xlu0 %797
      %863 = vrot.lane.b32.xlu0 %v671, 72
      %v864 = vpop.permute.xlu0 %863
      %865 = vrot.lane.b32.xlu0 %v672, 72
      %v866 = vpop.permute.xlu0 %865
      %867 = vrot.lane.b32.xlu0 %v673, 72
      %v868 = vpop.permute.xlu0 %867
      %869 = vrot.lane.b32.xlu0 %v674, 72
      %v870 = vpop.permute.xlu0 %869
      %871 = vrot.lane.b32.xlu0 %v675, 72
      %v872 = vpop.permute.xlu0 %871
      %873 = vrot.lane.b32.xlu0 %v676, 72
      %v874 = vpop.permute.xlu0 %873
      %875 = vrot.lane.b32.xlu0 %v677, 72
      %v876 = vpop.permute.xlu0 %875
      %877 = vrot.lane.b32.xlu0 %v678, 72
      %v878 = vpop.permute.xlu0 %877
      %879 = vrot.lane.b32.xlu0 %v679, 72
      %v880 = vpop.permute.xlu0 %879
      %881 = vrot.lane.b32.xlu0 %v680, 72
      %v882 = vpop.permute.xlu0 %881
      %883 = vrot.lane.b32.xlu0 %v681, 72
      %v884 = vpop.permute.xlu0 %883
      %885 = vrot.lane.b32.xlu0 %v682, 72
      %v886 = vpop.permute.xlu0 %885
      %887 = vrot.lane.b32.xlu0 %v683, 72
      %v888 = vpop.permute.xlu0 %887
      %889 = vrot.lane.b32.xlu0 %v684, 72
      %v890 = vpop.permute.xlu0 %889
      %891 = vrot.lane.b32.xlu0 %v685, 72
      %v892 = vpop.permute.xlu0 %891
      %893 = vrot.lane.b32.xlu0 %v686, 72
      %v894 = vpop.permute.xlu0 %893
      %895 = vrot.lane.b32.xlu0 %v687, 72
      %v896 = vpop.permute.xlu0 %895
      %897 = vrot.lane.b32.xlu0 %v688, 72
      %v898 = vpop.permute.xlu0 %897
      %899 = vrot.lane.b32.xlu0 %v689, 72
      %v900 = vpop.permute.xlu0 %899
      %901 = vrot.lane.b32.xlu0 %v690, 72
      %v902 = vpop.permute.xlu0 %901
      %903 = vrot.lane.b32.xlu0 %v691, 72
      %v904 = vpop.permute.xlu0 %903
      %905 = vrot.lane.b32.xlu0 %v692, 72
      %v906 = vpop.permute.xlu0 %905
      %907 = vrot.lane.b32.xlu0 %v693, 72
      %v908 = vpop.permute.xlu0 %907
      %909 = vrot.lane.b32.xlu0 %v694, 72
      %v910 = vpop.permute.xlu0 %909
      %911 = vrot.lane.b32.xlu0 %v695, 72
      %v912 = vpop.permute.xlu0 %911
      %913 = vrot.lane.b32.xlu0 %v696, 72
      %v914 = vpop.permute.xlu0 %913
      %915 = vrot.lane.b32.xlu0 %v697, 72
      %v916 = vpop.permute.xlu0 %915
      %917 = vrot.lane.b32.xlu0 %v698, 72
      %v918 = vpop.permute.xlu0 %917
      %919 = vrot.lane.b32.xlu0 %v699, 72
      %v920 = vpop.permute.xlu0 %919
      %921 = vrot.lane.b32.xlu0 %v700, 72
      %v922 = vpop.permute.xlu0 %921
      %923 = vrot.lane.b32.xlu0 %v701, 72
      %v924 = vpop.permute.xlu0 %923
      %925 = vrot.lane.b32.xlu0 %v702, 72
      %v926 = vpop.permute.xlu0 %925
      %v959 = vsel %vm306, %v607, %v736
      %v960 = vsel %vm306, %v608, %v738
      %v961 = vsel %vm306, %v609, %v740
      %v962 = vsel %vm306, %v610, %v742
      %v963 = vsel %vm306, %v611, %v744
      %v964 = vsel %vm306, %v612, %v746
      %v965 = vsel %vm306, %v613, %v748
      %v966 = vsel %vm306, %v614, %v750
      %v967 = vsel %vm306, %v615, %v752
      %v968 = vsel %vm306, %v616, %v754
      %v969 = vsel %vm306, %v617, %v756
      %v970 = vsel %vm306, %v618, %v758
      %v971 = vsel %vm306, %v619, %v760
      %v972 = vsel %vm306, %v620, %v762
      %v973 = vsel %vm306, %v621, %v764
      %v974 = vsel %vm306, %v622, %v766
      %v975 = vsel %vm306, %v623, %v768
      %v976 = vsel %vm306, %v624, %v770
      %v977 = vsel %vm306, %v625, %v772
      %v978 = vsel %vm306, %v626, %v774
      %v979 = vsel %vm306, %v627, %v776
      %v980 = vsel %vm306, %v628, %v778
      %v981 = vsel %vm306, %v629, %v780
      %v982 = vsel %vm306, %v630, %v782
      %v983 = vsel %vm306, %v631, %v784
      %v984 = vsel %vm306, %v632, %v786
      %v985 = vsel %vm306, %v633, %v788
      %v986 = vsel %vm306, %v634, %v790
      %v987 = vsel %vm306, %v635, %v792
      %v988 = vsel %vm306, %v636, %v794
      %v989 = vsel %vm306, %v637, %v796
      %v990 = vsel %vm306, %v638, %v798
      %vm991 = vcmask 588800
      %v992 = vsel %vm991, %v959, %v864
      %v993 = vsel %vm991, %v960, %v866
      %v994 = vsel %vm991, %v961, %v868
      %v995 = vsel %vm991, %v962, %v870
      %v996 = vsel %vm991, %v963, %v872
      %v997 = vsel %vm991, %v964, %v874
      %v998 = vsel %vm991, %v965, %v876
      %v999 = vsel %vm991, %v966, %v878
      %v1000 = vsel %vm991, %v967, %v880
      %v1001 = vsel %vm991, %v968, %v882
      %v1002 = vsel %vm991, %v969, %v884
      %v1003 = vsel %vm991, %v970, %v886
      %v1004 = vsel %vm991, %v971, %v888
      %v1005 = vsel %vm991, %v972, %v890
      %v1006 = vsel %vm991, %v973, %v892
      %v1007 = vsel %vm991, %v974, %v894
      %v1008 = vsel %vm991, %v975, %v896
      %v1009 = vsel %vm991, %v976, %v898
      %v1010 = vsel %vm991, %v977, %v900
      %v1011 = vsel %vm991, %v978, %v902
      %v1012 = vsel %vm991, %v979, %v904
      %v1013 = vsel %vm991, %v980, %v906
      %v1014 = vsel %vm991, %v981, %v908
      %v1015 = vsel %vm991, %v982, %v910
      %v1016 = vsel %vm991, %v983, %v912
      %v1017 = vsel %vm991, %v984, %v914
      %v1018 = vsel %vm991, %v985, %v916
      %v1019 = vsel %vm991, %v986, %v918
      %v1020 = vsel %vm991, %v987, %v920
      %v1021 = vsel %vm991, %v988, %v922
      %v1022 = vsel %vm991, %v989, %v924
      %v1023 = vsel %vm991, %v990, %v926
      %v1024 = vpack.c.bf16 %v993, %v992
      %v1025 = vpack.c.bf16 %v995, %v994
      %v1026 = vpack.c.bf16 %v997, %v996
      %v1027 = vpack.c.bf16 %v999, %v998
      %v1028 = vpack.c.bf16 %v1001, %v1000
      %v1029 = vpack.c.bf16 %v1003, %v1002
      %v1030 = vpack.c.bf16 %v1005, %v1004
      %v1031 = vpack.c.bf16 %v1007, %v1006
      %v1032 = vpack.c.bf16 %v1009, %v1008
      %v1033 = vpack.c.bf16 %v1011, %v1010
      %v1034 = vpack.c.bf16 %v1013, %v1012
      %v1035 = vpack.c.bf16 %v1015, %v1014
      %v1036 = vpack.c.bf16 %v1017, %v1016
      %v1037 = vpack.c.bf16 %v1019, %v1018
      %v1038 = vpack.c.bf16 %v1021, %v1020
      %v1039 = vpack.c.bf16 %v1023, %v1022
      %v1040 = vld [vmem:[%s3] sm:$0xf]
      %v1041 = vld [vmem:[%s3 + $0x4] sm:$0xf]
      %v1042 = vld [vmem:[%s3 + $0x8] sm:$0xf]
      %v1043 = vld [vmem:[%s3 + $0xc] sm:$0xf]
      %v1044 = vld [vmem:[%s3 + $0x10] sm:$0xf]
      %v1045 = vld [vmem:[%s3 + $0x14] sm:$0xf]
      %v1046 = vld [vmem:[%s3 + $0x18] sm:$0xf]
      %v1047 = vld [vmem:[%s3 + $0x1c] sm:$0xf]
      %v1048 = vld [vmem:[%s3 + $0x20] sm:$0xf]
      %v1049 = vld [vmem:[%s3 + $0x24] sm:$0xf]
      %v1050 = vld [vmem:[%s3 + $0x28] sm:$0xf]
      %v1051 = vld [vmem:[%s3 + $0x2c] sm:$0xf]
      %v1052 = vld [vmem:[%s3 + $0x30] sm:$0xf]
      %v1053 = vld [vmem:[%s3 + $0x34] sm:$0x3]
      %v1054 = vld [vmem:[%s315] sm:$0xff]
      %v1055 = vld [vmem:[%s315 + $0x8] sm:$0xff]
      %v1056 = vld [vmem:[%s315 + $0x18] sm:$0xff]
      %v1057 = vld [vmem:[%s315 + $0x20] sm:$0xff]
      %v1058 = vld [vmem:[%s315 + $0x30] sm:$0xff]
      %v1059 = vld [vmem:[%s315 + $0x38] sm:$0xff]
      %v1060 = vld [vmem:[%s315 + $0x48] sm:$0xff]
      %v1061 = vld [vmem:[%s315 + $0x50] sm:$0xff]
      %v1062 = vld [vmem:[%s315 + $0x60] sm:$0xff]
      %v1063 = vld [vmem:[%s315 + $0x68] sm:$0xff]
      %v1064 = vld [vmem:[%s315 + $0x78] sm:$0xff]
      %v1065 = vld [vmem:[%s315 + $0x80] sm:$0xff]
      %v1066 = vld [vmem:[%s315 + $0x90] sm:$0xff]
      %v1067 = vld [vmem:[%s315 + $0x98] sm:$0xff]
      %v1068 = vld [vmem:[%s315 + $0xa8] sm:$0xff]
      %v1069 = vld [vmem:[%s315 + $0xb0] sm:$0xff]
      %v1070 = vld [vmem:[%s315 + $0xc0] sm:$0xff]
      %v1071 = vld [vmem:[%s315 + $0xc8] sm:$0xff]
      %v1072 = vld [vmem:[%s315 + $0xd8] sm:$0xff]
      %v1073 = vld [vmem:[%s315 + $0xe0] sm:$0xff]
      %v1074 = vld [vmem:[%s315 + $0xf0] sm:$0xff]
      %v1075 = vld [vmem:[%s315 + $0xf8] sm:$0xff]
      %v1076 = vld [vmem:[%s315 + $0x108] sm:$0xff]
      %v1077 = vld [vmem:[%s315 + $0x110] sm:$0xff]
      %v1078 = vld [vmem:[%s315 + $0x120] sm:$0xff]
      %v1079 = vld [vmem:[%s315 + $0x128] sm:$0xff]
      %v1080 = vld [vmem:[%s315 + $0x138] sm:$0xff]
      %v1081 = vld [vmem:[%s315 + $0x140] sm:$0xff]
      %v1082 = vld [vmem:[%s315 + $0x150] sm:$0xff]
      %v1083 = vld [vmem:[%s315 + $0x158] sm:$0xff]
      %v1084 = vld [vmem:[%s315 + $0x168] sm:$0xff]
      %v1085 = vld [vmem:[%s315 + $0x170] sm:$0xff]
      %v1086 = vld [vmem:[%s315 + $0x1] sm:$0xff]
      %v1087 = vld [vmem:[%s315 + $0x9] sm:$0xff]
      %v1088 = vld [vmem:[%s315 + $0x19] sm:$0xff]
      %v1089 = vld [vmem:[%s315 + $0x21] sm:$0xff]
      %v1090 = vld [vmem:[%s315 + $0x31] sm:$0xff]
      %v1091 = vld [vmem:[%s315 + $0x39] sm:$0xff]
      %v1092 = vld [vmem:[%s315 + $0x49] sm:$0xff]
      %v1093 = vld [vmem:[%s315 + $0x51] sm:$0xff]
      %v1094 = vld [vmem:[%s315 + $0x61] sm:$0xff]
      %v1095 = vld [vmem:[%s315 + $0x69] sm:$0xff]
      %v1096 = vld [vmem:[%s315 + $0x79] sm:$0xff]
      %v1097 = vld [vmem:[%s315 + $0x81] sm:$0xff]
      %v1098 = vld [vmem:[%s315 + $0x91] sm:$0xff]
      %v1099 = vld [vmem:[%s315 + $0x99] sm:$0xff]
      %v1100 = vld [vmem:[%s315 + $0xa9] sm:$0xff]
      %v1101 = vld [vmem:[%s315 + $0xb1] sm:$0xff]
      %v1102 = vld [vmem:[%s315 + $0xc1] sm:$0xff]
      %v1103 = vld [vmem:[%s315 + $0xc9] sm:$0xff]
      %v1104 = vld [vmem:[%s315 + $0xd9] sm:$0xff]
      %v1105 = vld [vmem:[%s315 + $0xe1] sm:$0xff]
      %v1106 = vld [vmem:[%s315 + $0xf1] sm:$0xff]
      %v1107 = vld [vmem:[%s315 + $0xf9] sm:$0xff]
      %v1108 = vld [vmem:[%s315 + $0x109] sm:$0xff]
      %v1109 = vld [vmem:[%s315 + $0x111] sm:$0xff]
      %v1110 = vld [vmem:[%s315 + $0x121] sm:$0xff]
      %v1111 = vld [vmem:[%s315 + $0x129] sm:$0xff]
      %v1112 = vld [vmem:[%s315 + $0x139] sm:$0xff]
      %v1113 = vld [vmem:[%s315 + $0x141] sm:$0xff]
      %v1114 = vld [vmem:[%s315 + $0x151] sm:$0xff]
      %v1115 = vld [vmem:[%s315 + $0x159] sm:$0xff]
      %v1116 = vld [vmem:[%s315 + $0x169] sm:$0xff]
      %v1117 = vld [vmem:[%s315 + $0x171] sm:$0xff]
      %v1118 = vld [vmem:[%s315 + $0x2] sm:$0xff]
      %v1119 = vld [vmem:[%s315 + $0xa] sm:$0xff]
      %v1120 = vld [vmem:[%s315 + $0x1a] sm:$0xff]
      %v1121 = vld [vmem:[%s315 + $0x22] sm:$0xff]
      %v1122 = vld [vmem:[%s315 + $0x32] sm:$0xff]
      %v1123 = vld [vmem:[%s315 + $0x3a] sm:$0xff]
      %v1124 = vld [vmem:[%s315 + $0x4a] sm:$0xff]
      %v1125 = vld [vmem:[%s315 + $0x52] sm:$0xff]
      %v1126 = vld [vmem:[%s315 + $0x62] sm:$0xff]
      %v1127 = vld [vmem:[%s315 + $0x6a] sm:$0xff]
      %v1128 = vld [vmem:[%s315 + $0x7a] sm:$0xff]
      %v1129 = vld [vmem:[%s315 + $0x82] sm:$0xff]
      %v1130 = vld [vmem:[%s315 + $0x92] sm:$0xff]
      %v1131 = vld [vmem:[%s315 + $0x9a] sm:$0xff]
      %v1132 = vld [vmem:[%s315 + $0xaa] sm:$0xff]
      %v1133 = vld [vmem:[%s315 + $0xb2] sm:$0xff]
      %v1134 = vld [vmem:[%s315 + $0xc2] sm:$0xff]
      %v1135 = vld [vmem:[%s315 + $0xca] sm:$0xff]
      %v1136 = vld [vmem:[%s315 + $0xda] sm:$0xff]
      %v1137 = vld [vmem:[%s315 + $0xe2] sm:$0xff]
      %v1138 = vld [vmem:[%s315 + $0xf2] sm:$0xff]
      %v1139 = vld [vmem:[%s315 + $0xfa] sm:$0xff]
      %v1140 = vld [vmem:[%s315 + $0x10a] sm:$0xff]
      %v1141 = vld [vmem:[%s315 + $0x112] sm:$0xff]
      %v1142 = vld [vmem:[%s315 + $0x122] sm:$0xff]
      %v1143 = vld [vmem:[%s315 + $0x12a] sm:$0xff]
      %v1144 = vld [vmem:[%s315 + $0x13a] sm:$0xff]
      %v1145 = vld [vmem:[%s315 + $0x142] sm:$0xff]
      %v1146 = vld [vmem:[%s315 + $0x152] sm:$0xff]
      %v1147 = vld [vmem:[%s315 + $0x15a] sm:$0xff]
      %v1148 = vld [vmem:[%s315 + $0x16a] sm:$0xff]
      %v1149 = vld [vmem:[%s315 + $0x172] sm:$0xff]
      %1182 = vrot.lane.b32.xlu0 %v1086, 36
      %v1183 = vpop.permute.xlu0 %1182
      %1184 = vrot.lane.b32.xlu0 %v1087, 36
      %v1185 = vpop.permute.xlu0 %1184
      %1186 = vrot.lane.b32.xlu0 %v1088, 36
      %v1187 = vpop.permute.xlu0 %1186
      %1188 = vrot.lane.b32.xlu0 %v1089, 36
      %v1189 = vpop.permute.xlu0 %1188
      %1190 = vrot.lane.b32.xlu0 %v1090, 36
      %v1191 = vpop.permute.xlu0 %1190
      %1192 = vrot.lane.b32.xlu0 %v1091, 36
      %v1193 = vpop.permute.xlu0 %1192
      %1194 = vrot.lane.b32.xlu0 %v1092, 36
      %v1195 = vpop.permute.xlu0 %1194
      %1196 = vrot.lane.b32.xlu0 %v1093, 36
      %v1197 = vpop.permute.xlu0 %1196
      %1198 = vrot.lane.b32.xlu0 %v1094, 36
      %v1199 = vpop.permute.xlu0 %1198
      %1200 = vrot.lane.b32.xlu0 %v1095, 36
      %v1201 = vpop.permute.xlu0 %1200
      %1202 = vrot.lane.b32.xlu0 %v1096, 36
      %v1203 = vpop.permute.xlu0 %1202
      %1204 = vrot.lane.b32.xlu0 %v1097, 36
      %v1205 = vpop.permute.xlu0 %1204
      %1206 = vrot.lane.b32.xlu0 %v1098, 36
      %v1207 = vpop.permute.xlu0 %1206
      %1208 = vrot.lane.b32.xlu0 %v1099, 36
      %v1209 = vpop.permute.xlu0 %1208
      %1210 = vrot.lane.b32.xlu0 %v1100, 36
      %v1211 = vpop.permute.xlu0 %1210
      %1212 = vrot.lane.b32.xlu0 %v1101, 36
      %v1213 = vpop.permute.xlu0 %1212
      %1214 = vrot.lane.b32.xlu0 %v1102, 36
      %v1215 = vpop.permute.xlu0 %1214
      %1216 = vrot.lane.b32.xlu0 %v1103, 36
      %v1217 = vpop.permute.xlu0 %1216
      %1218 = vrot.lane.b32.xlu0 %v1104, 36
      %v1219 = vpop.permute.xlu0 %1218
      %1220 = vrot.lane.b32.xlu0 %v1105, 36
      %v1221 = vpop.permute.xlu0 %1220
      %1222 = vrot.lane.b32.xlu0 %v1106, 36
      %v1223 = vpop.permute.xlu0 %1222
      %1224 = vrot.lane.b32.xlu0 %v1107, 36
      %v1225 = vpop.permute.xlu0 %1224
      %1226 = vrot.lane.b32.xlu0 %v1108, 36
      %v1227 = vpop.permute.xlu0 %1226
      %1228 = vrot.lane.b32.xlu0 %v1109, 36
      %v1229 = vpop.permute.xlu0 %1228
      %1230 = vrot.lane.b32.xlu0 %v1110, 36
      %v1231 = vpop.permute.xlu0 %1230
      %1232 = vrot.lane.b32.xlu0 %v1111, 36
      %v1233 = vpop.permute.xlu0 %1232
      %1234 = vrot.lane.b32.xlu0 %v1112, 36
      %v1235 = vpop.permute.xlu0 %1234
      %1236 = vrot.lane.b32.xlu0 %v1113, 36
      %v1237 = vpop.permute.xlu0 %1236
      %1238 = vrot.lane.b32.xlu0 %v1114, 36
      %v1239 = vpop.permute.xlu0 %1238
      %1240 = vrot.lane.b32.xlu0 %v1115, 36
      %v1241 = vpop.permute.xlu0 %1240
      %1242 = vrot.lane.b32.xlu0 %v1116, 36
      %v1243 = vpop.permute.xlu0 %1242
      %1244 = vrot.lane.b32.xlu0 %v1117, 36
      %v1245 = vpop.permute.xlu0 %1244
      %1310 = vrot.lane.b32.xlu0 %v1118, 72
      %v1311 = vpop.permute.xlu0 %1310
      %1312 = vrot.lane.b32.xlu0 %v1119, 72
      %v1313 = vpop.permute.xlu0 %1312
      %1314 = vrot.lane.b32.xlu0 %v1120, 72
      %v1315 = vpop.permute.xlu0 %1314
      %1316 = vrot.lane.b32.xlu0 %v1121, 72
      %v1317 = vpop.permute.xlu0 %1316
      %1318 = vrot.lane.b32.xlu0 %v1122, 72
      %v1319 = vpop.permute.xlu0 %1318
      %1320 = vrot.lane.b32.xlu0 %v1123, 72
      %v1321 = vpop.permute.xlu0 %1320
      %1322 = vrot.lane.b32.xlu0 %v1124, 72
      %v1323 = vpop.permute.xlu0 %1322
      %1324 = vrot.lane.b32.xlu0 %v1125, 72
      %v1325 = vpop.permute.xlu0 %1324
      %1326 = vrot.lane.b32.xlu0 %v1126, 72
      %v1327 = vpop.permute.xlu0 %1326
      %1328 = vrot.lane.b32.xlu0 %v1127, 72
      %v1329 = vpop.permute.xlu0 %1328
      %1330 = vrot.lane.b32.xlu0 %v1128, 72
      %v1331 = vpop.permute.xlu0 %1330
      %1332 = vrot.lane.b32.xlu0 %v1129, 72
      %v1333 = vpop.permute.xlu0 %1332
      %1334 = vrot.lane.b32.xlu0 %v1130, 72
      %v1335 = vpop.permute.xlu0 %1334
      %1336 = vrot.lane.b32.xlu0 %v1131, 72
      %v1337 = vpop.permute.xlu0 %1336
      %1338 = vrot.lane.b32.xlu0 %v1132, 72
      %v1339 = vpop.permute.xlu0 %1338
      %1340 = vrot.lane.b32.xlu0 %v1133, 72
      %v1341 = vpop.permute.xlu0 %1340
      %1342 = vrot.lane.b32.xlu0 %v1134, 72
      %v1343 = vpop.permute.xlu0 %1342
      %1344 = vrot.lane.b32.xlu0 %v1135, 72
      %v1345 = vpop.permute.xlu0 %1344
      %1346 = vrot.lane.b32.xlu0 %v1136, 72
      %v1347 = vpop.permute.xlu0 %1346
      %1348 = vrot.lane.b32.xlu0 %v1137, 72
      %v1349 = vpop.permute.xlu0 %1348
      %1350 = vrot.lane.b32.xlu0 %v1138, 72
      %v1351 = vpop.permute.xlu0 %1350
      %1352 = vrot.lane.b32.xlu0 %v1139, 72
      %v1353 = vpop.permute.xlu0 %1352
      %1354 = vrot.lane.b32.xlu0 %v1140, 72
      %v1355 = vpop.permute.xlu0 %1354
      %1356 = vrot.lane.b32.xlu0 %v1141, 72
      %v1357 = vpop.permute.xlu0 %1356
      %1358 = vrot.lane.b32.xlu0 %v1142, 72
      %v1359 = vpop.permute.xlu0 %1358
      %1360 = vrot.lane.b32.xlu0 %v1143, 72
      %v1361 = vpop.permute.xlu0 %1360
      %1362 = vrot.lane.b32.xlu0 %v1144, 72
      %v1363 = vpop.permute.xlu0 %1362
      %1364 = vrot.lane.b32.xlu0 %v1145, 72
      %v1365 = vpop.permute.xlu0 %1364
      %1366 = vrot.lane.b32.xlu0 %v1146, 72
      %v1367 = vpop.permute.xlu0 %1366
      %1368 = vrot.lane.b32.xlu0 %v1147, 72
      %v1369 = vpop.permute.xlu0 %1368
      %1370 = vrot.lane.b32.xlu0 %v1148, 72
      %v1371 = vpop.permute.xlu0 %1370
      %1372 = vrot.lane.b32.xlu0 %v1149, 72
      %v1373 = vpop.permute.xlu0 %1372
      %v1406 = vsel %vm306, %v1054, %v1183
      %v1407 = vsel %vm306, %v1055, %v1185
      %v1408 = vsel %vm306, %v1056, %v1187
      %v1409 = vsel %vm306, %v1057, %v1189
      %v1410 = vsel %vm306, %v1058, %v1191
      %v1411 = vsel %vm306, %v1059, %v1193
      %v1412 = vsel %vm306, %v1060, %v1195
      %v1413 = vsel %vm306, %v1061, %v1197
      %v1414 = vsel %vm306, %v1062, %v1199
      %v1415 = vsel %vm306, %v1063, %v1201
      %v1416 = vsel %vm306, %v1064, %v1203
      %v1417 = vsel %vm306, %v1065, %v1205
      %v1418 = vsel %vm306, %v1066, %v1207
      %v1419 = vsel %vm306, %v1067, %v1209
      %v1420 = vsel %vm306, %v1068, %v1211
      %v1421 = vsel %vm306, %v1069, %v1213
      %v1422 = vsel %vm306, %v1070, %v1215
      %v1423 = vsel %vm306, %v1071, %v1217
      %v1424 = vsel %vm306, %v1072, %v1219
      %v1425 = vsel %vm306, %v1073, %v1221
      %v1426 = vsel %vm306, %v1074, %v1223
      %v1427 = vsel %vm306, %v1075, %v1225
      %v1428 = vsel %vm306, %v1076, %v1227
      %v1429 = vsel %vm306, %v1077, %v1229
      %v1430 = vsel %vm306, %v1078, %v1231
      %v1431 = vsel %vm306, %v1079, %v1233
      %v1432 = vsel %vm306, %v1080, %v1235
      %v1433 = vsel %vm306, %v1081, %v1237
      %v1434 = vsel %vm306, %v1082, %v1239
      %v1435 = vsel %vm306, %v1083, %v1241
      %v1436 = vsel %vm306, %v1084, %v1243
      %v1437 = vsel %vm306, %v1085, %v1245
      %v1438 = vsel %vm991, %v1406, %v1311
      %v1439 = vsel %vm991, %v1407, %v1313
      %v1440 = vsel %vm991, %v1408, %v1315
      %v1441 = vsel %vm991, %v1409, %v1317
      %v1442 = vsel %vm991, %v1410, %v1319
      %v1443 = vsel %vm991, %v1411, %v1321
      %v1444 = vsel %vm991, %v1412, %v1323
      %v1445 = vsel %vm991, %v1413, %v1325
      %v1446 = vsel %vm991, %v1414, %v1327
      %v1447 = vsel %vm991, %v1415, %v1329
      %v1448 = vsel %vm991, %v1416, %v1331
      %v1449 = vsel %vm991, %v1417, %v1333
      %v1450 = vsel %vm991, %v1418, %v1335
      %v1451 = vsel %vm991, %v1419, %v1337
      %v1452 = vsel %vm991, %v1420, %v1339
      %v1453 = vsel %vm991, %v1421, %v1341
      %v1454 = vsel %vm991, %v1422, %v1343
      %v1455 = vsel %vm991, %v1423, %v1345
      %v1456 = vsel %vm991, %v1424, %v1347
      %v1457 = vsel %vm991, %v1425, %v1349
      %v1458 = vsel %vm991, %v1426, %v1351
      %v1459 = vsel %vm991, %v1427, %v1353
      %v1460 = vsel %vm991, %v1428, %v1355
      %v1461 = vsel %vm991, %v1429, %v1357
      %v1462 = vsel %vm991, %v1430, %v1359
      %v1463 = vsel %vm991, %v1431, %v1361
      %v1464 = vsel %vm991, %v1432, %v1363
      %v1465 = vsel %vm991, %v1433, %v1365
      %v1466 = vsel %vm991, %v1434, %v1367
      %v1467 = vsel %vm991, %v1435, %v1369
      %v1468 = vsel %vm991, %v1436, %v1371
      %v1469 = vsel %vm991, %v1437, %v1373
      %v1470 = vpack.c.bf16 %v1439, %v1438
      %v1471 = vpack.c.bf16 %v1441, %v1440
      %v1472 = vpack.c.bf16 %v1443, %v1442
      %v1473 = vpack.c.bf16 %v1445, %v1444
      %v1474 = vpack.c.bf16 %v1447, %v1446
      %v1475 = vpack.c.bf16 %v1449, %v1448
      %v1476 = vpack.c.bf16 %v1451, %v1450
      %v1477 = vpack.c.bf16 %v1453, %v1452
      %v1478 = vpack.c.bf16 %v1455, %v1454
      %v1479 = vpack.c.bf16 %v1457, %v1456
      %v1480 = vpack.c.bf16 %v1459, %v1458
      %v1481 = vpack.c.bf16 %v1461, %v1460
      %v1482 = vpack.c.bf16 %v1463, %v1462
      %v1483 = vpack.c.bf16 %v1465, %v1464
      %v1484 = vpack.c.bf16 %v1467, %v1466
      %v1485 = vpack.c.bf16 %v1469, %v1468
      %v1486 = vld [vmem:[%s3 + $0x34] sm:$0xc]
      %v1487 = vld [vmem:[%s3 + $0x38] sm:$0xf]
      %v1488 = vld [vmem:[%s3 + $0x3c] sm:$0xf]
      %v1489 = vld [vmem:[%s3 + $0x40] sm:$0xf]
      %v1490 = vld [vmem:[%s3 + $0x44] sm:$0xf]
      %v1491 = vld [vmem:[%s3 + $0x48] sm:$0xf]
      %v1492 = vld [vmem:[%s3 + $0x4c] sm:$0xf]
      %v1493 = vld [vmem:[%s3 + $0x50] sm:$0xf]
      %v1494 = vld [vmem:[%s3 + $0x54] sm:$0xf]
      %v1495 = vld [vmem:[%s3 + $0x58] sm:$0xf]
      %v1496 = vld [vmem:[%s3 + $0x5c] sm:$0xf]
      %v1497 = vld [vmem:[%s3 + $0x60] sm:$0xf]
      %v1498 = vld [vmem:[%s3 + $0x64] sm:$0xf]
      %v1499 = vld [vmem:[%s3 + $0x68] sm:$0xf]
      %v1514 = vunpack.c.l.b16 %v1486
      %v1515 = vunpack.c.l.b16 %v1487
      %v1516 = vunpack.c.l.b16 %v1488
      %v1517 = vunpack.c.l.b16 %v1489
      %v1518 = vunpack.c.l.b16 %v1490
      %v1519 = vunpack.c.l.b16 %v1491
      %v1520 = vunpack.c.l.b16 %v1492
      %v1521 = vunpack.c.l.b16 %v1493
      %v1522 = vunpack.c.l.b16 %v1494
      %v1523 = vunpack.c.l.b16 %v1495
      %v1524 = vunpack.c.l.b16 %v1496
      %v1525 = vunpack.c.l.b16 %v1497
      %v1526 = vunpack.c.l.b16 %v1498
      %v1527 = vunpack.c.l.b16 %v1499
      %v1528 = vpack.c.b16 %v1515, %v1514
      %v1529 = vpack.c.b16 %v1517, %v1516
      %v1530 = vpack.c.b16 %v1519, %v1518
      %v1531 = vpack.c.b16 %v1521, %v1520
      %v1532 = vpack.c.b16 %v1523, %v1522
      %v1533 = vpack.c.b16 %v1525, %v1524
      %v1534 = vpack.c.b16 %v1527, %v1526
      %vm1535 = vcmask 1045504
      %v1536 = vrot.slane %v1528, 2
      %v1537 = vrot.slane %v1529, 2
      %v1538 = vsel %vm1535, %v1536, %v1537
      %v1539 = vrot.slane %v1530, 2
      %v1540 = vsel %vm1535, %v1537, %v1539
      %v1541 = vrot.slane %v1531, 2
      %v1542 = vsel %vm1535, %v1539, %v1541
      %v1543 = vrot.slane %v1532, 2
      %v1544 = vsel %vm1535, %v1541, %v1543
      %v1545 = vrot.slane %v1533, 2
      %v1546 = vsel %vm1535, %v1543, %v1545
      %v1547 = vrot.slane %v1534, 2
      %v1548 = vsel %vm1535, %v1545, %v1547
      %vm1555 = vcmask 883712
      %v1557 = vsel %vm1555, %v1470, 0
      %v1560 = vsel %vm1555, %v1471, 0
      %v1563 = vsel %vm1555, %v1472, 0
      %v1566 = vsel %vm1555, %v1473, 0
      %v1569 = vsel %vm1555, %v1474, 0
      %v1572 = vsel %vm1555, %v1475, 0
      %v1575 = vsel %vm1555, %v1476, 0
      %v1578 = vsel %vm1555, %v1477, 0
      %v1581 = vsel %vm1555, %v1478, 0
      %v1584 = vsel %vm1555, %v1479, 0
      %v1587 = vsel %vm1555, %v1480, 0
      %v1590 = vsel %vm1555, %v1481, 0
      %v1593 = vsel %vm1555, %v1482, 0
      %v1596 = vsel %vm1555, %v1483, 0
      %v1599 = vsel %vm1555, %v1484, 0
      %v1602 = vsel %vm1555, %v1485, 0
      %vm1604 = vcmask 1045504
      %v1606 = vsel %vm1604, %v1547, 0
      %1608 = vmatpush.bf16.msra.mxu0 0
      %1609 = vmatpush.bf16.msra.mxu0 %v1606
      %1610 = vmatpush.bf16.msra.mxu0 %v1548
      %1611 = vmatpush.bf16.msra.mxu0 %v1546
      %1612 = vmatpush.bf16.msra.mxu0 %v1544
      %1613 = vmatpush.bf16.msra.mxu0 %v1542
      %1614 = vmatpush.bf16.msra.mxu0 %v1540
      %1615 = vmatpush.bf16.msra.mxu0 %v1538
      %1616 = vmatmul.bf16.gmra.mxu0 %v1557
      %v1617 = vpop.f32.mrf.mxu0
      %v1618 = vadd.f32 0.0, %v1617
      %v1619 = vpop.f32.mrf.mxu0
      %v1620 = vadd.f32 0.0, %v1619
      %1621 = vmatmul.bf16.gmra.mxu0 %v1560
      %v1622 = vpop.f32.mrf.mxu0
      %v1623 = vadd.f32 0.0, %v1622
      %v1624 = vpop.f32.mrf.mxu0
      %v1625 = vadd.f32 0.0, %v1624
      %1626 = vmatmul.bf16.gmra.mxu0 %v1563
      %v1627 = vpop.f32.mrf.mxu0
      %v1628 = vadd.f32 0.0, %v1627
      %v1629 = vpop.f32.mrf.mxu0
      %v1630 = vadd.f32 0.0, %v1629
      %1631 = vmatmul.bf16.gmra.mxu0 %v1566
      %v1632 = vpop.f32.mrf.mxu0
      %v1633 = vadd.f32 0.0, %v1632
      %v1634 = vpop.f32.mrf.mxu0
      %v1635 = vadd.f32 0.0, %v1634
      %1636 = vmatmul.bf16.gmra.mxu0 %v1569
      %v1637 = vpop.f32.mrf.mxu0
      %v1638 = vadd.f32 0.0, %v1637
      %v1639 = vpop.f32.mrf.mxu0
      %v1640 = vadd.f32 0.0, %v1639
      %1641 = vmatmul.bf16.gmra.mxu0 %v1572
      %v1642 = vpop.f32.mrf.mxu0
      %v1643 = vadd.f32 0.0, %v1642
      %v1644 = vpop.f32.mrf.mxu0
      %v1645 = vadd.f32 0.0, %v1644
      %1646 = vmatmul.bf16.gmra.mxu0 %v1575
      %v1647 = vpop.f32.mrf.mxu0
      %v1648 = vadd.f32 0.0, %v1647
      %v1649 = vpop.f32.mrf.mxu0
      %v1650 = vadd.f32 0.0, %v1649
      %1651 = vmatmul.bf16.gmra.mxu0 %v1578
      %v1652 = vpop.f32.mrf.mxu0
      %v1653 = vadd.f32 0.0, %v1652
      %v1654 = vpop.f32.mrf.mxu0
      %v1655 = vadd.f32 0.0, %v1654
      %1656 = vmatmul.bf16.gmra.mxu0 %v1581
      %v1657 = vpop.f32.mrf.mxu0
      %v1658 = vadd.f32 0.0, %v1657
      %v1659 = vpop.f32.mrf.mxu0
      %v1660 = vadd.f32 0.0, %v1659
      %1661 = vmatmul.bf16.gmra.mxu0 %v1584
      %v1662 = vpop.f32.mrf.mxu0
      %v1663 = vadd.f32 0.0, %v1662
      %v1664 = vpop.f32.mrf.mxu0
      %v1665 = vadd.f32 0.0, %v1664
      %1666 = vmatmul.bf16.gmra.mxu0 %v1587
      %v1667 = vpop.f32.mrf.mxu0
      %v1668 = vadd.f32 0.0, %v1667
      %v1669 = vpop.f32.mrf.mxu0
      %v1670 = vadd.f32 0.0, %v1669
      %1671 = vmatmul.bf16.gmra.mxu0 %v1590
      %v1672 = vpop.f32.mrf.mxu0
      %v1673 = vadd.f32 0.0, %v1672
      %v1674 = vpop.f32.mrf.mxu0
      %v1675 = vadd.f32 0.0, %v1674
      %1676 = vmatmul.bf16.gmra.mxu0 %v1593
      %v1677 = vpop.f32.mrf.mxu0
      %v1678 = vadd.f32 0.0, %v1677
      %v1679 = vpop.f32.mrf.mxu0
      %v1680 = vadd.f32 0.0, %v1679
      %1681 = vmatmul.bf16.gmra.mxu0 %v1596
      %v1682 = vpop.f32.mrf.mxu0
      %v1683 = vadd.f32 0.0, %v1682
      %v1684 = vpop.f32.mrf.mxu0
      %v1685 = vadd.f32 0.0, %v1684
      %1686 = vmatmul.bf16.gmra.mxu0 %v1599
      %v1687 = vpop.f32.mrf.mxu0
      %v1688 = vadd.f32 0.0, %v1687
      %v1689 = vpop.f32.mrf.mxu0
      %v1690 = vadd.f32 0.0, %v1689
      %1691 = vmatmul.bf16.gmra.mxu0 %v1602
      %v1692 = vpop.f32.mrf.mxu0
      %v1693 = vadd.f32 0.0, %v1692
      %v1694 = vpop.f32.mrf.mxu0
      %v1695 = vadd.f32 0.0, %v1694
      %1696 = vdwg.mxu0
      %v1711 = vunpack.c.l.b16 %v1040
      %v1712 = vunpack.c.l.b16 %v1041
      %v1713 = vunpack.c.l.b16 %v1042
      %v1714 = vunpack.c.l.b16 %v1043
      %v1715 = vunpack.c.l.b16 %v1044
      %v1716 = vunpack.c.l.b16 %v1045
      %v1717 = vunpack.c.l.b16 %v1046
      %v1718 = vunpack.c.l.b16 %v1047
      %v1719 = vunpack.c.l.b16 %v1048
      %v1720 = vunpack.c.l.b16 %v1049
      %v1721 = vunpack.c.l.b16 %v1050
      %v1722 = vunpack.c.l.b16 %v1051
      %v1723 = vunpack.c.l.b16 %v1052
      %v1724 = vunpack.c.l.b16 %v1053
      %v1725 = vpack.c.b16 %v1712, %v1711
      %v1726 = vpack.c.b16 %v1714, %v1713
      %v1727 = vpack.c.b16 %v1716, %v1715
      %v1728 = vpack.c.b16 %v1718, %v1717
      %v1729 = vpack.c.b16 %v1720, %v1719
      %v1730 = vpack.c.b16 %v1722, %v1721
      %v1731 = vpack.c.b16 %v1724, %v1723
      %v1739 = vsel %vm1555, %v1024, 0
      %v1742 = vsel %vm1555, %v1025, 0
      %v1745 = vsel %vm1555, %v1026, 0
      %v1748 = vsel %vm1555, %v1027, 0
      %v1751 = vsel %vm1555, %v1028, 0
      %v1754 = vsel %vm1555, %v1029, 0
      %v1757 = vsel %vm1555, %v1030, 0
      %v1760 = vsel %vm1555, %v1031, 0
      %v1763 = vsel %vm1555, %v1032, 0
      %v1766 = vsel %vm1555, %v1033, 0
      %v1769 = vsel %vm1555, %v1034, 0
      %v1772 = vsel %vm1555, %v1035, 0
      %v1775 = vsel %vm1555, %v1036, 0
      %v1778 = vsel %vm1555, %v1037, 0
      %v1781 = vsel %vm1555, %v1038, 0
      %v1784 = vsel %vm1555, %v1039, 0
      %v1787 = vsel %vm1604, %v1731, 0
      %1789 = vmatpush.bf16.msra.mxu0 0
      %1790 = vmatpush.bf16.msra.mxu0 %v1787
      %1791 = vmatpush.bf16.msra.mxu0 %v1730
      %1792 = vmatpush.bf16.msra.mxu0 %v1729
      %1793 = vmatpush.bf16.msra.mxu0 %v1728
      %1794 = vmatpush.bf16.msra.mxu0 %v1727
      %1795 = vmatpush.bf16.msra.mxu0 %v1726
      %1796 = vmatpush.bf16.msra.mxu0 %v1725
      %1797 = vmatmul.bf16.gmra.mxu0 %v1739
      %v1798 = vpop.f32.mrf.mxu0
      %v1799 = vadd.f32 %v1618, %v1798
      %v1800 = vpop.f32.mrf.mxu0
      %v1801 = vadd.f32 %v1620, %v1800
      %1802 = vmatmul.bf16.gmra.mxu0 %v1742
      %v1803 = vpop.f32.mrf.mxu0
      %v1804 = vadd.f32 %v1623, %v1803
      %v1805 = vpop.f32.mrf.mxu0
      %v1806 = vadd.f32 %v1625, %v1805
      %1807 = vmatmul.bf16.gmra.mxu0 %v1745
      %v1808 = vpop.f32.mrf.mxu0
      %v1809 = vadd.f32 %v1628, %v1808
      %v1810 = vpop.f32.mrf.mxu0
      %v1811 = vadd.f32 %v1630, %v1810
      %1812 = vmatmul.bf16.gmra.mxu0 %v1748
      %v1813 = vpop.f32.mrf.mxu0
      %v1814 = vadd.f32 %v1633, %v1813
      %v1815 = vpop.f32.mrf.mxu0
      %v1816 = vadd.f32 %v1635, %v1815
      %1817 = vmatmul.bf16.gmra.mxu0 %v1751
      %v1818 = vpop.f32.mrf.mxu0
      %v1819 = vadd.f32 %v1638, %v1818
      %v1820 = vpop.f32.mrf.mxu0
      %v1821 = vadd.f32 %v1640, %v1820
      %1822 = vmatmul.bf16.gmra.mxu0 %v1754
      %v1823 = vpop.f32.mrf.mxu0
      %v1824 = vadd.f32 %v1643, %v1823
      %v1825 = vpop.f32.mrf.mxu0
      %v1826 = vadd.f32 %v1645, %v1825
      %1827 = vmatmul.bf16.gmra.mxu0 %v1757
      %v1828 = vpop.f32.mrf.mxu0
      %v1829 = vadd.f32 %v1648, %v1828
      %v1830 = vpop.f32.mrf.mxu0
      %v1831 = vadd.f32 %v1650, %v1830
      %1832 = vmatmul.bf16.gmra.mxu0 %v1760
      %v1833 = vpop.f32.mrf.mxu0
      %v1834 = vadd.f32 %v1653, %v1833
      %v1835 = vpop.f32.mrf.mxu0
      %v1836 = vadd.f32 %v1655, %v1835
      %1837 = vmatmul.bf16.gmra.mxu0 %v1763
      %v1838 = vpop.f32.mrf.mxu0
      %v1839 = vadd.f32 %v1658, %v1838
      %v1840 = vpop.f32.mrf.mxu0
      %v1841 = vadd.f32 %v1660, %v1840
      %1842 = vmatmul.bf16.gmra.mxu0 %v1766
      %v1843 = vpop.f32.mrf.mxu0
      %v1844 = vadd.f32 %v1663, %v1843
      %v1845 = vpop.f32.mrf.mxu0
      %v1846 = vadd.f32 %v1665, %v1845
      %1847 = vmatmul.bf16.gmra.mxu0 %v1769
      %v1848 = vpop.f32.mrf.mxu0
      %v1849 = vadd.f32 %v1668, %v1848
      %v1850 = vpop.f32.mrf.mxu0
      %v1851 = vadd.f32 %v1670, %v1850
      %1852 = vmatmul.bf16.gmra.mxu0 %v1772
      %v1853 = vpop.f32.mrf.mxu0
      %v1854 = vadd.f32 %v1673, %v1853
      %v1855 = vpop.f32.mrf.mxu0
      %v1856 = vadd.f32 %v1675, %v1855
      %1857 = vmatmul.bf16.gmra.mxu0 %v1775
      %v1858 = vpop.f32.mrf.mxu0
      %v1859 = vadd.f32 %v1678, %v1858
      %v1860 = vpop.f32.mrf.mxu0
      %v1861 = vadd.f32 %v1680, %v1860
      %1862 = vmatmul.bf16.gmra.mxu0 %v1778
      %v1863 = vpop.f32.mrf.mxu0
      %v1864 = vadd.f32 %v1683, %v1863
      %v1865 = vpop.f32.mrf.mxu0
      %v1866 = vadd.f32 %v1685, %v1865
      %1867 = vmatmul.bf16.gmra.mxu0 %v1781
      %v1868 = vpop.f32.mrf.mxu0
      %v1869 = vadd.f32 %v1688, %v1868
      %v1870 = vpop.f32.mrf.mxu0
      %v1871 = vadd.f32 %v1690, %v1870
      %1872 = vmatmul.bf16.gmra.mxu0 %v1784
      %v1873 = vpop.f32.mrf.mxu0
      %v1874 = vadd.f32 %v1693, %v1873
      %v1875 = vpop.f32.mrf.mxu0
      %v1876 = vadd.f32 %v1695, %v1875
      %1877 = vdwg.mxu0
      %s1878 = scalar_lea.vmem [#allocation2], 48
      %v1879 = vld [vmem:[%s1878] sm:$0xff]
      %v1880 = vld [vmem:[%s1878 + $0x8] sm:$0xff]
      %v1881 = vld [vmem:[%s1878 + $0x18] sm:$0xff]
      %v1882 = vld [vmem:[%s1878 + $0x20] sm:$0xff]
      %v1883 = vld [vmem:[%s1878 + $0x30] sm:$0xff]
      %v1884 = vld [vmem:[%s1878 + $0x38] sm:$0xff]
      %v1885 = vld [vmem:[%s1878 + $0x48] sm:$0xff]
      %v1886 = vld [vmem:[%s1878 + $0x50] sm:$0xff]
      %v1887 = vld [vmem:[%s1878 + $0x60] sm:$0xff]
      %v1888 = vld [vmem:[%s1878 + $0x68] sm:$0xff]
      %v1889 = vld [vmem:[%s1878 + $0x78] sm:$0xff]
      %v1890 = vld [vmem:[%s1878 + $0x80] sm:$0xff]
      %v1891 = vld [vmem:[%s1878 + $0x90] sm:$0xff]
      %v1892 = vld [vmem:[%s1878 + $0x98] sm:$0xff]
      %v1893 = vld [vmem:[%s1878 + $0xa8] sm:$0xff]
      %v1894 = vld [vmem:[%s1878 + $0xb0] sm:$0xff]
      %v1895 = vld [vmem:[%s1878 + $0xc0] sm:$0xff]
      %v1896 = vld [vmem:[%s1878 + $0xc8] sm:$0xff]
      %v1897 = vld [vmem:[%s1878 + $0xd8] sm:$0xff]
      %v1898 = vld [vmem:[%s1878 + $0xe0] sm:$0xff]
      %v1899 = vld [vmem:[%s1878 + $0xf0] sm:$0xff]
      %v1900 = vld [vmem:[%s1878 + $0xf8] sm:$0xff]
      %v1901 = vld [vmem:[%s1878 + $0x108] sm:$0xff]
      %v1902 = vld [vmem:[%s1878 + $0x110] sm:$0xff]
      %v1903 = vld [vmem:[%s1878 + $0x120] sm:$0xff]
      %v1904 = vld [vmem:[%s1878 + $0x128] sm:$0xff]
      %v1905 = vld [vmem:[%s1878 + $0x138] sm:$0xff]
      %v1906 = vld [vmem:[%s1878 + $0x140] sm:$0xff]
      %v1907 = vld [vmem:[%s1878 + $0x150] sm:$0xff]
      %v1908 = vld [vmem:[%s1878 + $0x158] sm:$0xff]
      %v1909 = vld [vmem:[%s1878 + $0x168] sm:$0xff]
      %v1910 = vld [vmem:[%s1878 + $0x170] sm:$0xff]
      %v1911 = vld [vmem:[%s1878 + $0x1] sm:$0xff]
      %v1912 = vld [vmem:[%s1878 + $0x9] sm:$0xff]
      %v1913 = vld [vmem:[%s1878 + $0x19] sm:$0xff]
      %v1914 = vld [vmem:[%s1878 + $0x21] sm:$0xff]
      %v1915 = vld [vmem:[%s1878 + $0x31] sm:$0xff]
      %v1916 = vld [vmem:[%s1878 + $0x39] sm:$0xff]
      %v1917 = vld [vmem:[%s1878 + $0x49] sm:$0xff]
      %v1918 = vld [vmem:[%s1878 + $0x51] sm:$0xff]
      %v1919 = vld [vmem:[%s1878 + $0x61] sm:$0xff]
      %v1920 = vld [vmem:[%s1878 + $0x69] sm:$0xff]
      %v1921 = vld [vmem:[%s1878 + $0x79] sm:$0xff]
      %v1922 = vld [vmem:[%s1878 + $0x81] sm:$0xff]
      %v1923 = vld [vmem:[%s1878 + $0x91] sm:$0xff]
      %v1924 = vld [vmem:[%s1878 + $0x99] sm:$0xff]
      %v1925 = vld [vmem:[%s1878 + $0xa9] sm:$0xff]
      %v1926 = vld [vmem:[%s1878 + $0xb1] sm:$0xff]
      %v1927 = vld [vmem:[%s1878 + $0xc1] sm:$0xff]
      %v1928 = vld [vmem:[%s1878 + $0xc9] sm:$0xff]
      %v1929 = vld [vmem:[%s1878 + $0xd9] sm:$0xff]
      %v1930 = vld [vmem:[%s1878 + $0xe1] sm:$0xff]
      %v1931 = vld [vmem:[%s1878 + $0xf1] sm:$0xff]
      %v1932 = vld [vmem:[%s1878 + $0xf9] sm:$0xff]
      %v1933 = vld [vmem:[%s1878 + $0x109] sm:$0xff]
      %v1934 = vld [vmem:[%s1878 + $0x111] sm:$0xff]
      %v1935 = vld [vmem:[%s1878 + $0x121] sm:$0xff]
      %v1936 = vld [vmem:[%s1878 + $0x129] sm:$0xff]
      %v1937 = vld [vmem:[%s1878 + $0x139] sm:$0xff]
      %v1938 = vld [vmem:[%s1878 + $0x141] sm:$0xff]
      %v1939 = vld [vmem:[%s1878 + $0x151] sm:$0xff]
      %v1940 = vld [vmem:[%s1878 + $0x159] sm:$0xff]
      %v1941 = vld [vmem:[%s1878 + $0x169] sm:$0xff]
      %v1942 = vld [vmem:[%s1878 + $0x171] sm:$0xff]
      %v1943 = vld [vmem:[%s1878 + $0x2] sm:$0xff]
      %v1944 = vld [vmem:[%s1878 + $0xa] sm:$0xff]
      %v1945 = vld [vmem:[%s1878 + $0x1a] sm:$0xff]
      %v1946 = vld [vmem:[%s1878 + $0x22] sm:$0xff]
      %v1947 = vld [vmem:[%s1878 + $0x32] sm:$0xff]
      %v1948 = vld [vmem:[%s1878 + $0x3a] sm:$0xff]
      %v1949 = vld [vmem:[%s1878 + $0x4a] sm:$0xff]
      %v1950 = vld [vmem:[%s1878 + $0x52] sm:$0xff]
      %v1951 = vld [vmem:[%s1878 + $0x62] sm:$0xff]
      %v1952 = vld [vmem:[%s1878 + $0x6a] sm:$0xff]
      %v1953 = vld [vmem:[%s1878 + $0x7a] sm:$0xff]
      %v1954 = vld [vmem:[%s1878 + $0x82] sm:$0xff]
      %v1955 = vld [vmem:[%s1878 + $0x92] sm:$0xff]
      %v1956 = vld [vmem:[%s1878 + $0x9a] sm:$0xff]
      %v1957 = vld [vmem:[%s1878 + $0xaa] sm:$0xff]
      %v1958 = vld [vmem:[%s1878 + $0xb2] sm:$0xff]
      %v1959 = vld [vmem:[%s1878 + $0xc2] sm:$0xff]
      %v1960 = vld [vmem:[%s1878 + $0xca] sm:$0xff]
      %v1961 = vld [vmem:[%s1878 + $0xda] sm:$0xff]
      %v1962 = vld [vmem:[%s1878 + $0xe2] sm:$0xff]
      %v1963 = vld [vmem:[%s1878 + $0xf2] sm:$0xff]
      %v1964 = vld [vmem:[%s1878 + $0xfa] sm:$0xff]
      %v1965 = vld [vmem:[%s1878 + $0x10a] sm:$0xff]
      %v1966 = vld [vmem:[%s1878 + $0x112] sm:$0xff]
      %v1967 = vld [vmem:[%s1878 + $0x122] sm:$0xff]
      %v1968 = vld [vmem:[%s1878 + $0x12a] sm:$0xff]
      %v1969 = vld [vmem:[%s1878 + $0x13a] sm:$0xff]
      %v1970 = vld [vmem:[%s1878 + $0x142] sm:$0xff]
      %v1971 = vld [vmem:[%s1878 + $0x152] sm:$0xff]
      %v1972 = vld [vmem:[%s1878 + $0x15a] sm:$0xff]
      %v1973 = vld [vmem:[%s1878 + $0x16a] sm:$0xff]
      %v1974 = vld [vmem:[%s1878 + $0x172] sm:$0xff]
      %2007 = vrot.lane.b32.xlu0 %v1911, 36
      %v2008 = vpop.permute.xlu0 %2007
      %2009 = vrot.lane.b32.xlu0 %v1912, 36
      %v2010 = vpop.permute.xlu0 %2009
      %2011 = vrot.lane.b32.xlu0 %v1913, 36
      %v2012 = vpop.permute.xlu0 %2011
      %2013 = vrot.lane.b32.xlu0 %v1914, 36
      %v2014 = vpop.permute.xlu0 %2013
      %2015 = vrot.lane.b32.xlu0 %v1915, 36
      %v2016 = vpop.permute.xlu0 %2015
      %2017 = vrot.lane.b32.xlu0 %v1916, 36
      %v2018 = vpop.permute.xlu0 %2017
      %2019 = vrot.lane.b32.xlu0 %v1917, 36
      %v2020 = vpop.permute.xlu0 %2019
      %2021 = vrot.lane.b32.xlu0 %v1918, 36
      %v2022 = vpop.permute.xlu0 %2021
      %2023 = vrot.lane.b32.xlu0 %v1919, 36
      %v2024 = vpop.permute.xlu0 %2023
      %2025 = vrot.lane.b32.xlu0 %v1920, 36
      %v2026 = vpop.permute.xlu0 %2025
      %2027 = vrot.lane.b32.xlu0 %v1921, 36
      %v2028 = vpop.permute.xlu0 %2027
      %2029 = vrot.lane.b32.xlu0 %v1922, 36
      %v2030 = vpop.permute.xlu0 %2029
      %2031 = vrot.lane.b32.xlu0 %v1923, 36
      %v2032 = vpop.permute.xlu0 %2031
      %2033 = vrot.lane.b32.xlu0 %v1924, 36
      %v2034 = vpop.permute.xlu0 %2033
      %2035 = vrot.lane.b32.xlu0 %v1925, 36
      %v2036 = vpop.permute.xlu0 %2035
      %2037 = vrot.lane.b32.xlu0 %v1926, 36
      %v2038 = vpop.permute.xlu0 %2037
      %2039 = vrot.lane.b32.xlu0 %v1927, 36
      %v2040 = vpop.permute.xlu0 %2039
      %2041 = vrot.lane.b32.xlu0 %v1928, 36
      %v2042 = vpop.permute.xlu0 %2041
      %2043 = vrot.lane.b32.xlu0 %v1929, 36
      %v2044 = vpop.permute.xlu0 %2043
      %2045 = vrot.lane.b32.xlu0 %v1930, 36
      %v2046 = vpop.permute.xlu0 %2045
      %2047 = vrot.lane.b32.xlu0 %v1931, 36
      %v2048 = vpop.permute.xlu0 %2047
      %2049 = vrot.lane.b32.xlu0 %v1932, 36
      %v2050 = vpop.permute.xlu0 %2049
      %2051 = vrot.lane.b32.xlu0 %v1933, 36
      %v2052 = vpop.permute.xlu0 %2051
      %2053 = vrot.lane.b32.xlu0 %v1934, 36
      %v2054 = vpop.permute.xlu0 %2053
      %2055 = vrot.lane.b32.xlu0 %v1935, 36
      %v2056 = vpop.permute.xlu0 %2055
      %2057 = vrot.lane.b32.xlu0 %v1936, 36
      %v2058 = vpop.permute.xlu0 %2057
      %2059 = vrot.lane.b32.xlu0 %v1937, 36
      %v2060 = vpop.permute.xlu0 %2059
      %2061 = vrot.lane.b32.xlu0 %v1938, 36
      %v2062 = vpop.permute.xlu0 %2061
      %2063 = vrot.lane.b32.xlu0 %v1939, 36
      %v2064 = vpop.permute.xlu0 %2063
      %2065 = vrot.lane.b32.xlu0 %v1940, 36
      %v2066 = vpop.permute.xlu0 %2065
      %2067 = vrot.lane.b32.xlu0 %v1941, 36
      %v2068 = vpop.permute.xlu0 %2067
      %2069 = vrot.lane.b32.xlu0 %v1942, 36
      %v2070 = vpop.permute.xlu0 %2069
      %2135 = vrot.lane.b32.xlu0 %v1943, 72
      %v2136 = vpop.permute.xlu0 %2135
      %2137 = vrot.lane.b32.xlu0 %v1944, 72
      %v2138 = vpop.permute.xlu0 %2137
      %2139 = vrot.lane.b32.xlu0 %v1945, 72
      %v2140 = vpop.permute.xlu0 %2139
      %2141 = vrot.lane.b32.xlu0 %v1946, 72
      %v2142 = vpop.permute.xlu0 %2141
      %2143 = vrot.lane.b32.xlu0 %v1947, 72
      %v2144 = vpop.permute.xlu0 %2143
      %2145 = vrot.lane.b32.xlu0 %v1948, 72
      %v2146 = vpop.permute.xlu0 %2145
      %2147 = vrot.lane.b32.xlu0 %v1949, 72
      %v2148 = vpop.permute.xlu0 %2147
      %2149 = vrot.lane.b32.xlu0 %v1950, 72
      %v2150 = vpop.permute.xlu0 %2149
      %2151 = vrot.lane.b32.xlu0 %v1951, 72
      %v2152 = vpop.permute.xlu0 %2151
      %2153 = vrot.lane.b32.xlu0 %v1952, 72
      %v2154 = vpop.permute.xlu0 %2153
      %2155 = vrot.lane.b32.xlu0 %v1953, 72
      %v2156 = vpop.permute.xlu0 %2155
      %2157 = vrot.lane.b32.xlu0 %v1954, 72
      %v2158 = vpop.permute.xlu0 %2157
      %2159 = vrot.lane.b32.xlu0 %v1955, 72
      %v2160 = vpop.permute.xlu0 %2159
      %2161 = vrot.lane.b32.xlu0 %v1956, 72
      %v2162 = vpop.permute.xlu0 %2161
      %2163 = vrot.lane.b32.xlu0 %v1957, 72
      %v2164 = vpop.permute.xlu0 %2163
      %2165 = vrot.lane.b32.xlu0 %v1958, 72
      %v2166 = vpop.permute.xlu0 %2165
      %2167 = vrot.lane.b32.xlu0 %v1959, 72
      %v2168 = vpop.permute.xlu0 %2167
      %2169 = vrot.lane.b32.xlu0 %v1960, 72
      %v2170 = vpop.permute.xlu0 %2169
      %2171 = vrot.lane.b32.xlu0 %v1961, 72
      %v2172 = vpop.permute.xlu0 %2171
      %2173 = vrot.lane.b32.xlu0 %v1962, 72
      %v2174 = vpop.permute.xlu0 %2173
      %2175 = vrot.lane.b32.xlu0 %v1963, 72
      %v2176 = vpop.permute.xlu0 %2175
      %2177 = vrot.lane.b32.xlu0 %v1964, 72
      %v2178 = vpop.permute.xlu0 %2177
      %2179 = vrot.lane.b32.xlu0 %v1965, 72
      %v2180 = vpop.permute.xlu0 %2179
      %2181 = vrot.lane.b32.xlu0 %v1966, 72
      %v2182 = vpop.permute.xlu0 %2181
      %2183 = vrot.lane.b32.xlu0 %v1967, 72
      %v2184 = vpop.permute.xlu0 %2183
      %2185 = vrot.lane.b32.xlu0 %v1968, 72
      %v2186 = vpop.permute.xlu0 %2185
      %2187 = vrot.lane.b32.xlu0 %v1969, 72
      %v2188 = vpop.permute.xlu0 %2187
      %2189 = vrot.lane.b32.xlu0 %v1970, 72
      %v2190 = vpop.permute.xlu0 %2189
      %2191 = vrot.lane.b32.xlu0 %v1971, 72
      %v2192 = vpop.permute.xlu0 %2191
      %2193 = vrot.lane.b32.xlu0 %v1972, 72
      %v2194 = vpop.permute.xlu0 %2193
      %2195 = vrot.lane.b32.xlu0 %v1973, 72
      %v2196 = vpop.permute.xlu0 %2195
      %2197 = vrot.lane.b32.xlu0 %v1974, 72
      %v2198 = vpop.permute.xlu0 %2197
      %v2231 = vsel %vm306, %v1879, %v2008
      %v2232 = vsel %vm306, %v1880, %v2010
      %v2233 = vsel %vm306, %v1881, %v2012
      %v2234 = vsel %vm306, %v1882, %v2014
      %v2235 = vsel %vm306, %v1883, %v2016
      %v2236 = vsel %vm306, %v1884, %v2018
      %v2237 = vsel %vm306, %v1885, %v2020
      %v2238 = vsel %vm306, %v1886, %v2022
      %v2239 = vsel %vm306, %v1887, %v2024
      %v2240 = vsel %vm306, %v1888, %v2026
      %v2241 = vsel %vm306, %v1889, %v2028
      %v2242 = vsel %vm306, %v1890, %v2030
      %v2243 = vsel %vm306, %v1891, %v2032
      %v2244 = vsel %vm306, %v1892, %v2034
      %v2245 = vsel %vm306, %v1893, %v2036
      %v2246 = vsel %vm306, %v1894, %v2038
      %v2247 = vsel %vm306, %v1895, %v2040
      %v2248 = vsel %vm306, %v1896, %v2042
      %v2249 = vsel %vm306, %v1897, %v2044
      %v2250 = vsel %vm306, %v1898, %v2046
      %v2251 = vsel %vm306, %v1899, %v2048
      %v2252 = vsel %vm306, %v1900, %v2050
      %v2253 = vsel %vm306, %v1901, %v2052
      %v2254 = vsel %vm306, %v1902, %v2054
      %v2255 = vsel %vm306, %v1903, %v2056
      %v2256 = vsel %vm306, %v1904, %v2058
      %v2257 = vsel %vm306, %v1905, %v2060
      %v2258 = vsel %vm306, %v1906, %v2062
      %v2259 = vsel %vm306, %v1907, %v2064
      %v2260 = vsel %vm306, %v1908, %v2066
      %v2261 = vsel %vm306, %v1909, %v2068
      %v2262 = vsel %vm306, %v1910, %v2070
      %v2263 = vsel %vm991, %v2231, %v2136
      %v2264 = vsel %vm991, %v2232, %v2138
      %v2265 = vsel %vm991, %v2233, %v2140
      %v2266 = vsel %vm991, %v2234, %v2142
      %v2267 = vsel %vm991, %v2235, %v2144
      %v2268 = vsel %vm991, %v2236, %v2146
      %v2269 = vsel %vm991, %v2237, %v2148
      %v2270 = vsel %vm991, %v2238, %v2150
      %v2271 = vsel %vm991, %v2239, %v2152
      %v2272 = vsel %vm991, %v2240, %v2154
      %v2273 = vsel %vm991, %v2241, %v2156
      %v2274 = vsel %vm991, %v2242, %v2158
      %v2275 = vsel %vm991, %v2243, %v2160
      %v2276 = vsel %vm991, %v2244, %v2162
      %v2277 = vsel %vm991, %v2245, %v2164
      %v2278 = vsel %vm991, %v2246, %v2166
      %v2279 = vsel %vm991, %v2247, %v2168
      %v2280 = vsel %vm991, %v2248, %v2170
      %v2281 = vsel %vm991, %v2249, %v2172
      %v2282 = vsel %vm991, %v2250, %v2174
      %v2283 = vsel %vm991, %v2251, %v2176
      %v2284 = vsel %vm991, %v2252, %v2178
      %v2285 = vsel %vm991, %v2253, %v2180
      %v2286 = vsel %vm991, %v2254, %v2182
      %v2287 = vsel %vm991, %v2255, %v2184
      %v2288 = vsel %vm991, %v2256, %v2186
      %v2289 = vsel %vm991, %v2257, %v2188
      %v2290 = vsel %vm991, %v2258, %v2190
      %v2291 = vsel %vm991, %v2259, %v2192
      %v2292 = vsel %vm991, %v2260, %v2194
      %v2293 = vsel %vm991, %v2261, %v2196
      %v2294 = vsel %vm991, %v2262, %v2198
      %v2295 = vpack.c.bf16 %v2264, %v2263
      %v2296 = vpack.c.bf16 %v2266, %v2265
      %v2297 = vpack.c.bf16 %v2268, %v2267
      %v2298 = vpack.c.bf16 %v2270, %v2269
      %v2299 = vpack.c.bf16 %v2272, %v2271
      %v2300 = vpack.c.bf16 %v2274, %v2273
      %v2301 = vpack.c.bf16 %v2276, %v2275
      %v2302 = vpack.c.bf16 %v2278, %v2277
      %v2303 = vpack.c.bf16 %v2280, %v2279
      %v2304 = vpack.c.bf16 %v2282, %v2281
      %v2305 = vpack.c.bf16 %v2284, %v2283
      %v2306 = vpack.c.bf16 %v2286, %v2285
      %v2307 = vpack.c.bf16 %v2288, %v2287
      %v2308 = vpack.c.bf16 %v2290, %v2289
      %v2309 = vpack.c.bf16 %v2292, %v2291
      %v2310 = vpack.c.bf16 %v2294, %v2293
      %v2311 = vld [vmem:[%s3 + $0x6c] sm:$0xf]
      %v2312 = vld [vmem:[%s3 + $0x70] sm:$0xf]
      %v2313 = vld [vmem:[%s3 + $0x74] sm:$0xf]
      %v2314 = vld [vmem:[%s3 + $0x78] sm:$0xf]
      %v2315 = vld [vmem:[%s3 + $0x7c] sm:$0xf]
      %v2316 = vld [vmem:[%s3 + $0x80] sm:$0xf]
      %v2317 = vld [vmem:[%s3 + $0x84] sm:$0xf]
      %v2318 = vld [vmem:[%s3 + $0x88] sm:$0xf]
      %v2319 = vld [vmem:[%s3 + $0x8c] sm:$0xf]
      %v2320 = vld [vmem:[%s3 + $0x90] sm:$0xf]
      %v2321 = vld [vmem:[%s3 + $0x94] sm:$0xf]
      %v2322 = vld [vmem:[%s3 + $0x98] sm:$0xf]
      %v2323 = vld [vmem:[%s3 + $0x9c] sm:$0xf]
      %v2324 = vld [vmem:[%s3 + $0xa0] sm:$0x3]
      %v2339 = vunpack.c.l.b16 %v2311
      %v2340 = vunpack.c.l.b16 %v2312
      %v2341 = vunpack.c.l.b16 %v2313
      %v2342 = vunpack.c.l.b16 %v2314
      %v2343 = vunpack.c.l.b16 %v2315
      %v2344 = vunpack.c.l.b16 %v2316
      %v2345 = vunpack.c.l.b16 %v2317
      %v2346 = vunpack.c.l.b16 %v2318
      %v2347 = vunpack.c.l.b16 %v2319
      %v2348 = vunpack.c.l.b16 %v2320
      %v2349 = vunpack.c.l.b16 %v2321
      %v2350 = vunpack.c.l.b16 %v2322
      %v2351 = vunpack.c.l.b16 %v2323
      %v2352 = vunpack.c.l.b16 %v2324
      %v2353 = vpack.c.b16 %v2340, %v2339
      %v2354 = vpack.c.b16 %v2342, %v2341
      %v2355 = vpack.c.b16 %v2344, %v2343
      %v2356 = vpack.c.b16 %v2346, %v2345
      %v2357 = vpack.c.b16 %v2348, %v2347
      %v2358 = vpack.c.b16 %v2350, %v2349
      %v2359 = vpack.c.b16 %v2352, %v2351
      %v2367 = vsel %vm1555, %v2295, 0
      %v2370 = vsel %vm1555, %v2296, 0
      %v2373 = vsel %vm1555, %v2297, 0
      %v2376 = vsel %vm1555, %v2298, 0
      %v2379 = vsel %vm1555, %v2299, 0
      %v2382 = vsel %vm1555, %v2300, 0
      %v2385 = vsel %vm1555, %v2301, 0
      %v2388 = vsel %vm1555, %v2302, 0
      %v2391 = vsel %vm1555, %v2303, 0
      %v2394 = vsel %vm1555, %v2304, 0
      %v2397 = vsel %vm1555, %v2305, 0
      %v2400 = vsel %vm1555, %v2306, 0
      %v2403 = vsel %vm1555, %v2307, 0
      %v2406 = vsel %vm1555, %v2308, 0
      %v2409 = vsel %vm1555, %v2309, 0
      %v2412 = vsel %vm1555, %v2310, 0
      %v2415 = vsel %vm1604, %v2359, 0
      %2417 = vmatpush.bf16.msra.mxu0 0
      %2418 = vmatpush.bf16.msra.mxu0 %v2415
      %2419 = vmatpush.bf16.msra.mxu0 %v2358
      %2420 = vmatpush.bf16.msra.mxu0 %v2357
      %2421 = vmatpush.bf16.msra.mxu0 %v2356
      %2422 = vmatpush.bf16.msra.mxu0 %v2355
      %2423 = vmatpush.bf16.msra.mxu0 %v2354
      %2424 = vmatpush.bf16.msra.mxu0 %v2353
      %2425 = vmatmul.bf16.gmra.mxu0 %v2367
      %v2426 = vpop.f32.mrf.mxu0
      %v2427 = vadd.f32 0.0, %v2426
      %v2428 = vpop.f32.mrf.mxu0
      %v2429 = vadd.f32 0.0, %v2428
      %2430 = vmatmul.bf16.gmra.mxu0 %v2370
      %v2431 = vpop.f32.mrf.mxu0
      %v2432 = vadd.f32 0.0, %v2431
      %v2433 = vpop.f32.mrf.mxu0
      %v2434 = vadd.f32 0.0, %v2433
      %2435 = vmatmul.bf16.gmra.mxu0 %v2373
      %v2436 = vpop.f32.mrf.mxu0
      %v2437 = vadd.f32 0.0, %v2436
      %v2438 = vpop.f32.mrf.mxu0
      %v2439 = vadd.f32 0.0, %v2438
      %2440 = vmatmul.bf16.gmra.mxu0 %v2376
      %v2441 = vpop.f32.mrf.mxu0
      %v2442 = vadd.f32 0.0, %v2441
      %v2443 = vpop.f32.mrf.mxu0
      %v2444 = vadd.f32 0.0, %v2443
      %2445 = vmatmul.bf16.gmra.mxu0 %v2379
      %v2446 = vpop.f32.mrf.mxu0
      %v2447 = vadd.f32 0.0, %v2446
      %v2448 = vpop.f32.mrf.mxu0
      %v2449 = vadd.f32 0.0, %v2448
      %2450 = vmatmul.bf16.gmra.mxu0 %v2382
      %v2451 = vpop.f32.mrf.mxu0
      %v2452 = vadd.f32 0.0, %v2451
      %v2453 = vpop.f32.mrf.mxu0
      %v2454 = vadd.f32 0.0, %v2453
      %2455 = vmatmul.bf16.gmra.mxu0 %v2385
      %v2456 = vpop.f32.mrf.mxu0
      %v2457 = vadd.f32 0.0, %v2456
      %v2458 = vpop.f32.mrf.mxu0
      %v2459 = vadd.f32 0.0, %v2458
      %2460 = vmatmul.bf16.gmra.mxu0 %v2388
      %v2461 = vpop.f32.mrf.mxu0
      %v2462 = vadd.f32 0.0, %v2461
      %v2463 = vpop.f32.mrf.mxu0
      %v2464 = vadd.f32 0.0, %v2463
      %2465 = vmatmul.bf16.gmra.mxu0 %v2391
      %v2466 = vpop.f32.mrf.mxu0
      %v2467 = vadd.f32 0.0, %v2466
      %v2468 = vpop.f32.mrf.mxu0
      %v2469 = vadd.f32 0.0, %v2468
      %2470 = vmatmul.bf16.gmra.mxu0 %v2394
      %v2471 = vpop.f32.mrf.mxu0
      %v2472 = vadd.f32 0.0, %v2471
      %v2473 = vpop.f32.mrf.mxu0
      %v2474 = vadd.f32 0.0, %v2473
      %2475 = vmatmul.bf16.gmra.mxu0 %v2397
      %v2476 = vpop.f32.mrf.mxu0
      %v2477 = vadd.f32 0.0, %v2476
      %v2478 = vpop.f32.mrf.mxu0
      %v2479 = vadd.f32 0.0, %v2478
      %2480 = vmatmul.bf16.gmra.mxu0 %v2400
      %v2481 = vpop.f32.mrf.mxu0
      %v2482 = vadd.f32 0.0, %v2481
      %v2483 = vpop.f32.mrf.mxu0
      %v2484 = vadd.f32 0.0, %v2483
      %2485 = vmatmul.bf16.gmra.mxu0 %v2403
      %v2486 = vpop.f32.mrf.mxu0
      %v2487 = vadd.f32 0.0, %v2486
      %v2488 = vpop.f32.mrf.mxu0
      %v2489 = vadd.f32 0.0, %v2488
      %2490 = vmatmul.bf16.gmra.mxu0 %v2406
      %v2491 = vpop.f32.mrf.mxu0
      %v2492 = vadd.f32 0.0, %v2491
      %v2493 = vpop.f32.mrf.mxu0
      %v2494 = vadd.f32 0.0, %v2493
      %2495 = vmatmul.bf16.gmra.mxu0 %v2409
      %v2496 = vpop.f32.mrf.mxu0
      %v2497 = vadd.f32 0.0, %v2496
      %v2498 = vpop.f32.mrf.mxu0
      %v2499 = vadd.f32 0.0, %v2498
      %2500 = vmatmul.bf16.gmra.mxu0 %v2412
      %v2501 = vpop.f32.mrf.mxu0
      %v2502 = vadd.f32 0.0, %v2501
      %v2503 = vpop.f32.mrf.mxu0
      %v2504 = vadd.f32 0.0, %v2503
      %2505 = vdwg.mxu0
      %v2506 = vadd.f32 %v1799, %v2427
      %v2507 = vadd.f32 %v1801, %v2429
      %v2508 = vadd.f32 %v1804, %v2432
      %v2509 = vadd.f32 %v1806, %v2434
      %v2510 = vadd.f32 %v1809, %v2437
      %v2511 = vadd.f32 %v1811, %v2439
      %v2512 = vadd.f32 %v1814, %v2442
      %v2513 = vadd.f32 %v1816, %v2444
      %v2514 = vadd.f32 %v1819, %v2447
      %v2515 = vadd.f32 %v1821, %v2449
      %v2516 = vadd.f32 %v1824, %v2452
      %v2517 = vadd.f32 %v1826, %v2454
      %v2518 = vadd.f32 %v1829, %v2457
      %v2519 = vadd.f32 %v1831, %v2459
      %v2520 = vadd.f32 %v1834, %v2462
      %v2521 = vadd.f32 %v1836, %v2464
      %v2522 = vadd.f32 %v1839, %v2467
      %v2523 = vadd.f32 %v1841, %v2469
      %v2524 = vadd.f32 %v1844, %v2472
      %v2525 = vadd.f32 %v1846, %v2474
      %v2526 = vadd.f32 %v1849, %v2477
      %v2527 = vadd.f32 %v1851, %v2479
      %v2528 = vadd.f32 %v1854, %v2482
      %v2529 = vadd.f32 %v1856, %v2484
      %v2530 = vadd.f32 %v1859, %v2487
      %v2531 = vadd.f32 %v1861, %v2489
      %v2532 = vadd.f32 %v1864, %v2492
      %v2533 = vadd.f32 %v1866, %v2494
      %v2534 = vadd.f32 %v1869, %v2497
      %v2535 = vadd.f32 %v1871, %v2499
      %v2536 = vadd.f32 %v1874, %v2502
      %v2537 = vadd.f32 %v1876, %v2504
      %v2538 = vld [vmem:[%s4] sm:$0x1]
      %v2539 = vperm.slane %v2538, 0
      %v2540 = vadd.f32 %v2506, %v2539
      %v2541 = vadd.f32 %v2507, %v2539
      %v2542 = vadd.f32 %v2508, %v2539
      %v2543 = vadd.f32 %v2509, %v2539
      %v2544 = vadd.f32 %v2510, %v2539
      %v2545 = vadd.f32 %v2511, %v2539
      %v2546 = vadd.f32 %v2512, %v2539
      %v2547 = vadd.f32 %v2513, %v2539
      %v2548 = vadd.f32 %v2514, %v2539
      %v2549 = vadd.f32 %v2515, %v2539
      %v2550 = vadd.f32 %v2516, %v2539
      %v2551 = vadd.f32 %v2517, %v2539
      %v2552 = vadd.f32 %v2518, %v2539
      %v2553 = vadd.f32 %v2519, %v2539
      %v2554 = vadd.f32 %v2520, %v2539
      %v2555 = vadd.f32 %v2521, %v2539
      %v2556 = vadd.f32 %v2522, %v2539
      %v2557 = vadd.f32 %v2523, %v2539
      %v2558 = vadd.f32 %v2524, %v2539
      %v2559 = vadd.f32 %v2525, %v2539
      %v2560 = vadd.f32 %v2526, %v2539
      %v2561 = vadd.f32 %v2527, %v2539
      %v2562 = vadd.f32 %v2528, %v2539
      %v2563 = vadd.f32 %v2529, %v2539
      %v2564 = vadd.f32 %v2530, %v2539
      %v2565 = vadd.f32 %v2531, %v2539
      %v2566 = vadd.f32 %v2532, %v2539
      %v2567 = vadd.f32 %v2533, %v2539
      %v2568 = vadd.f32 %v2534, %v2539
      %v2569 = vadd.f32 %v2535, %v2539
      %v2570 = vadd.f32 %v2536, %v2539
      %v2571 = vadd.f32 %v2537, %v2539
      %v2572 = vtanh.pop %v2540
      %v2573 = vtanh.pop %v2541
      %v2574 = vtanh.pop %v2542
      %v2575 = vtanh.pop %v2543
      %v2576 = vtanh.pop %v2544
      %v2577 = vtanh.pop %v2545
      %v2578 = vtanh.pop %v2546
      %v2579 = vtanh.pop %v2547
      %v2580 = vtanh.pop %v2548
      %v2581 = vtanh.pop %v2549
      %v2582 = vtanh.pop %v2550
      %v2583 = vtanh.pop %v2551
      %v2584 = vtanh.pop %v2552
      %v2585 = vtanh.pop %v2553
      %v2586 = vtanh.pop %v2554
      %v2587 = vtanh.pop %v2555
      %v2588 = vtanh.pop %v2556
      %v2589 = vtanh.pop %v2557
      %v2590 = vtanh.pop %v2558
      %v2591 = vtanh.pop %v2559
      %v2592 = vtanh.pop %v2560
      %v2593 = vtanh.pop %v2561
      %v2594 = vtanh.pop %v2562
      %v2595 = vtanh.pop %v2563
      %v2596 = vtanh.pop %v2564
      %v2597 = vtanh.pop %v2565
      %v2598 = vtanh.pop %v2566
      %v2599 = vtanh.pop %v2567
      %v2600 = vtanh.pop %v2568
      %v2601 = vtanh.pop %v2569
      %v2602 = vtanh.pop %v2570
      %v2603 = vtanh.pop %v2571
      %v2604 = vld [vmem:[%s4 + $0x1] sm:$0x1]
      %v2605 = vperm.slane %v2604, 0
      %v2606 = vmul.f32 %v2572, %v2605
      %v2607 = vmul.f32 %v2573, %v2605
      %v2608 = vmul.f32 %v2574, %v2605
      %v2609 = vmul.f32 %v2575, %v2605
      %v2610 = vmul.f32 %v2576, %v2605
      %v2611 = vmul.f32 %v2577, %v2605
      %v2612 = vmul.f32 %v2578, %v2605
      %v2613 = vmul.f32 %v2579, %v2605
      %v2614 = vmul.f32 %v2580, %v2605
      %v2615 = vmul.f32 %v2581, %v2605
      %v2616 = vmul.f32 %v2582, %v2605
      %v2617 = vmul.f32 %v2583, %v2605
      %v2618 = vmul.f32 %v2584, %v2605
      %v2619 = vmul.f32 %v2585, %v2605
      %v2620 = vmul.f32 %v2586, %v2605
      %v2621 = vmul.f32 %v2587, %v2605
      %v2622 = vmul.f32 %v2588, %v2605
      %v2623 = vmul.f32 %v2589, %v2605
      %v2624 = vmul.f32 %v2590, %v2605
      %v2625 = vmul.f32 %v2591, %v2605
      %v2626 = vmul.f32 %v2592, %v2605
      %v2627 = vmul.f32 %v2593, %v2605
      %v2628 = vmul.f32 %v2594, %v2605
      %v2629 = vmul.f32 %v2595, %v2605
      %v2630 = vmul.f32 %v2596, %v2605
      %v2631 = vmul.f32 %v2597, %v2605
      %v2632 = vmul.f32 %v2598, %v2605
      %v2633 = vmul.f32 %v2599, %v2605
      %v2634 = vmul.f32 %v2600, %v2605
      %v2635 = vmul.f32 %v2601, %v2605
      %v2636 = vmul.f32 %v2602, %v2605
      %v2637 = vmul.f32 %v2603, %v2605
      %v2638 = vld [vmem:[%s4 + $0x2] sm:$0x1]
      %v2639 = vperm.slane %v2638, 0
      %v2640 = vadd.f32 %v2606, %v2639
      %v2641 = vadd.f32 %v2607, %v2639
      %v2642 = vadd.f32 %v2608, %v2639
      %v2643 = vadd.f32 %v2609, %v2639
      %v2644 = vadd.f32 %v2610, %v2639
      %v2645 = vadd.f32 %v2611, %v2639
      %v2646 = vadd.f32 %v2612, %v2639
      %v2647 = vadd.f32 %v2613, %v2639
      %v2648 = vadd.f32 %v2614, %v2639
      %v2649 = vadd.f32 %v2615, %v2639
      %v2650 = vadd.f32 %v2616, %v2639
      %v2651 = vadd.f32 %v2617, %v2639
      %v2652 = vadd.f32 %v2618, %v2639
      %v2653 = vadd.f32 %v2619, %v2639
      %v2654 = vadd.f32 %v2620, %v2639
      %v2655 = vadd.f32 %v2621, %v2639
      %v2656 = vadd.f32 %v2622, %v2639
      %v2657 = vadd.f32 %v2623, %v2639
      %v2658 = vadd.f32 %v2624, %v2639
      %v2659 = vadd.f32 %v2625, %v2639
      %v2660 = vadd.f32 %v2626, %v2639
      %v2661 = vadd.f32 %v2627, %v2639
      %v2662 = vadd.f32 %v2628, %v2639
      %v2663 = vadd.f32 %v2629, %v2639
      %v2664 = vadd.f32 %v2630, %v2639
      %v2665 = vadd.f32 %v2631, %v2639
      %v2666 = vadd.f32 %v2632, %v2639
      %v2667 = vadd.f32 %v2633, %v2639
      %v2668 = vadd.f32 %v2634, %v2639
      %v2669 = vadd.f32 %v2635, %v2639
      %v2670 = vadd.f32 %v2636, %v2639
      %v2671 = vadd.f32 %v2637, %v2639
      %v2672 = vld [vmem:[%s294] sm:$0xff]
      %v2673 = vld [vmem:[%s294 + $0x8] sm:$0xff]
      %v2674 = vld [vmem:[%s294 + $0x10] sm:$0xff]
      %v2675 = vld [vmem:[%s294 + $0x18] sm:$0xff]
      %v2676 = vld [vmem:[%s294 + $0x20] sm:$0xff]
      %v2677 = vld [vmem:[%s294 + $0x28] sm:$0xff]
      %v2678 = vld [vmem:[%s294 + $0x30] sm:$0xff]
      %v2679 = vld [vmem:[%s294 + $0x38] sm:$0xff]
      %v2680 = vld [vmem:[%s294 + $0x40] sm:$0xff]
      %v2681 = vld [vmem:[%s294 + $0x48] sm:$0xff]
      %v2682 = vld [vmem:[%s294 + $0x50] sm:$0xff]
      %v2683 = vld [vmem:[%s294 + $0x58] sm:$0xff]
      %v2684 = vld [vmem:[%s294 + $0x60] sm:$0xff]
      %v2685 = vld [vmem:[%s294 + $0x68] sm:$0xff]
      %v2686 = vld [vmem:[%s294 + $0x70] sm:$0xff]
      %v2687 = vld [vmem:[%s294 + $0x78] sm:$0xff]
      %v2688 = vld [vmem:[%s294 + $0x80] sm:$0xff]
      %v2689 = vld [vmem:[%s294 + $0x88] sm:$0xff]
      %v2690 = vld [vmem:[%s294 + $0x90] sm:$0xff]
      %v2691 = vld [vmem:[%s294 + $0x98] sm:$0xff]
      %v2692 = vld [vmem:[%s294 + $0xa0] sm:$0xff]
      %v2693 = vld [vmem:[%s294 + $0xa8] sm:$0xff]
      %v2694 = vld [vmem:[%s294 + $0xb0] sm:$0xff]
      %v2695 = vld [vmem:[%s294 + $0xb8] sm:$0xff]
      %v2696 = vld [vmem:[%s294 + $0xc0] sm:$0xff]
      %v2697 = vld [vmem:[%s294 + $0xc8] sm:$0xff]
      %v2698 = vld [vmem:[%s294 + $0xd0] sm:$0xff]
      %v2699 = vld [vmem:[%s294 + $0xd8] sm:$0xff]
      %v2700 = vld [vmem:[%s294 + $0xe0] sm:$0xff]
      %v2701 = vld [vmem:[%s294 + $0xe8] sm:$0xff]
      %v2702 = vld [vmem:[%s294 + $0xf0] sm:$0xff]
      %v2703 = vld [vmem:[%s294 + $0xf8] sm:$0xff]
      %2736 = vrot.lane.b32.xlu0 %v2672, 32
      %v2737 = vpop.permute.xlu0 %2736
      %2738 = vrot.lane.b32.xlu0 %v2673, 32
      %v2739 = vpop.permute.xlu0 %2738
      %2740 = vrot.lane.b32.xlu0 %v2674, 32
      %v2741 = vpop.permute.xlu0 %2740
      %2742 = vrot.lane.b32.xlu0 %v2675, 32
      %v2743 = vpop.permute.xlu0 %2742
      %2744 = vrot.lane.b32.xlu0 %v2676, 32
      %v2745 = vpop.permute.xlu0 %2744
      %2746 = vrot.lane.b32.xlu0 %v2677, 32
      %v2747 = vpop.permute.xlu0 %2746
      %2748 = vrot.lane.b32.xlu0 %v2678, 32
      %v2749 = vpop.permute.xlu0 %2748
      %2750 = vrot.lane.b32.xlu0 %v2679, 32
      %v2751 = vpop.permute.xlu0 %2750
      %2752 = vrot.lane.b32.xlu0 %v2680, 32
      %v2753 = vpop.permute.xlu0 %2752
      %2754 = vrot.lane.b32.xlu0 %v2681, 32
      %v2755 = vpop.permute.xlu0 %2754
      %2756 = vrot.lane.b32.xlu0 %v2682, 32
      %v2757 = vpop.permute.xlu0 %2756
      %2758 = vrot.lane.b32.xlu0 %v2683, 32
      %v2759 = vpop.permute.xlu0 %2758
      %2760 = vrot.lane.b32.xlu0 %v2684, 32
      %v2761 = vpop.permute.xlu0 %2760
      %2762 = vrot.lane.b32.xlu0 %v2685, 32
      %v2763 = vpop.permute.xlu0 %2762
      %2764 = vrot.lane.b32.xlu0 %v2686, 32
      %v2765 = vpop.permute.xlu0 %2764
      %2766 = vrot.lane.b32.xlu0 %v2687, 32
      %v2767 = vpop.permute.xlu0 %2766
      %2768 = vrot.lane.b32.xlu0 %v2688, 32
      %v2769 = vpop.permute.xlu0 %2768
      %2770 = vrot.lane.b32.xlu0 %v2689, 32
      %v2771 = vpop.permute.xlu0 %2770
      %2772 = vrot.lane.b32.xlu0 %v2690, 32
      %v2773 = vpop.permute.xlu0 %2772
      %2774 = vrot.lane.b32.xlu0 %v2691, 32
      %v2775 = vpop.permute.xlu0 %2774
      %2776 = vrot.lane.b32.xlu0 %v2692, 32
      %v2777 = vpop.permute.xlu0 %2776
      %2778 = vrot.lane.b32.xlu0 %v2693, 32
      %v2779 = vpop.permute.xlu0 %2778
      %2780 = vrot.lane.b32.xlu0 %v2694, 32
      %v2781 = vpop.permute.xlu0 %2780
      %2782 = vrot.lane.b32.xlu0 %v2695, 32
      %v2783 = vpop.permute.xlu0 %2782
      %2784 = vrot.lane.b32.xlu0 %v2696, 32
      %v2785 = vpop.permute.xlu0 %2784
      %2786 = vrot.lane.b32.xlu0 %v2697, 32
      %v2787 = vpop.permute.xlu0 %2786
      %2788 = vrot.lane.b32.xlu0 %v2698, 32
      %v2789 = vpop.permute.xlu0 %2788
      %2790 = vrot.lane.b32.xlu0 %v2699, 32
      %v2791 = vpop.permute.xlu0 %2790
      %2792 = vrot.lane.b32.xlu0 %v2700, 32
      %v2793 = vpop.permute.xlu0 %2792
      %2794 = vrot.lane.b32.xlu0 %v2701, 32
      %v2795 = vpop.permute.xlu0 %2794
      %2796 = vrot.lane.b32.xlu0 %v2702, 32
      %v2797 = vpop.permute.xlu0 %2796
      %2798 = vrot.lane.b32.xlu0 %v2703, 32
      %v2799 = vpop.permute.xlu0 %2798
      %v2832 = vmul.f32 %v2640, %v2737
      %v2833 = vmul.f32 %v2641, %v2739
      %v2834 = vmul.f32 %v2642, %v2741
      %v2835 = vmul.f32 %v2643, %v2743
      %v2836 = vmul.f32 %v2644, %v2745
      %v2837 = vmul.f32 %v2645, %v2747
      %v2838 = vmul.f32 %v2646, %v2749
      %v2839 = vmul.f32 %v2647, %v2751
      %v2840 = vmul.f32 %v2648, %v2753
      %v2841 = vmul.f32 %v2649, %v2755
      %v2842 = vmul.f32 %v2650, %v2757
      %v2843 = vmul.f32 %v2651, %v2759
      %v2844 = vmul.f32 %v2652, %v2761
      %v2845 = vmul.f32 %v2653, %v2763
      %v2846 = vmul.f32 %v2654, %v2765
      %v2847 = vmul.f32 %v2655, %v2767
      %v2848 = vmul.f32 %v2656, %v2769
      %v2849 = vmul.f32 %v2657, %v2771
      %v2850 = vmul.f32 %v2658, %v2773
      %v2851 = vmul.f32 %v2659, %v2775
      %v2852 = vmul.f32 %v2660, %v2777
      %v2853 = vmul.f32 %v2661, %v2779
      %v2854 = vmul.f32 %v2662, %v2781
      %v2855 = vmul.f32 %v2663, %v2783
      %v2856 = vmul.f32 %v2664, %v2785
      %v2857 = vmul.f32 %v2665, %v2787
      %v2858 = vmul.f32 %v2666, %v2789
      %v2859 = vmul.f32 %v2667, %v2791
      %v2860 = vmul.f32 %v2668, %v2793
      %v2861 = vmul.f32 %v2669, %v2795
      %v2862 = vmul.f32 %v2670, %v2797
      %v2863 = vmul.f32 %v2671, %v2799
      %2896 = vrot.lane.b32.xlu0 %v2640, 32
      %v2897 = vpop.permute.xlu0 %2896
      %2898 = vrot.lane.b32.xlu0 %v2641, 32
      %v2899 = vpop.permute.xlu0 %2898
      %2900 = vrot.lane.b32.xlu0 %v2642, 32
      %v2901 = vpop.permute.xlu0 %2900
      %2902 = vrot.lane.b32.xlu0 %v2643, 32
      %v2903 = vpop.permute.xlu0 %2902
      %2904 = vrot.lane.b32.xlu0 %v2644, 32
      %v2905 = vpop.permute.xlu0 %2904
      %2906 = vrot.lane.b32.xlu0 %v2645, 32
      %v2907 = vpop.permute.xlu0 %2906
      %2908 = vrot.lane.b32.xlu0 %v2646, 32
      %v2909 = vpop.permute.xlu0 %2908
      %2910 = vrot.lane.b32.xlu0 %v2647, 32
      %v2911 = vpop.permute.xlu0 %2910
      %2912 = vrot.lane.b32.xlu0 %v2648, 32
      %v2913 = vpop.permute.xlu0 %2912
      %2914 = vrot.lane.b32.xlu0 %v2649, 32
      %v2915 = vpop.permute.xlu0 %2914
      %2916 = vrot.lane.b32.xlu0 %v2650, 32
      %v2917 = vpop.permute.xlu0 %2916
      %2918 = vrot.lane.b32.xlu0 %v2651, 32
      %v2919 = vpop.permute.xlu0 %2918
      %2920 = vrot.lane.b32.xlu0 %v2652, 32
      %v2921 = vpop.permute.xlu0 %2920
      %2922 = vrot.lane.b32.xlu0 %v2653, 32
      %v2923 = vpop.permute.xlu0 %2922
      %2924 = vrot.lane.b32.xlu0 %v2654, 32
      %v2925 = vpop.permute.xlu0 %2924
      %2926 = vrot.lane.b32.xlu0 %v2655, 32
      %v2927 = vpop.permute.xlu0 %2926
      %2928 = vrot.lane.b32.xlu0 %v2656, 32
      %v2929 = vpop.permute.xlu0 %2928
      %2930 = vrot.lane.b32.xlu0 %v2657, 32
      %v2931 = vpop.permute.xlu0 %2930
      %2932 = vrot.lane.b32.xlu0 %v2658, 32
      %v2933 = vpop.permute.xlu0 %2932
      %2934 = vrot.lane.b32.xlu0 %v2659, 32
      %v2935 = vpop.permute.xlu0 %2934
      %2936 = vrot.lane.b32.xlu0 %v2660, 32
      %v2937 = vpop.permute.xlu0 %2936
      %2938 = vrot.lane.b32.xlu0 %v2661, 32
      %v2939 = vpop.permute.xlu0 %2938
      %2940 = vrot.lane.b32.xlu0 %v2662, 32
      %v2941 = vpop.permute.xlu0 %2940
      %2942 = vrot.lane.b32.xlu0 %v2663, 32
      %v2943 = vpop.permute.xlu0 %2942
      %2944 = vrot.lane.b32.xlu0 %v2664, 32
      %v2945 = vpop.permute.xlu0 %2944
      %2946 = vrot.lane.b32.xlu0 %v2665, 32
      %v2947 = vpop.permute.xlu0 %2946
      %2948 = vrot.lane.b32.xlu0 %v2666, 32
      %v2949 = vpop.permute.xlu0 %2948
      %2950 = vrot.lane.b32.xlu0 %v2667, 32
      %v2951 = vpop.permute.xlu0 %2950
      %2952 = vrot.lane.b32.xlu0 %v2668, 32
      %v2953 = vpop.permute.xlu0 %2952
      %2954 = vrot.lane.b32.xlu0 %v2669, 32
      %v2955 = vpop.permute.xlu0 %2954
      %2956 = vrot.lane.b32.xlu0 %v2670, 32
      %v2957 = vpop.permute.xlu0 %2956
      %2958 = vrot.lane.b32.xlu0 %v2671, 32
      %v2959 = vpop.permute.xlu0 %2958
      %v2992 = vmul.f32 %v2640, %v2897
      %v2993 = vmul.f32 %v2641, %v2899
      %v2994 = vmul.f32 %v2642, %v2901
      %v2995 = vmul.f32 %v2643, %v2903
      %v2996 = vmul.f32 %v2644, %v2905
      %v2997 = vmul.f32 %v2645, %v2907
      %v2998 = vmul.f32 %v2646, %v2909
      %v2999 = vmul.f32 %v2647, %v2911
      %v3000 = vmul.f32 %v2648, %v2913
      %v3001 = vmul.f32 %v2649, %v2915
      %v3002 = vmul.f32 %v2650, %v2917
      %v3003 = vmul.f32 %v2651, %v2919
      %v3004 = vmul.f32 %v2652, %v2921
      %v3005 = vmul.f32 %v2653, %v2923
      %v3006 = vmul.f32 %v2654, %v2925
      %v3007 = vmul.f32 %v2655, %v2927
      %v3008 = vmul.f32 %v2656, %v2929
      %v3009 = vmul.f32 %v2657, %v2931
      %v3010 = vmul.f32 %v2658, %v2933
      %v3011 = vmul.f32 %v2659, %v2935
      %v3012 = vmul.f32 %v2660, %v2937
      %v3013 = vmul.f32 %v2661, %v2939
      %v3014 = vmul.f32 %v2662, %v2941
      %v3015 = vmul.f32 %v2663, %v2943
      %v3016 = vmul.f32 %v2664, %v2945
      %v3017 = vmul.f32 %v2665, %v2947
      %v3018 = vmul.f32 %v2666, %v2949
      %v3019 = vmul.f32 %v2667, %v2951
      %v3020 = vmul.f32 %v2668, %v2953
      %v3021 = vmul.f32 %v2669, %v2955
      %v3022 = vmul.f32 %v2670, %v2957
      %v3023 = vmul.f32 %v2671, %v2959
      %3056 = vrot.lane.b32.xlu0 %v2992, 32
      %v3057 = vpop.permute.xlu0 %3056
      %3058 = vrot.lane.b32.xlu0 %v2993, 32
      %v3059 = vpop.permute.xlu0 %3058
      %3060 = vrot.lane.b32.xlu0 %v2994, 32
      %v3061 = vpop.permute.xlu0 %3060
      %3062 = vrot.lane.b32.xlu0 %v2995, 32
      %v3063 = vpop.permute.xlu0 %3062
      %3064 = vrot.lane.b32.xlu0 %v2996, 32
      %v3065 = vpop.permute.xlu0 %3064
      %3066 = vrot.lane.b32.xlu0 %v2997, 32
      %v3067 = vpop.permute.xlu0 %3066
      %3068 = vrot.lane.b32.xlu0 %v2998, 32
      %v3069 = vpop.permute.xlu0 %3068
      %3070 = vrot.lane.b32.xlu0 %v2999, 32
      %v3071 = vpop.permute.xlu0 %3070
      %3072 = vrot.lane.b32.xlu0 %v3000, 32
      %v3073 = vpop.permute.xlu0 %3072
      %3074 = vrot.lane.b32.xlu0 %v3001, 32
      %v3075 = vpop.permute.xlu0 %3074
      %3076 = vrot.lane.b32.xlu0 %v3002, 32
      %v3077 = vpop.permute.xlu0 %3076
      %3078 = vrot.lane.b32.xlu0 %v3003, 32
      %v3079 = vpop.permute.xlu0 %3078
      %3080 = vrot.lane.b32.xlu0 %v3004, 32
      %v3081 = vpop.permute.xlu0 %3080
      %3082 = vrot.lane.b32.xlu0 %v3005, 32
      %v3083 = vpop.permute.xlu0 %3082
      %3084 = vrot.lane.b32.xlu0 %v3006, 32
      %v3085 = vpop.permute.xlu0 %3084
      %3086 = vrot.lane.b32.xlu0 %v3007, 32
      %v3087 = vpop.permute.xlu0 %3086
      %3088 = vrot.lane.b32.xlu0 %v3008, 32
      %v3089 = vpop.permute.xlu0 %3088
      %3090 = vrot.lane.b32.xlu0 %v3009, 32
      %v3091 = vpop.permute.xlu0 %3090
      %3092 = vrot.lane.b32.xlu0 %v3010, 32
      %v3093 = vpop.permute.xlu0 %3092
      %3094 = vrot.lane.b32.xlu0 %v3011, 32
      %v3095 = vpop.permute.xlu0 %3094
      %3096 = vrot.lane.b32.xlu0 %v3012, 32
      %v3097 = vpop.permute.xlu0 %3096
      %3098 = vrot.lane.b32.xlu0 %v3013, 32
      %v3099 = vpop.permute.xlu0 %3098
      %3100 = vrot.lane.b32.xlu0 %v3014, 32
      %v3101 = vpop.permute.xlu0 %3100
      %3102 = vrot.lane.b32.xlu0 %v3015, 32
      %v3103 = vpop.permute.xlu0 %3102
      %3104 = vrot.lane.b32.xlu0 %v3016, 32
      %v3105 = vpop.permute.xlu0 %3104
      %3106 = vrot.lane.b32.xlu0 %v3017, 32
      %v3107 = vpop.permute.xlu0 %3106
      %3108 = vrot.lane.b32.xlu0 %v3018, 32
      %v3109 = vpop.permute.xlu0 %3108
      %3110 = vrot.lane.b32.xlu0 %v3019, 32
      %v3111 = vpop.permute.xlu0 %3110
      %3112 = vrot.lane.b32.xlu0 %v3020, 32
      %v3113 = vpop.permute.xlu0 %3112
      %3114 = vrot.lane.b32.xlu0 %v3021, 32
      %v3115 = vpop.permute.xlu0 %3114
      %3116 = vrot.lane.b32.xlu0 %v3022, 32
      %v3117 = vpop.permute.xlu0 %3116
      %3118 = vrot.lane.b32.xlu0 %v3023, 32
      %v3119 = vpop.permute.xlu0 %3118
      %v3152 = vadd.f32 %v2832, %v3057
      %v3153 = vadd.f32 %v2833, %v3059
      %v3154 = vadd.f32 %v2834, %v3061
      %v3155 = vadd.f32 %v2835, %v3063
      %v3156 = vadd.f32 %v2836, %v3065
      %v3157 = vadd.f32 %v2837, %v3067
      %v3158 = vadd.f32 %v2838, %v3069
      %v3159 = vadd.f32 %v2839, %v3071
      %v3160 = vadd.f32 %v2840, %v3073
      %v3161 = vadd.f32 %v2841, %v3075
      %v3162 = vadd.f32 %v2842, %v3077
      %v3163 = vadd.f32 %v2843, %v3079
      %v3164 = vadd.f32 %v2844, %v3081
      %v3165 = vadd.f32 %v2845, %v3083
      %v3166 = vadd.f32 %v2846, %v3085
      %v3167 = vadd.f32 %v2847, %v3087
      %v3168 = vadd.f32 %v2848, %v3089
      %v3169 = vadd.f32 %v2849, %v3091
      %v3170 = vadd.f32 %v2850, %v3093
      %v3171 = vadd.f32 %v2851, %v3095
      %v3172 = vadd.f32 %v2852, %v3097
      %v3173 = vadd.f32 %v2853, %v3099
      %v3174 = vadd.f32 %v2854, %v3101
      %v3175 = vadd.f32 %v2855, %v3103
      %v3176 = vadd.f32 %v2856, %v3105
      %v3177 = vadd.f32 %v2857, %v3107
      %v3178 = vadd.f32 %v2858, %v3109
      %v3179 = vadd.f32 %v2859, %v3111
      %v3180 = vadd.f32 %v2860, %v3113
      %v3181 = vadd.f32 %v2861, %v3115
      %v3182 = vadd.f32 %v2862, %v3117
      %v3183 = vadd.f32 %v2863, %v3119
      %v3184 = vtanh.pop %v3152
      %v3185 = vtanh.pop %v3153
      %v3186 = vtanh.pop %v3154
      %v3187 = vtanh.pop %v3155
      %v3188 = vtanh.pop %v3156
      %v3189 = vtanh.pop %v3157
      %v3190 = vtanh.pop %v3158
      %v3191 = vtanh.pop %v3159
      %v3192 = vtanh.pop %v3160
      %v3193 = vtanh.pop %v3161
      %v3194 = vtanh.pop %v3162
      %v3195 = vtanh.pop %v3163
      %v3196 = vtanh.pop %v3164
      %v3197 = vtanh.pop %v3165
      %v3198 = vtanh.pop %v3166
      %v3199 = vtanh.pop %v3167
      %v3200 = vtanh.pop %v3168
      %v3201 = vtanh.pop %v3169
      %v3202 = vtanh.pop %v3170
      %v3203 = vtanh.pop %v3171
      %v3204 = vtanh.pop %v3172
      %v3205 = vtanh.pop %v3173
      %v3206 = vtanh.pop %v3174
      %v3207 = vtanh.pop %v3175
      %v3208 = vtanh.pop %v3176
      %v3209 = vtanh.pop %v3177
      %v3210 = vtanh.pop %v3178
      %v3211 = vtanh.pop %v3179
      %v3212 = vtanh.pop %v3180
      %v3213 = vtanh.pop %v3181
      %v3214 = vtanh.pop %v3182
      %v3215 = vtanh.pop %v3183
      %3248 = vrot.lane.b32.xlu0 %v3184, 32
      %v3249 = vpop.permute.xlu0 %3248
      %3250 = vrot.lane.b32.xlu0 %v3185, 32
      %v3251 = vpop.permute.xlu0 %3250
      %3252 = vrot.lane.b32.xlu0 %v3186, 32
      %v3253 = vpop.permute.xlu0 %3252
      %3254 = vrot.lane.b32.xlu0 %v3187, 32
      %v3255 = vpop.permute.xlu0 %3254
      %3256 = vrot.lane.b32.xlu0 %v3188, 32
      %v3257 = vpop.permute.xlu0 %3256
      %3258 = vrot.lane.b32.xlu0 %v3189, 32
      %v3259 = vpop.permute.xlu0 %3258
      %3260 = vrot.lane.b32.xlu0 %v3190, 32
      %v3261 = vpop.permute.xlu0 %3260
      %3262 = vrot.lane.b32.xlu0 %v3191, 32
      %v3263 = vpop.permute.xlu0 %3262
      %3264 = vrot.lane.b32.xlu0 %v3192, 32
      %v3265 = vpop.permute.xlu0 %3264
      %3266 = vrot.lane.b32.xlu0 %v3193, 32
      %v3267 = vpop.permute.xlu0 %3266
      %3268 = vrot.lane.b32.xlu0 %v3194, 32
      %v3269 = vpop.permute.xlu0 %3268
      %3270 = vrot.lane.b32.xlu0 %v3195, 32
      %v3271 = vpop.permute.xlu0 %3270
      %3272 = vrot.lane.b32.xlu0 %v3196, 32
      %v3273 = vpop.permute.xlu0 %3272
      %3274 = vrot.lane.b32.xlu0 %v3197, 32
      %v3275 = vpop.permute.xlu0 %3274
      %3276 = vrot.lane.b32.xlu0 %v3198, 32
      %v3277 = vpop.permute.xlu0 %3276
      %3278 = vrot.lane.b32.xlu0 %v3199, 32
      %v3279 = vpop.permute.xlu0 %3278
      %3280 = vrot.lane.b32.xlu0 %v3200, 32
      %v3281 = vpop.permute.xlu0 %3280
      %3282 = vrot.lane.b32.xlu0 %v3201, 32
      %v3283 = vpop.permute.xlu0 %3282
      %3284 = vrot.lane.b32.xlu0 %v3202, 32
      %v3285 = vpop.permute.xlu0 %3284
      %3286 = vrot.lane.b32.xlu0 %v3203, 32
      %v3287 = vpop.permute.xlu0 %3286
      %3288 = vrot.lane.b32.xlu0 %v3204, 32
      %v3289 = vpop.permute.xlu0 %3288
      %3290 = vrot.lane.b32.xlu0 %v3205, 32
      %v3291 = vpop.permute.xlu0 %3290
      %3292 = vrot.lane.b32.xlu0 %v3206, 32
      %v3293 = vpop.permute.xlu0 %3292
      %3294 = vrot.lane.b32.xlu0 %v3207, 32
      %v3295 = vpop.permute.xlu0 %3294
      %3296 = vrot.lane.b32.xlu0 %v3208, 32
      %v3297 = vpop.permute.xlu0 %3296
      %3298 = vrot.lane.b32.xlu0 %v3209, 32
      %v3299 = vpop.permute.xlu0 %3298
      %3300 = vrot.lane.b32.xlu0 %v3210, 32
      %v3301 = vpop.permute.xlu0 %3300
      %3302 = vrot.lane.b32.xlu0 %v3211, 32
      %v3303 = vpop.permute.xlu0 %3302
      %3304 = vrot.lane.b32.xlu0 %v3212, 32
      %v3305 = vpop.permute.xlu0 %3304
      %3306 = vrot.lane.b32.xlu0 %v3213, 32
      %v3307 = vpop.permute.xlu0 %3306
      %3308 = vrot.lane.b32.xlu0 %v3214, 32
      %v3309 = vpop.permute.xlu0 %3308
      %3310 = vrot.lane.b32.xlu0 %v3215, 32
      %v3311 = vpop.permute.xlu0 %3310
      %v3344 = vmul.f32 %v2640, %v3249
      %v3345 = vmul.f32 %v2641, %v3251
      %v3346 = vmul.f32 %v2642, %v3253
      %v3347 = vmul.f32 %v2643, %v3255
      %v3348 = vmul.f32 %v2644, %v3257
      %v3349 = vmul.f32 %v2645, %v3259
      %v3350 = vmul.f32 %v2646, %v3261
      %v3351 = vmul.f32 %v2647, %v3263
      %v3352 = vmul.f32 %v2648, %v3265
      %v3353 = vmul.f32 %v2649, %v3267
      %v3354 = vmul.f32 %v2650, %v3269
      %v3355 = vmul.f32 %v2651, %v3271
      %v3356 = vmul.f32 %v2652, %v3273
      %v3357 = vmul.f32 %v2653, %v3275
      %v3358 = vmul.f32 %v2654, %v3277
      %v3359 = vmul.f32 %v2655, %v3279
      %v3360 = vmul.f32 %v2656, %v3281
      %v3361 = vmul.f32 %v2657, %v3283
      %v3362 = vmul.f32 %v2658, %v3285
      %v3363 = vmul.f32 %v2659, %v3287
      %v3364 = vmul.f32 %v2660, %v3289
      %v3365 = vmul.f32 %v2661, %v3291
      %v3366 = vmul.f32 %v2662, %v3293
      %v3367 = vmul.f32 %v2663, %v3295
      %v3368 = vmul.f32 %v2664, %v3297
      %v3369 = vmul.f32 %v2665, %v3299
      %v3370 = vmul.f32 %v2666, %v3301
      %v3371 = vmul.f32 %v2667, %v3303
      %v3372 = vmul.f32 %v2668, %v3305
      %v3373 = vmul.f32 %v2669, %v3307
      %v3374 = vmul.f32 %v2670, %v3309
      %v3375 = vmul.f32 %v2671, %v3311
      %3408 = vrot.lane.b32.xlu0 %v3344, 64
      %v3409 = vpop.permute.xlu0 %3408
      %3410 = vrot.lane.b32.xlu0 %v3345, 64
      %v3411 = vpop.permute.xlu0 %3410
      %3412 = vrot.lane.b32.xlu0 %v3346, 64
      %v3413 = vpop.permute.xlu0 %3412
      %3414 = vrot.lane.b32.xlu0 %v3347, 64
      %v3415 = vpop.permute.xlu0 %3414
      %3416 = vrot.lane.b32.xlu0 %v3348, 64
      %v3417 = vpop.permute.xlu0 %3416
      %3418 = vrot.lane.b32.xlu0 %v3349, 64
      %v3419 = vpop.permute.xlu0 %3418
      %3420 = vrot.lane.b32.xlu0 %v3350, 64
      %v3421 = vpop.permute.xlu0 %3420
      %3422 = vrot.lane.b32.xlu0 %v3351, 64
      %v3423 = vpop.permute.xlu0 %3422
      %3424 = vrot.lane.b32.xlu0 %v3352, 64
      %v3425 = vpop.permute.xlu0 %3424
      %3426 = vrot.lane.b32.xlu0 %v3353, 64
      %v3427 = vpop.permute.xlu0 %3426
      %3428 = vrot.lane.b32.xlu0 %v3354, 64
      %v3429 = vpop.permute.xlu0 %3428
      %3430 = vrot.lane.b32.xlu0 %v3355, 64
      %v3431 = vpop.permute.xlu0 %3430
      %3432 = vrot.lane.b32.xlu0 %v3356, 64
      %v3433 = vpop.permute.xlu0 %3432
      %3434 = vrot.lane.b32.xlu0 %v3357, 64
      %v3435 = vpop.permute.xlu0 %3434
      %3436 = vrot.lane.b32.xlu0 %v3358, 64
      %v3437 = vpop.permute.xlu0 %3436
      %3438 = vrot.lane.b32.xlu0 %v3359, 64
      %v3439 = vpop.permute.xlu0 %3438
      %3440 = vrot.lane.b32.xlu0 %v3360, 64
      %v3441 = vpop.permute.xlu0 %3440
      %3442 = vrot.lane.b32.xlu0 %v3361, 64
      %v3443 = vpop.permute.xlu0 %3442
      %3444 = vrot.lane.b32.xlu0 %v3362, 64
      %v3445 = vpop.permute.xlu0 %3444
      %3446 = vrot.lane.b32.xlu0 %v3363, 64
      %v3447 = vpop.permute.xlu0 %3446
      %3448 = vrot.lane.b32.xlu0 %v3364, 64
      %v3449 = vpop.permute.xlu0 %3448
      %3450 = vrot.lane.b32.xlu0 %v3365, 64
      %v3451 = vpop.permute.xlu0 %3450
      %3452 = vrot.lane.b32.xlu0 %v3366, 64
      %v3453 = vpop.permute.xlu0 %3452
      %3454 = vrot.lane.b32.xlu0 %v3367, 64
      %v3455 = vpop.permute.xlu0 %3454
      %3456 = vrot.lane.b32.xlu0 %v3368, 64
      %v3457 = vpop.permute.xlu0 %3456
      %3458 = vrot.lane.b32.xlu0 %v3369, 64
      %v3459 = vpop.permute.xlu0 %3458
      %3460 = vrot.lane.b32.xlu0 %v3370, 64
      %v3461 = vpop.permute.xlu0 %3460
      %3462 = vrot.lane.b32.xlu0 %v3371, 64
      %v3463 = vpop.permute.xlu0 %3462
      %3464 = vrot.lane.b32.xlu0 %v3372, 64
      %v3465 = vpop.permute.xlu0 %3464
      %3466 = vrot.lane.b32.xlu0 %v3373, 64
      %v3467 = vpop.permute.xlu0 %3466
      %3468 = vrot.lane.b32.xlu0 %v3374, 64
      %v3469 = vpop.permute.xlu0 %3468
      %3470 = vrot.lane.b32.xlu0 %v3375, 64
      %v3471 = vpop.permute.xlu0 %3470
      %3504 = vst.msk [vmem:[%s299] sm:$0xff] %vm381, %v3409
      %3505 = vst.msk [vmem:[%s299 + $0x8] sm:$0xff] %vm381, %v3411
      %3506 = vst.msk [vmem:[%s299 + $0x10] sm:$0xff] %vm381, %v3413
      %3507 = vst.msk [vmem:[%s299 + $0x18] sm:$0xff] %vm381, %v3415
      %3508 = vst.msk [vmem:[%s299 + $0x20] sm:$0xff] %vm381, %v3417
      %3509 = vst.msk [vmem:[%s299 + $0x28] sm:$0xff] %vm381, %v3419
      %3510 = vst.msk [vmem:[%s299 + $0x30] sm:$0xff] %vm381, %v3421
      %3511 = vst.msk [vmem:[%s299 + $0x38] sm:$0xff] %vm381, %v3423
      %3512 = vst.msk [vmem:[%s299 + $0x40] sm:$0xff] %vm381, %v3425
      %3513 = vst.msk [vmem:[%s299 + $0x48] sm:$0xff] %vm381, %v3427
      %3514 = vst.msk [vmem:[%s299 + $0x50] sm:$0xff] %vm381, %v3429
      %3515 = vst.msk [vmem:[%s299 + $0x58] sm:$0xff] %vm381, %v3431
      %3516 = vst.msk [vmem:[%s299 + $0x60] sm:$0xff] %vm381, %v3433
      %3517 = vst.msk [vmem:[%s299 + $0x68] sm:$0xff] %vm381, %v3435
      %3518 = vst.msk [vmem:[%s299 + $0x70] sm:$0xff] %vm381, %v3437
      %3519 = vst.msk [vmem:[%s299 + $0x78] sm:$0xff] %vm381, %v3439
      %3520 = vst.msk [vmem:[%s299 + $0x80] sm:$0xff] %vm381, %v3441
      %3521 = vst.msk [vmem:[%s299 + $0x88] sm:$0xff] %vm381, %v3443
      %3522 = vst.msk [vmem:[%s299 + $0x90] sm:$0xff] %vm381, %v3445
      %3523 = vst.msk [vmem:[%s299 + $0x98] sm:$0xff] %vm381, %v3447
      %3524 = vst.msk [vmem:[%s299 + $0xa0] sm:$0xff] %vm381, %v3449
      %3525 = vst.msk [vmem:[%s299 + $0xa8] sm:$0xff] %vm381, %v3451
      %3526 = vst.msk [vmem:[%s299 + $0xb0] sm:$0xff] %vm381, %v3453
      %3527 = vst.msk [vmem:[%s299 + $0xb8] sm:$0xff] %vm381, %v3455
      %3528 = vst.msk [vmem:[%s299 + $0xc0] sm:$0xff] %vm381, %v3457
      %3529 = vst.msk [vmem:[%s299 + $0xc8] sm:$0xff] %vm381, %v3459
      %3530 = vst.msk [vmem:[%s299 + $0xd0] sm:$0xff] %vm381, %v3461
      %3531 = vst.msk [vmem:[%s299 + $0xd8] sm:$0xff] %vm381, %v3463
      %3532 = vst.msk [vmem:[%s299 + $0xe0] sm:$0xff] %vm381, %v3465
      %3533 = vst.msk [vmem:[%s299 + $0xe8] sm:$0xff] %vm381, %v3467
      %3534 = vst.msk [vmem:[%s299 + $0xf0] sm:$0xff] %vm381, %v3469
      %3535 = vst.msk [vmem:[%s299 + $0xf8] sm:$0xff] %vm381, %v3471
      %3568 = vrot.lane.b32.xlu0 %v3152, 96
      %v3569 = vpop.permute.xlu0 %3568
      %3570 = vrot.lane.b32.xlu0 %v3153, 96
      %v3571 = vpop.permute.xlu0 %3570
      %3572 = vrot.lane.b32.xlu0 %v3154, 96
      %v3573 = vpop.permute.xlu0 %3572
      %3574 = vrot.lane.b32.xlu0 %v3155, 96
      %v3575 = vpop.permute.xlu0 %3574
      %3576 = vrot.lane.b32.xlu0 %v3156, 96
      %v3577 = vpop.permute.xlu0 %3576
      %3578 = vrot.lane.b32.xlu0 %v3157, 96
      %v3579 = vpop.permute.xlu0 %3578
      %3580 = vrot.lane.b32.xlu0 %v3158, 96
      %v3581 = vpop.permute.xlu0 %3580
      %3582 = vrot.lane.b32.xlu0 %v3159, 96
      %v3583 = vpop.permute.xlu0 %3582
      %3584 = vrot.lane.b32.xlu0 %v3160, 96
      %v3585 = vpop.permute.xlu0 %3584
      %3586 = vrot.lane.b32.xlu0 %v3161, 96
      %v3587 = vpop.permute.xlu0 %3586
      %3588 = vrot.lane.b32.xlu0 %v3162, 96
      %v3589 = vpop.permute.xlu0 %3588
      %3590 = vrot.lane.b32.xlu0 %v3163, 96
      %v3591 = vpop.permute.xlu0 %3590
      %3592 = vrot.lane.b32.xlu0 %v3164, 96
      %v3593 = vpop.permute.xlu0 %3592
      %3594 = vrot.lane.b32.xlu0 %v3165, 96
      %v3595 = vpop.permute.xlu0 %3594
      %3596 = vrot.lane.b32.xlu0 %v3166, 96
      %v3597 = vpop.permute.xlu0 %3596
      %3598 = vrot.lane.b32.xlu0 %v3167, 96
      %v3599 = vpop.permute.xlu0 %3598
      %3600 = vrot.lane.b32.xlu0 %v3168, 96
      %v3601 = vpop.permute.xlu0 %3600
      %3602 = vrot.lane.b32.xlu0 %v3169, 96
      %v3603 = vpop.permute.xlu0 %3602
      %3604 = vrot.lane.b32.xlu0 %v3170, 96
      %v3605 = vpop.permute.xlu0 %3604
      %3606 = vrot.lane.b32.xlu0 %v3171, 96
      %v3607 = vpop.permute.xlu0 %3606
      %3608 = vrot.lane.b32.xlu0 %v3172, 96
      %v3609 = vpop.permute.xlu0 %3608
      %3610 = vrot.lane.b32.xlu0 %v3173, 96
      %v3611 = vpop.permute.xlu0 %3610
      %3612 = vrot.lane.b32.xlu0 %v3174, 96
      %v3613 = vpop.permute.xlu0 %3612
      %3614 = vrot.lane.b32.xlu0 %v3175, 96
      %v3615 = vpop.permute.xlu0 %3614
      %3616 = vrot.lane.b32.xlu0 %v3176, 96
      %v3617 = vpop.permute.xlu0 %3616
      %3618 = vrot.lane.b32.xlu0 %v3177, 96
      %v3619 = vpop.permute.xlu0 %3618
      %3620 = vrot.lane.b32.xlu0 %v3178, 96
      %v3621 = vpop.permute.xlu0 %3620
      %3622 = vrot.lane.b32.xlu0 %v3179, 96
      %v3623 = vpop.permute.xlu0 %3622
      %3624 = vrot.lane.b32.xlu0 %v3180, 96
      %v3625 = vpop.permute.xlu0 %3624
      %3626 = vrot.lane.b32.xlu0 %v3181, 96
      %v3627 = vpop.permute.xlu0 %3626
      %3628 = vrot.lane.b32.xlu0 %v3182, 96
      %v3629 = vpop.permute.xlu0 %3628
      %3630 = vrot.lane.b32.xlu0 %v3183, 96
      %v3631 = vpop.permute.xlu0 %3630
      %3664 = vst.msk [vmem:[%s304] sm:$0xff] %vm381, %v3569
      %3665 = vst.msk [vmem:[%s304 + $0x8] sm:$0xff] %vm381, %v3571
      %3666 = vst.msk [vmem:[%s304 + $0x10] sm:$0xff] %vm381, %v3573
      %3667 = vst.msk [vmem:[%s304 + $0x18] sm:$0xff] %vm381, %v3575
      %3668 = vst.msk [vmem:[%s304 + $0x20] sm:$0xff] %vm381, %v3577
      %3669 = vst.msk [vmem:[%s304 + $0x28] sm:$0xff] %vm381, %v3579
      %3670 = vst.msk [vmem:[%s304 + $0x30] sm:$0xff] %vm381, %v3581
      %3671 = vst.msk [vmem:[%s304 + $0x38] sm:$0xff] %vm381, %v3583
      %3672 = vst.msk [vmem:[%s304 + $0x40] sm:$0xff] %vm381, %v3585
      %3673 = vst.msk [vmem:[%s304 + $0x48] sm:$0xff] %vm381, %v3587
      %3674 = vst.msk [vmem:[%s304 + $0x50] sm:$0xff] %vm381, %v3589
      %3675 = vst.msk [vmem:[%s304 + $0x58] sm:$0xff] %vm381, %v3591
      %3676 = vst.msk [vmem:[%s304 + $0x60] sm:$0xff] %vm381, %v3593
      %3677 = vst.msk [vmem:[%s304 + $0x68] sm:$0xff] %vm381, %v3595
      %3678 = vst.msk [vmem:[%s304 + $0x70] sm:$0xff] %vm381, %v3597
      %3679 = vst.msk [vmem:[%s304 + $0x78] sm:$0xff] %vm381, %v3599
      %3680 = vst.msk [vmem:[%s304 + $0x80] sm:$0xff] %vm381, %v3601
      %3681 = vst.msk [vmem:[%s304 + $0x88] sm:$0xff] %vm381, %v3603
      %3682 = vst.msk [vmem:[%s304 + $0x90] sm:$0xff] %vm381, %v3605
      %3683 = vst.msk [vmem:[%s304 + $0x98] sm:$0xff] %vm381, %v3607
      %3684 = vst.msk [vmem:[%s304 + $0xa0] sm:$0xff] %vm381, %v3609
      %3685 = vst.msk [vmem:[%s304 + $0xa8] sm:$0xff] %vm381, %v3611
      %3686 = vst.msk [vmem:[%s304 + $0xb0] sm:$0xff] %vm381, %v3613
      %3687 = vst.msk [vmem:[%s304 + $0xb8] sm:$0xff] %vm381, %v3615
      %3688 = vst.msk [vmem:[%s304 + $0xc0] sm:$0xff] %vm381, %v3617
      %3689 = vst.msk [vmem:[%s304 + $0xc8] sm:$0xff] %vm381, %v3619
      %3690 = vst.msk [vmem:[%s304 + $0xd0] sm:$0xff] %vm381, %v3621
      %3691 = vst.msk [vmem:[%s304 + $0xd8] sm:$0xff] %vm381, %v3623
      %3692 = vst.msk [vmem:[%s304 + $0xe0] sm:$0xff] %vm381, %v3625
      %3693 = vst.msk [vmem:[%s304 + $0xe8] sm:$0xff] %vm381, %v3627
      %3694 = vst.msk [vmem:[%s304 + $0xf0] sm:$0xff] %vm381, %v3629
      %3695 = vst.msk [vmem:[%s304 + $0xf8] sm:$0xff] %vm381, %v3631
      %p3696 = scmp.lt.s32.totalorder %s18, 1
      %s3697 = scalar_select %p3696, %s18, 1
      %s3698 = smul.addr %s3697, 32
      %s3699 = smul.addr %s3698, 8
      %s3700 = scalar_lea.vmem %s5, %s3699
      %p3701 = scmp.lt.s32.totalorder %s18, 1
      %s3702 = scalar_select %p3701, %s18, 1
      %s3703 = smul.addr %s3702, 32
      %s3704 = smul.addr %s3703, 8
      %s3705 = scalar_lea.vmem %s6, %s3704
      // Predicated region
      $region41: #{conv_lstm_cell_forward.1} parent=39 // pred_check
        %p3706 = pneg %p156
      $region42: #{conv_lstm_cell_forward.1} parent=39 // pred_check_branch
        %3708 = sbr.rel (%p3706) target = $region44
      $region43: #{conv_lstm_cell_forward.1} parent=39 // pred_region
        _
      $region44: #{conv_lstm_cell_forward.1} parent=39 // pred_fallthru
        _
      // Predicated region
      $region45: #{conv_lstm_cell_forward.1} parent=39 // pred_check
        %p3709 = pneg %p182
      $region46: #{conv_lstm_cell_forward.1} parent=39 // pred_check_branch
        %3711 = sbr.rel (%p3709) target = $region48
      $region47: #{conv_lstm_cell_forward.1} parent=39 // pred_region
        _
      $region48: #{conv_lstm_cell_forward.1} parent=39 // pred_fallthru
        _
    $region40: #{conv_lstm_cell_forward.1} parent=5 // pred_fallthru
      _
    %p3712 = scmp.le.s32.totalorder 2, %s13
    // Predicated region
    $region49: #{conv_lstm_cell_forward.1} parent=5 // pred_check
      %p3713 = pneg %p3712
    $region50: #{conv_lstm_cell_forward.1} parent=5 // pred_check_branch
      %3715 = sbr.rel (%p3713) target = $region52
    $region51: #{conv_lstm_cell_forward.1} parent=5 // pred_region
      %s3716 = ssub.s32 %s13, 2
      // Predicated region
      $region53: #{conv_lstm_cell_forward.1} parent=51 // pred_check
        %p3717 = pneg %p162
      $region54: #{conv_lstm_cell_forward.1} parent=51 // pred_check_branch
        %3719 = sbr.rel (%p3717) target = $region56
      $region55: #{conv_lstm_cell_forward.1} parent=51 // pred_region
        %p3720 = scmp.lt.s32.totalorder %s19, 1
        %s3721 = scalar_select %p3720, %s19, 1
        %s3722 = smul.addr %s3721, 32
        %s3723 = smul.addr %s3722, 8
        %s3724 = scalar_lea.vmem %s5, %s3723
      $region56: #{conv_lstm_cell_forward.1} parent=51 // pred_fallthru
        _
      // Predicated region
      $region57: #{conv_lstm_cell_forward.1} parent=51 // pred_check
        %p3725 = pneg %p188
      $region58: #{conv_lstm_cell_forward.1} parent=51 // pred_check_branch
        %3727 = sbr.rel (%p3725) target = $region60
      $region59: #{conv_lstm_cell_forward.1} parent=51 // pred_region
        %p3728 = scmp.lt.s32.totalorder %s19, 1
        %s3729 = scalar_select %p3728, %s19, 1
        %s3730 = smul.addr %s3729, 32
        %s3731 = smul.addr %s3730, 8
        %s3732 = scalar_lea.vmem %s6, %s3731
      $region60: #{conv_lstm_cell_forward.1} parent=51 // pred_fallthru
        _
    $region52: #{conv_lstm_cell_forward.1} parent=5 // pred_fallthru
      _
  $region6: #{conv_lstm_cell_forward.1} parent=0 // loop_footer
    %s17 = sadd.s32 1, %s13
  $region7: #{conv_lstm_cell_forward.1} parent=0 // loop_footer_branch
    %12 = sbr.rel target = $region3
  $region8: #{conv_lstm_cell_forward.1} parent=0 // loop_exit
    _

</llo_original>
